<compile_context>
chip_gen: v7x
topology: tpu7x:2x2x1
jax: 0.10.0
libtpu: 0.0.40
codegen_flags: <defaults>
</compile_context>

<pallas_src>
import functools
import math

import numpy as np

import jax
import jax.numpy as jnp
from jax import lax
from jax.experimental import pallas as pl
from jax.experimental.pallas import tpu as pltpu

NUM_HEADS = 8
HEAD_GROUPS = 2           # process 8 heads in 2 groups of 4 (bounds vreg pressure)
NUM_MASK_FCS = 1          # cfg.MODEL.YOSO.NUM_MASK_FCS == 1 in this synthetic config
LN_EPS = 1e-5
NEG_INF = -1e30

# LayerNorm rows inside the packed [NUM_LN, D] gamma/beta arrays.
LN_NORM_IN = 0            # KernelUpdator.norm_in        (update gate)
LN_NORM_OUT = 1           # KernelUpdator.norm_out       (param_out)
LN_INPUT_NORM_IN = 2      # KernelUpdator.input_norm_in  (input gate)
LN_INPUT_NORM_OUT = 3     # KernelUpdator.input_norm_out (input_out)
LN_FC_NORM = 4            # KernelUpdator.fc_norm
LN_S_ATTEN = 5            # CrossAttenHead.s_atten_norm
LN_FFN = 6                # CrossAttenHead.ffn_norm
LN_MASK_FC0 = 7           # mask_fcs[1] LayerNorm
NUM_LN = 8

# 128-lane groups inside the packed weight / bias slabs (each constituent weight
# occupies its own lane-aligned group, so in-kernel slices never cross tiles).
GRP = 128
WD_GROUPS = ("gate", "ku_fc", "qkv", "wo", "ffn1", "iou1_mask0", "iou2")   # in-dim D
W2D_GROUPS = ("dyninp", "fcmask_iou3")                                      # in-dim 2D
BIAS_GROUPS = ("dyninp", "gate", "ku_fc", "qkv", "wo", "ffn1", "ffn2",
               "iou1_mask0", "iou2", "fcmask_iou3")


# ----------------------------------------------------------------------------
# Fused Pallas kernel (single grid step; batch lives on the sublane axis)
# ----------------------------------------------------------------------------

def _cross_atten_head_kernel(
    masks_bd_ref,    # [B*N, B*HW]     raw mask logits, block-diagonal per batch
    feat_hwc_ref,    # [B*HW, C]       features, HW-major (pool matmul)
    feat_chw_ref,    # [B*C, HW]       features, C-major  (mask-pred matmul)
    prop_ref,        # [B*N, D]        proposal kernels
    head_mask_ref,   # [H*B*N, D]      0/1: head-of-row == head-of-column
    attn_bias_ref,   # [HPG*B*N, B*N]  0 / -1e30 (per-batch block-diag attention)
    fold_ref,        # [B*N, HPG*B*N]  0/1: sums per-head rows back to proposals
    bd_expand_ref,   # [B*N, B*C]      0/1: batch-of-row == batch-of-column
    w2d_ref,         # [2D, len(W2D_GROUPS)*GRP]
    wd_ref,          # [D,  len(WD_GROUPS)*GRP]
    ffn_w2_ref,      # [FF, D]
    bias_ref,        # [1,  len(BIAS_GROUPS)*GRP]
    ln_g_ref, ln_b_ref,   # [NUM_LN, D]
    iou_ref,         # [B*N, 1]
    newmask_ref,     # [B*N, HW]
    obj_ref,         # [B*N, D]
    *, num_heads, head_groups,
):
    bn, d = prop_ref.shape
    ff = ffn_w2_ref.shape[0]
    nb = bd_expand_ref.shape[1] // d           # batch size
    hd = d // num_heads
    hpg = num_heads // head_groups
    rows_pg = hpg * bn
    inv_d = 1.0 / d

    def ln(x, idx, relu=False):
        # One-pass stats: var = E[x^2] - mu^2 (two independent XLU reductions),
        # clamped at 0 against f32 cancellation.
        mu = jnp.sum(x, axis=-1, keepdims=True) * inv_d
        ex2 = jnp.sum(x * x, axis=-1, keepdims=True) * inv_d
        var = jnp.maximum(ex2 - mu * mu, 0.0)
        y = (x - mu) * lax.rsqrt(var + LN_EPS)
        y = y * ln_g_ref[idx:idx + 1, :] + ln_b_ref[idx:idx + 1, :]
        return jnp.maximum(y, 0.0) if relu else y

    def wd(name, width):                       # D-in weight group
        off = GRP * WD_GROUPS.index(name)
        return wd_ref[:, off:off + width]

    def w2d(name, width):                      # 2D-in weight group
        off = GRP * W2D_GROUPS.index(name)
        return w2d_ref[:, off:off + width]

    def bias(name, width):
        off = GRP * BIAS_GROUPS.index(name)
        return bias_ref[:, off:off + width]

    def mm(x, w, b=None, relu=False):
        y = jnp.dot(x, w, preferred_element_type=jnp.float32)
        if b is not None:
            y = y + b
        return jnp.maximum(y, 0.0) if relu else y

    # ---------------- masked pooling (all batches in one matmul) ----------------
    hard = (masks_bd_ref[...] > 0.0).astype(jnp.float32)   # sigmoid(m) > 0.5  <=>  m > 0
    f = mm(hard, feat_hwc_ref[...])                        # [BN, C]
    k_in = prop_ref[...]                                   # [BN, D]

    # ---------------- KernelUpdator ----------------
    # dynamic_layer (on pooled f) and input_layer (on proposals) merged into one
    # block-diagonal matmul:  z = [f | k] @ blockdiag(dyn_w, inp_w) + [dyn_b | inp_b].
    z = mm(jnp.concatenate([f, k_in], axis=1),
           w2d("dyninp", 4 * d), bias("dyninp", 4 * d))    # [BN, 4D]
    param_in, param_out = z[:, :d], z[:, d:2 * d]
    input_in, input_out = z[:, 2 * d:3 * d], z[:, 3 * d:]

    gz = mm(input_in * param_in, wd("gate", 2 * d), bias("gate", 2 * d))  # [input_gate | update_gate]
    input_gate = jax.nn.sigmoid(ln(gz[:, :d], LN_INPUT_NORM_IN))
    update_gate = jax.nn.sigmoid(ln(gz[:, d:], LN_NORM_IN))
    feats = (update_gate * ln(param_out, LN_NORM_OUT)
             + input_gate * ln(input_out, LN_INPUT_NORM_OUT))
    feats = mm(feats, wd("ku_fc", d), bias("ku_fc", d))
    k_upd = ln(feats, LN_FC_NORM, relu=True)               # [BN, D]

    # ---------------- multi-head self-attention ----------------
    qkv = mm(k_upd, wd("qkv", 3 * d), bias("qkv", 3 * d))  # [BN, 3D] = [q | k | v]
    q = qkv[:, :d] * (1.0 / math.sqrt(hd))
    kmat = qkv[:, d:2 * d]
    v = qkv[:, 2 * d:]

    q_rep = jnp.concatenate([q] * hpg, axis=0)             # [HPG*BN, D] sublane replication, no MXU
    attn_bias = attn_bias_ref[...]                         # per-batch block-diag (0 / -1e30)
    fold = fold_ref[...]
    attn = jnp.zeros((bn, d), jnp.float32)
    for g in range(head_groups):                           # 2 groups of 4 heads: bounds live vregs
        hm = head_mask_ref[g * rows_pg:(g + 1) * rows_pg, :]
        s = lax.dot_general(q_rep * hm, kmat, (((1,), (1,)), ((), ())),
                            preferred_element_type=jnp.float32) + attn_bias   # [HPG*BN, BN]
        s = s - jnp.max(s, axis=-1, keepdims=True)
        p = jnp.exp(s)
        p = p * pl.reciprocal(jnp.sum(p, axis=-1, keepdims=True), approx=True)
        og = jnp.dot(p, v, preferred_element_type=jnp.float32) * hm           # [HPG*BN, D]
        attn = attn + jnp.dot(fold, og, preferred_element_type=jnp.float32)   # [BN, D]
    attn = mm(attn, wd("wo", d), bias("wo", d))
    kx = ln(k_upd + attn, LN_S_ATTEN)                      # residual + s_atten_norm

    # ---------------- FFN ----------------
    h = mm(kx, wd("ffn1", ff), bias("ffn1", ff), relu=True)
    h = mm(h, ffn_w2_ref[...], bias("ffn2", d))
    obj = ln(kx + h, LN_FFN)                               # [BN, D]
    obj_ref[...] = obj

    # ---------------- IoU MLP + mask branch ----------------
    # iou layer 1 and mask_fcs[0] (Linear, bias=False) both consume obj -> one matmul.
    t = mm(obj, wd("iou1_mask0", 2 * d), bias("iou1_mask0", 2 * d))
    u = jnp.maximum(t[:, :d], 0.0)                         # relu(iou fc1)
    m = ln(t[:, d:], LN_MASK_FC0, relu=True)               # mask_fcs[0]: LN + ReLU (num_mask_fcs == 1)
    u = mm(u, wd("iou2", d), bias("iou2", d), relu=True)

    # fc_mask (on m) and iou layer 3 (on u) merged via a block-diagonal weight.
    r = mm(jnp.concatenate([m, u], axis=1),
           w2d("fcmask_iou3", d + 1), bias("fcmask_iou3", d + 1))   # [BN, D+1]
    mk = r[:, :d]                                          # mask kernels [BN, D]
    iou_ref[...] = r[:, d:d + 1]                           # [BN, 1]

    # ---------------- mask prediction (all batches, one lane-dense matmul) ----------------
    mk_bd = jnp.concatenate([mk] * nb, axis=1) * bd_expand_ref[...]   # [BN, B*C]
    newmask_ref[...] = jnp.dot(mk_bd, feat_chw_ref[...],
                               preferred_element_type=jnp.float32)   # [BN, HW] (lane-dense)


# ----------------------------------------------------------------------------
# Wrapper: one pallas_call, batch folded onto the sublane axis
# ----------------------------------------------------------------------------

def _full_spec(shape):
    zeros = (0,) * len(shape)
    return pl.BlockSpec(shape, lambda i, _z=zeros: _z)


def cross_atten_head_forward(packed, features, proposal_kernels, mask_preds):
    b, c, h, w = features.shape
    n = proposal_kernels.shape[1]
    hw = h * w
    d = c                          # hidden_dim == C (conv_kernel_size_2d == 1)
    bn = b * n
    hd = d // NUM_HEADS
    hpg = NUM_HEADS // HEAD_GROUPS
    rows_pg = hpg * bn
    assert d % NUM_HEADS == 0 and NUM_HEADS % HEAD_GROUPS == 0 and n % 6 == 0

    # ---- data, laid out for the kernel (batch folded into rows) ----
    feat_hwc = jnp.transpose(features, (0, 2, 3, 1)).reshape(b * hw, c)   # [B*HW, C]
    feat_chw = features.reshape(b * c, hw)                                # [B*C, HW]
    prop = proposal_kernels.reshape(bn, d)
    # Block-diagonal raw mask logits: row-block b only multiplies feature rows of batch b.
    eye_b = jnp.eye(b, dtype=features.dtype)
    masks_bd = (mask_preds.reshape(b, n, 1, hw) * eye_b[:, None, :, None]).reshape(bn, b * hw)

    # ---- loop-invariant 0/1 matrices, precomputed on the host (baked constants) ----
    r_all = np.arange(NUM_HEADS * bn)
    col_head = np.arange(d) // hd
    head_mask = (r_all[:, None] // bn == col_head[None, :]).astype(np.float32)      # [H*BN, D]
    r_grp = np.arange(rows_pg)
    attn_bias = np.where((r_grp[:, None] % bn) // n == np.arange(bn)[None, :] // n,
                         0.0, NEG_INF).astype(np.float32)                           # [HPG*BN, BN]
    fold = ((r_grp[None, :] % bn) == np.arange(bn)[:, None]).astype(np.float32)     # [BN, HPG*BN]
    bd_expand = (np.arange(bn)[:, None] // n == np.arange(b * c)[None, :] // c
                 ).astype(np.float32)                                               # [BN, B*C]

    operands = [
        masks_bd, feat_hwc, feat_chw, prop,
        jnp.asarray(head_mask), jnp.asarray(attn_bias),
        jnp.asarray(fold), jnp.asarray(bd_expand),
        packed["w2d"], packed["wd"], packed["ffn_w2"], packed["bias"],
        packed["ln_g"], packed["ln_b"],
    ]

    out_shapes = (
        jax.ShapeDtypeStruct((bn, 1), jnp.float32),
        jax.ShapeDtypeStruct((bn, hw), jnp.float32),
        jax.ShapeDtypeStruct((bn, d), jnp.float32),
    )
    out_specs = (
        _full_spec((bn, 1)),     # TODO(synk): could pack [obj|iou] into one lane-dense slab; tiny win
        _full_spec((bn, hw)),
        _full_spec((bn, d)),
    )

    kernel = functools.partial(_cross_atten_head_kernel,
                               num_heads=NUM_HEADS, head_groups=HEAD_GROUPS)

    iou, newmask, obj = pl.pallas_call(
        kernel,
        grid=(1,),                           # single fused step; batch lives on the sublane axis
        in_specs=[_full_spec(x.shape) for x in operands],
        out_specs=out_specs,
        out_shape=out_shapes,
        compiler_params=pltpu.CompilerParams(dimension_semantics=("arbitrary",)),
    )(*operands)

    iou_pred = iou.reshape(b, n // 6, 6)
    new_mask_preds = newmask.reshape(b, n, h, w)
    obj_feat = obj.reshape(b, n, d)
    cls_score = None
    return iou_pred, cls_score, new_mask_preds, obj_feat


# ----------------------------------------------------------------------------
# Parameter init (per-layer, [in, out] layout) and host-side slab packing
# ----------------------------------------------------------------------------

def init_params(key, d, ff):
    keys = iter(jax.random.split(key, 40))

    def W(i, o):
        return 0.02 * jax.random.truncated_normal(next(keys), -2.0, 2.0, (i, o), jnp.float32)

    def Bz(o):
        return jnp.zeros((o,), jnp.float32)

    return dict(
        # KernelUpdator
        dyn_w=W(d, 2 * d), dyn_b=Bz(2 * d),      # dynamic_layer -> [param_in | param_out]
        inp_w=W(d, 2 * d), inp_b=Bz(2 * d),      # input_layer   -> [input_in | input_out]
        ig_w=W(d, d), ig_b=Bz(d),                # input_gate
        ug_w=W(d, d), ug_b=Bz(d),                # update_gate
        ku_fc_w=W(d, d), ku_fc_b=Bz(d),          # fc_layer
        # MultiheadAttention (columns ordered q|k|v; transpose of torch in_proj_weight)
        wqkv=W(d, 3 * d), bqkv=Bz(3 * d),
        wo=W(d, d), bo=Bz(d),
        # FFN
        ffn_w1=W(d, ff), ffn_b1=Bz(ff),
        ffn_w2=W(ff, d), ffn_b2=Bz(d),
        # IoU MLP (3 layers)
        iou_w1=W(d, d), iou_b1=Bz(d),
        iou_w2=W(d, d), iou_b2=Bz(d),
        iou_w3=W(d, 1), iou_b3=Bz(1),
        # mask branch (mask_fcs[0] Linear has bias=False)
        mask_fc0_w=W(d, d),
        fc_mask_w=W(d, d), fc_mask_b=Bz(d),
        # LayerNorms packed [NUM_LN, D] (row order given by LN_* constants)
        ln_g=jnp.ones((NUM_LN, d), jnp.float32),
        ln_b=jnp.zeros((NUM_LN, d), jnp.float32),
    )


def pack_params(p, d, ff):
    """Pack per-layer weights into a few slabs; every constituent starts on a 128-lane group."""
    assert 4 * d <= GRP and 3 * d <= GRP and ff <= GRP and d + 1 <= GRP

    def padg(x):
        return jnp.pad(x, ((0, 0), (0, GRP - x.shape[1])))

    def blockdiag(a, b):
        za = jnp.zeros((a.shape[0], b.shape[1]), a.dtype)
        zb = jnp.zeros((b.shape[0], a.shape[1]), b.dtype)
        return jnp.concatenate([jnp.concatenate([a, za], axis=1),
                                jnp.concatenate([zb, b], axis=1)], axis=0)

    def r2(v):
        return v.reshape(1, -1)

    w2d_parts = {   # 2D-in weights: block-diagonal merges of two stages with different inputs
        "dyninp": blockdiag(p["dyn_w"], p["inp_w"]),                   # [2D, 4D]
        "fcmask_iou3": blockdiag(p["fc_mask_w"], p["iou_w3"]),         # [2D, D+1]
    }
    wd_parts = {    # D-in weights: column merges where one input feeds two layers
        "gate": jnp.concatenate([p["ig_w"], p["ug_w"]], axis=1),       # [input_gate | update_gate]
        "ku_fc": p["ku_fc_w"],
        "qkv": p["wqkv"],
        "wo": p["wo"],
        "ffn1": p["ffn_w1"],
        "iou1_mask0": jnp.concatenate([p["iou_w1"], p["mask_fc0_w"]], axis=1),
        "iou2": p["iou_w2"],
    }
    bias_parts = {
        "dyninp": jnp.concatenate([p["dyn_b"], p["inp_b"]]),
        "gate": jnp.concatenate([p["ig_b"], p["ug_b"]]),
        "ku_fc": p["ku_fc_b"],
        "qkv": p["bqkv"],
        "wo": p["bo"],
        "ffn1": p["ffn_b1"],
        "ffn2": p["ffn_b2"],
        "iou1_mask0": jnp.concatenate([p["iou_b1"], jnp.zeros((d,), jnp.float32)]),
        "iou2": p["iou_b2"],
        "fcmask_iou3": jnp.concatenate([p["fc_mask_b"], p["iou_b3"]]),
    }
    w2d = jnp.concatenate([padg(w2d_parts[k]) for k in W2D_GROUPS], axis=1)
    wd = jnp.concatenate([padg(wd_parts[k]) for k in WD_GROUPS], axis=1)
    bias = jnp.concatenate([padg(r2(bias_parts[k])) for k in BIAS_GROUPS], axis=1)
    return dict(w2d=w2d, wd=wd, ffn_w2=p["ffn_w2"], bias=bias,
                ln_g=p["ln_g"], ln_b=p["ln_b"])


# ----------------------------------------------------------------------------

if __name__ == "__main__":
    B, D, H, W, N = 2, 32, 16, 16, 12   # N % 6 == 0 (iou_pred view), D % num_heads == 0
    FF = 128                            # feedforward_channels (small synthetic)

    key = jax.random.PRNGKey(0)
    kf, kp, km, kw = jax.random.split(key, 4)
    features = jax.random.normal(kf, (B, D, H, W), jnp.float32)         # NCHW, C == hidden_dim
    proposal_kernels = jax.random.normal(kp, (B, N, D), jnp.float32)
    mask_preds = jax.random.normal(km, (B, N, H, W), jnp.float32)
    packed = pack_params(init_params(kw, D, FF), D, FF)

    fwd = jax.jit(cross_atten_head_forward)
    iou_pred, cls_score, new_mask_preds, obj_feat = fwd(
        packed, features, proposal_kernels, mask_preds)

    jax.block_until_ready((iou_pred, new_mask_preds, obj_feat))
    assert iou_pred.shape == (B, N // 6, 6)
    assert cls_score is None
    assert new_mask_preds.shape == (B, N, H, W)
    assert obj_feat.shape == (B, N, D)
    assert bool(jnp.all(jnp.isfinite(new_mask_preds))) and bool(jnp.all(jnp.isfinite(iou_pred)))
    print("KERNEL_OK")
</pallas_src>

<mosaic_0001>
module attributes {stable_mosaic.version = 11 : i64} {
  func.func @_cross_atten_head_kernel(%arg0: i32, %arg1: memref<24x512xf32, #tpu.memory_space<vmem>>, %arg2: memref<512x32xf32, #tpu.memory_space<vmem>>, %arg3: memref<64x256xf32, #tpu.memory_space<vmem>>, %arg4: memref<24x32xf32, #tpu.memory_space<vmem>>, %arg5: memref<192x32xf32, #tpu.memory_space<vmem>>, %arg6: memref<96x24xf32, #tpu.memory_space<vmem>>, %arg7: memref<24x96xf32, #tpu.memory_space<vmem>>, %arg8: memref<24x64xf32, #tpu.memory_space<vmem>>, %arg9: memref<64x256xf32, #tpu.memory_space<vmem>>, %arg10: memref<32x896xf32, #tpu.memory_space<vmem>>, %arg11: memref<128x32xf32, #tpu.memory_space<vmem>>, %arg12: memref<1x1280xf32, #tpu.memory_space<vmem>>, %arg13: memref<8x32xf32, #tpu.memory_space<vmem>>, %arg14: memref<8x32xf32, #tpu.memory_space<vmem>>, %arg15: memref<24x1xf32, #tpu.memory_space<vmem>>, %arg16: memref<24x256xf32, #tpu.memory_space<vmem>>, %arg17: memref<24x32xf32, #tpu.memory_space<vmem>>) attributes {dimension_semantics = [#tpu.dimension_semantics<arbitrary>], iteration_bounds = array<i64: 1>, scalar_prefetch = 0 : i64, scratch_operands = 0 : i64, tpu.core_type = #tpu.core_type<tc>, window_params = [{pipeline_mode = #tpu.pipeline_mode<synchronous>, transform_indices = @transform_0, window_bounds = array<i64: 24, 512>}, {pipeline_mode = #tpu.pipeline_mode<synchronous>, transform_indices = @transform_1, window_bounds = array<i64: 512, 32>}, {pipeline_mode = #tpu.pipeline_mode<synchronous>, transform_indices = @transform_2, window_bounds = array<i64: 64, 256>}, {pipeline_mode = #tpu.pipeline_mode<synchronous>, transform_indices = @transform_3, window_bounds = array<i64: 24, 32>}, {pipeline_mode = #tpu.pipeline_mode<synchronous>, transform_indices = @transform_4, window_bounds = array<i64: 192, 32>}, {pipeline_mode = #tpu.pipeline_mode<synchronous>, transform_indices = @transform_5, window_bounds = array<i64: 96, 24>}, {pipeline_mode = #tpu.pipeline_mode<synchronous>, transform_indices = @transform_6, window_bounds = array<i64: 24, 96>}, {pipeline_mode = #tpu.pipeline_mode<synchronous>, transform_indices = @transform_7, window_bounds = array<i64: 24, 64>}, {pipeline_mode = #tpu.pipeline_mode<synchronous>, transform_indices = @transform_8, window_bounds = array<i64: 64, 256>}, {pipeline_mode = #tpu.pipeline_mode<synchronous>, transform_indices = @transform_9, window_bounds = array<i64: 32, 896>}, {pipeline_mode = #tpu.pipeline_mode<synchronous>, transform_indices = @transform_10, window_bounds = array<i64: 128, 32>}, {pipeline_mode = #tpu.pipeline_mode<synchronous>, transform_indices = @transform_11, window_bounds = array<i64: 1, 1280>}, {pipeline_mode = #tpu.pipeline_mode<synchronous>, transform_indices = @transform_12, window_bounds = array<i64: 8, 32>}, {pipeline_mode = #tpu.pipeline_mode<synchronous>, transform_indices = @transform_13, window_bounds = array<i64: 8, 32>}, {pipeline_mode = #tpu.pipeline_mode<synchronous>, transform_indices = @transform_14, window_bounds = array<i64: 24, 1>}, {pipeline_mode = #tpu.pipeline_mode<synchronous>, transform_indices = @transform_15, window_bounds = array<i64: 24, 256>}, {pipeline_mode = #tpu.pipeline_mode<synchronous>, transform_indices = @transform_16, window_bounds = array<i64: 24, 32>}]} {
    %c0 = arith.constant 0 : index
    %c0_0 = arith.constant 0 : index
    %0 = vector.load %arg1[%c0, %c0_0] : memref<24x512xf32, #tpu.memory_space<vmem>>, vector<24x512xf32>
    %cst = arith.constant 0.000000e+00 : f32
    %1 = vector.broadcast %cst : f32 to vector<24x512xf32>
    %2 = arith.cmpf ogt, %0, %1 : vector<24x512xf32>
    %3 = arith.extui %2 : vector<24x512xi1> to vector<24x512xi32>
    %4 = arith.sitofp %3 : vector<24x512xi32> to vector<24x512xf32>
    %c0_1 = arith.constant 0 : index
    %c0_2 = arith.constant 0 : index
    %5 = vector.load %arg2[%c0_1, %c0_2] : memref<512x32xf32, #tpu.memory_space<vmem>>, vector<512x32xf32>
    %cst_3 = arith.constant dense<0.000000e+00> : vector<24x32xf32>
    %6 = tpu.matmul %4, %5, %cst_3 {dimension_numbers = #tpu.dot_dimension_numbers<[1], [0], [0], [1], [0, 0, 1, 1], [], []>} : vector<24x512xf32>, vector<512x32xf32>, vector<24x32xf32> -> vector<24x32xf32>
    %c0_4 = arith.constant 0 : index
    %c0_5 = arith.constant 0 : index
    %7 = vector.load %arg4[%c0_4, %c0_5] : memref<24x32xf32, #tpu.memory_space<vmem>>, vector<24x32xf32>
    %8 = tpu.concatenate %6, %7 in 1 : vector<24x32xf32>, vector<24x32xf32> -> vector<24x64xf32>
    %c0_6 = arith.constant 0 : index
    %c0_7 = arith.constant 0 : index
    %9 = vector.load %arg9[%c0_6, %c0_7] : memref<64x256xf32, #tpu.memory_space<vmem>>, vector<64x128xf32>
    %c0_8 = arith.constant 0 : index
    %c0_9 = arith.constant 0 : index
    %10 = vector.load %arg12[%c0_8, %c0_9] : memref<1x1280xf32, #tpu.memory_space<vmem>>, vector<1x128xf32>
    %cst_10 = arith.constant dense<0.000000e+00> : vector<24x128xf32>
    %11 = tpu.matmul %8, %9, %cst_10 {dimension_numbers = #tpu.dot_dimension_numbers<[1], [0], [0], [1], [0, 0, 1, 1], [], []>} : vector<24x64xf32>, vector<64x128xf32>, vector<24x128xf32> -> vector<24x128xf32>
    %12 = vector.broadcast %10 : vector<1x128xf32> to vector<24x128xf32>
    %13 = arith.addf %11, %12 : vector<24x128xf32>
    %14 = vector.extract_strided_slice %13 {offsets = [0, 0], sizes = [24, 32], strides = [1, 1]} : vector<24x128xf32> to vector<24x32xf32>
    %15 = vector.extract_strided_slice %13 {offsets = [0, 32], sizes = [24, 32], strides = [1, 1]} : vector<24x128xf32> to vector<24x32xf32>
    %16 = vector.extract_strided_slice %13 {offsets = [0, 64], sizes = [24, 32], strides = [1, 1]} : vector<24x128xf32> to vector<24x32xf32>
    %17 = vector.extract_strided_slice %13 {offsets = [0, 96], sizes = [24, 32], strides = [1, 1]} : vector<24x128xf32> to vector<24x32xf32>
    %18 = arith.mulf %16, %14 : vector<24x32xf32>
    %c0_11 = arith.constant 0 : index
    %c0_12 = arith.constant 0 : index
    %19 = vector.load %arg10[%c0_11, %c0_12] : memref<32x896xf32, #tpu.memory_space<vmem>>, vector<32x64xf32>
    %c0_13 = arith.constant 0 : index
    %c128 = arith.constant 128 : index
    %20 = vector.load %arg12[%c0_13, %c128] : memref<1x1280xf32, #tpu.memory_space<vmem>>, vector<1x64xf32>
    %cst_14 = arith.constant dense<0.000000e+00> : vector<24x64xf32>
    %21 = tpu.matmul %18, %19, %cst_14 {dimension_numbers = #tpu.dot_dimension_numbers<[1], [0], [0], [1], [0, 0, 1, 1], [], []>} : vector<24x32xf32>, vector<32x64xf32>, vector<24x64xf32> -> vector<24x64xf32>
    %22 = vector.broadcast %20 : vector<1x64xf32> to vector<24x64xf32>
    %23 = arith.addf %21, %22 : vector<24x64xf32>
    %24 = vector.extract_strided_slice %23 {offsets = [0, 0], sizes = [24, 32], strides = [1, 1]} : vector<24x64xf32> to vector<24x32xf32>
    %cst_15 = arith.constant dense<0.000000e+00> : vector<24xf32>
    %25 = vector.multi_reduction <add>, %24, %cst_15 [1] : vector<24x32xf32> to vector<24xf32>
    %26 = vector.shape_cast %25 : vector<24xf32> to vector<24x1xf32>
    %cst_16 = arith.constant 3.125000e-02 : f32
    %27 = vector.broadcast %cst_16 : f32 to vector<24x1xf32>
    %28 = arith.mulf %26, %27 : vector<24x1xf32>
    %29 = arith.mulf %24, %24 : vector<24x32xf32>
    %cst_17 = arith.constant dense<0.000000e+00> : vector<24xf32>
    %30 = vector.multi_reduction <add>, %29, %cst_17 [1] : vector<24x32xf32> to vector<24xf32>
    %31 = vector.shape_cast %30 : vector<24xf32> to vector<24x1xf32>
    %cst_18 = arith.constant 3.125000e-02 : f32
    %32 = vector.broadcast %cst_18 : f32 to vector<24x1xf32>
    %33 = arith.mulf %31, %32 : vector<24x1xf32>
    %34 = arith.mulf %28, %28 : vector<24x1xf32>
    %35 = arith.subf %33, %34 : vector<24x1xf32>
    %cst_19 = arith.constant 0.000000e+00 : f32
    %36 = vector.broadcast %cst_19 : f32 to vector<24x1xf32>
    %37 = arith.maximumf %35, %36 : vector<24x1xf32>
    %38 = vector.broadcast %28 : vector<24x1xf32> to vector<24x32xf32>
    %39 = arith.subf %24, %38 : vector<24x32xf32>
    %cst_20 = arith.constant 9.99999974E-6 : f32
    %40 = vector.broadcast %cst_20 : f32 to vector<24x1xf32>
    %41 = arith.addf %37, %40 : vector<24x1xf32>
    %42 = math.rsqrt %41 : vector<24x1xf32>
    %43 = vector.broadcast %42 : vector<24x1xf32> to vector<24x32xf32>
    %44 = arith.mulf %39, %43 : vector<24x32xf32>
    %c2 = arith.constant 2 : index
    %c0_21 = arith.constant 0 : index
    %45 = vector.load %arg13[%c2, %c0_21] : memref<8x32xf32, #tpu.memory_space<vmem>>, vector<1x32xf32>
    %46 = vector.broadcast %45 : vector<1x32xf32> to vector<24x32xf32>
    %47 = arith.mulf %44, %46 : vector<24x32xf32>
    %c2_22 = arith.constant 2 : index
    %c0_23 = arith.constant 0 : index
    %48 = vector.load %arg14[%c2_22, %c0_23] : memref<8x32xf32, #tpu.memory_space<vmem>>, vector<1x32xf32>
    %49 = vector.broadcast %48 : vector<1x32xf32> to vector<24x32xf32>
    %50 = arith.addf %47, %49 : vector<24x32xf32>
    %51 = arith.negf %50 : vector<24x32xf32>
    %52 = math.exp %51 : vector<24x32xf32>
    %cst_24 = arith.constant 1.000000e+00 : f32
    %53 = vector.broadcast %cst_24 : f32 to vector<24x32xf32>
    %54 = arith.addf %53, %52 : vector<24x32xf32>
    %55 = arith.divf %53, %54 : vector<24x32xf32>
    %56 = vector.extract_strided_slice %23 {offsets = [0, 32], sizes = [24, 32], strides = [1, 1]} : vector<24x64xf32> to vector<24x32xf32>
    %cst_25 = arith.constant dense<0.000000e+00> : vector<24xf32>
    %57 = vector.multi_reduction <add>, %56, %cst_25 [1] : vector<24x32xf32> to vector<24xf32>
    %58 = vector.shape_cast %57 : vector<24xf32> to vector<24x1xf32>
    %cst_26 = arith.constant 3.125000e-02 : f32
    %59 = vector.broadcast %cst_26 : f32 to vector<24x1xf32>
    %60 = arith.mulf %58, %59 : vector<24x1xf32>
    %61 = arith.mulf %56, %56 : vector<24x32xf32>
    %cst_27 = arith.constant dense<0.000000e+00> : vector<24xf32>
    %62 = vector.multi_reduction <add>, %61, %cst_27 [1] : vector<24x32xf32> to vector<24xf32>
    %63 = vector.shape_cast %62 : vector<24xf32> to vector<24x1xf32>
    %cst_28 = arith.constant 3.125000e-02 : f32
    %64 = vector.broadcast %cst_28 : f32 to vector<24x1xf32>
    %65 = arith.mulf %63, %64 : vector<24x1xf32>
    %66 = arith.mulf %60, %60 : vector<24x1xf32>
    %67 = arith.subf %65, %66 : vector<24x1xf32>
    %cst_29 = arith.constant 0.000000e+00 : f32
    %68 = vector.broadcast %cst_29 : f32 to vector<24x1xf32>
    %69 = arith.maximumf %67, %68 : vector<24x1xf32>
    %70 = vector.broadcast %60 : vector<24x1xf32> to vector<24x32xf32>
    %71 = arith.subf %56, %70 : vector<24x32xf32>
    %cst_30 = arith.constant 9.99999974E-6 : f32
    %72 = vector.broadcast %cst_30 : f32 to vector<24x1xf32>
    %73 = arith.addf %69, %72 : vector<24x1xf32>
    %74 = math.rsqrt %73 : vector<24x1xf32>
    %75 = vector.broadcast %74 : vector<24x1xf32> to vector<24x32xf32>
    %76 = arith.mulf %71, %75 : vector<24x32xf32>
    %c0_31 = arith.constant 0 : index
    %c0_32 = arith.constant 0 : index
    %77 = vector.load %arg13[%c0_31, %c0_32] : memref<8x32xf32, #tpu.memory_space<vmem>>, vector<1x32xf32>
    %78 = vector.broadcast %77 : vector<1x32xf32> to vector<24x32xf32>
    %79 = arith.mulf %76, %78 : vector<24x32xf32>
    %c0_33 = arith.constant 0 : index
    %c0_34 = arith.constant 0 : index
    %80 = vector.load %arg14[%c0_33, %c0_34] : memref<8x32xf32, #tpu.memory_space<vmem>>, vector<1x32xf32>
    %81 = vector.broadcast %80 : vector<1x32xf32> to vector<24x32xf32>
    %82 = arith.addf %79, %81 : vector<24x32xf32>
    %83 = arith.negf %82 : vector<24x32xf32>
    %84 = math.exp %83 : vector<24x32xf32>
    %cst_35 = arith.constant 1.000000e+00 : f32
    %85 = vector.broadcast %cst_35 : f32 to vector<24x32xf32>
    %86 = arith.addf %85, %84 : vector<24x32xf32>
    %87 = arith.divf %85, %86 : vector<24x32xf32>
    %cst_36 = arith.constant dense<0.000000e+00> : vector<24xf32>
    %88 = vector.multi_reduction <add>, %15, %cst_36 [1] : vector<24x32xf32> to vector<24xf32>
    %89 = vector.shape_cast %88 : vector<24xf32> to vector<24x1xf32>
    %cst_37 = arith.constant 3.125000e-02 : f32
    %90 = vector.broadcast %cst_37 : f32 to vector<24x1xf32>
    %91 = arith.mulf %89, %90 : vector<24x1xf32>
    %92 = arith.mulf %15, %15 : vector<24x32xf32>
    %cst_38 = arith.constant dense<0.000000e+00> : vector<24xf32>
    %93 = vector.multi_reduction <add>, %92, %cst_38 [1] : vector<24x32xf32> to vector<24xf32>
    %94 = vector.shape_cast %93 : vector<24xf32> to vector<24x1xf32>
    %cst_39 = arith.constant 3.125000e-02 : f32
    %95 = vector.broadcast %cst_39 : f32 to vector<24x1xf32>
    %96 = arith.mulf %94, %95 : vector<24x1xf32>
    %97 = arith.mulf %91, %91 : vector<24x1xf32>
    %98 = arith.subf %96, %97 : vector<24x1xf32>
    %cst_40 = arith.constant 0.000000e+00 : f32
    %99 = vector.broadcast %cst_40 : f32 to vector<24x1xf32>
    %100 = arith.maximumf %98, %99 : vector<24x1xf32>
    %101 = vector.broadcast %91 : vector<24x1xf32> to vector<24x32xf32>
    %102 = arith.subf %15, %101 : vector<24x32xf32>
    %cst_41 = arith.constant 9.99999974E-6 : f32
    %103 = vector.broadcast %cst_41 : f32 to vector<24x1xf32>
    %104 = arith.addf %100, %103 : vector<24x1xf32>
    %105 = math.rsqrt %104 : vector<24x1xf32>
    %106 = vector.broadcast %105 : vector<24x1xf32> to vector<24x32xf32>
    %107 = arith.mulf %102, %106 : vector<24x32xf32>
    %c1 = arith.constant 1 : index
    %c0_42 = arith.constant 0 : index
    %108 = vector.load %arg13[%c1, %c0_42] : memref<8x32xf32, #tpu.memory_space<vmem>>, vector<1x32xf32>
    %109 = vector.broadcast %108 : vector<1x32xf32> to vector<24x32xf32>
    %110 = arith.mulf %107, %109 : vector<24x32xf32>
    %c1_43 = arith.constant 1 : index
    %c0_44 = arith.constant 0 : index
    %111 = vector.load %arg14[%c1_43, %c0_44] : memref<8x32xf32, #tpu.memory_space<vmem>>, vector<1x32xf32>
    %112 = vector.broadcast %111 : vector<1x32xf32> to vector<24x32xf32>
    %113 = arith.addf %110, %112 : vector<24x32xf32>
    %114 = arith.mulf %87, %113 : vector<24x32xf32>
    %cst_45 = arith.constant dense<0.000000e+00> : vector<24xf32>
    %115 = vector.multi_reduction <add>, %17, %cst_45 [1] : vector<24x32xf32> to vector<24xf32>
    %116 = vector.shape_cast %115 : vector<24xf32> to vector<24x1xf32>
    %cst_46 = arith.constant 3.125000e-02 : f32
    %117 = vector.broadcast %cst_46 : f32 to vector<24x1xf32>
    %118 = arith.mulf %116, %117 : vector<24x1xf32>
    %119 = arith.mulf %17, %17 : vector<24x32xf32>
    %cst_47 = arith.constant dense<0.000000e+00> : vector<24xf32>
    %120 = vector.multi_reduction <add>, %119, %cst_47 [1] : vector<24x32xf32> to vector<24xf32>
    %121 = vector.shape_cast %120 : vector<24xf32> to vector<24x1xf32>
    %cst_48 = arith.constant 3.125000e-02 : f32
    %122 = vector.broadcast %cst_48 : f32 to vector<24x1xf32>
    %123 = arith.mulf %121, %122 : vector<24x1xf32>
    %124 = arith.mulf %118, %118 : vector<24x1xf32>
    %125 = arith.subf %123, %124 : vector<24x1xf32>
    %cst_49 = arith.constant 0.000000e+00 : f32
    %126 = vector.broadcast %cst_49 : f32 to vector<24x1xf32>
    %127 = arith.maximumf %125, %126 : vector<24x1xf32>
    %128 = vector.broadcast %118 : vector<24x1xf32> to vector<24x32xf32>
    %129 = arith.subf %17, %128 : vector<24x32xf32>
    %cst_50 = arith.constant 9.99999974E-6 : f32
    %130 = vector.broadcast %cst_50 : f32 to vector<24x1xf32>
    %131 = arith.addf %127, %130 : vector<24x1xf32>
    %132 = math.rsqrt %131 : vector<24x1xf32>
    %133 = vector.broadcast %132 : vector<24x1xf32> to vector<24x32xf32>
    %134 = arith.mulf %129, %133 : vector<24x32xf32>
    %c3 = arith.constant 3 : index
    %c0_51 = arith.constant 0 : index
    %135 = vector.load %arg13[%c3, %c0_51] : memref<8x32xf32, #tpu.memory_space<vmem>>, vector<1x32xf32>
    %136 = vector.broadcast %135 : vector<1x32xf32> to vector<24x32xf32>
    %137 = arith.mulf %134, %136 : vector<24x32xf32>
    %c3_52 = arith.constant 3 : index
    %c0_53 = arith.constant 0 : index
    %138 = vector.load %arg14[%c3_52, %c0_53] : memref<8x32xf32, #tpu.memory_space<vmem>>, vector<1x32xf32>
    %139 = vector.broadcast %138 : vector<1x32xf32> to vector<24x32xf32>
    %140 = arith.addf %137, %139 : vector<24x32xf32>
    %141 = arith.mulf %55, %140 : vector<24x32xf32>
    %142 = arith.addf %114, %141 : vector<24x32xf32>
    %c0_54 = arith.constant 0 : index
    %c128_55 = arith.constant 128 : index
    %143 = vector.load %arg10[%c0_54, %c128_55] : memref<32x896xf32, #tpu.memory_space<vmem>>, vector<32x32xf32>
    %c0_56 = arith.constant 0 : index
    %c256 = arith.constant 256 : index
    %144 = vector.load %arg12[%c0_56, %c256] : memref<1x1280xf32, #tpu.memory_space<vmem>>, vector<1x32xf32>
    %cst_57 = arith.constant dense<0.000000e+00> : vector<24x32xf32>
    %145 = tpu.matmul %142, %143, %cst_57 {dimension_numbers = #tpu.dot_dimension_numbers<[1], [0], [0], [1], [0, 0, 1, 1], [], []>} : vector<24x32xf32>, vector<32x32xf32>, vector<24x32xf32> -> vector<24x32xf32>
    %146 = vector.broadcast %144 : vector<1x32xf32> to vector<24x32xf32>
    %147 = arith.addf %145, %146 : vector<24x32xf32>
    %cst_58 = arith.constant dense<0.000000e+00> : vector<24xf32>
    %148 = vector.multi_reduction <add>, %147, %cst_58 [1] : vector<24x32xf32> to vector<24xf32>
    %149 = vector.shape_cast %148 : vector<24xf32> to vector<24x1xf32>
    %cst_59 = arith.constant 3.125000e-02 : f32
    %150 = vector.broadcast %cst_59 : f32 to vector<24x1xf32>
    %151 = arith.mulf %149, %150 : vector<24x1xf32>
    %152 = arith.mulf %147, %147 : vector<24x32xf32>
    %cst_60 = arith.constant dense<0.000000e+00> : vector<24xf32>
    %153 = vector.multi_reduction <add>, %152, %cst_60 [1] : vector<24x32xf32> to vector<24xf32>
    %154 = vector.shape_cast %153 : vector<24xf32> to vector<24x1xf32>
    %cst_61 = arith.constant 3.125000e-02 : f32
    %155 = vector.broadcast %cst_61 : f32 to vector<24x1xf32>
    %156 = arith.mulf %154, %155 : vector<24x1xf32>
    %157 = arith.mulf %151, %151 : vector<24x1xf32>
    %158 = arith.subf %156, %157 : vector<24x1xf32>
    %cst_62 = arith.constant 0.000000e+00 : f32
    %159 = vector.broadcast %cst_62 : f32 to vector<24x1xf32>
    %160 = arith.maximumf %158, %159 : vector<24x1xf32>
    %161 = vector.broadcast %151 : vector<24x1xf32> to vector<24x32xf32>
    %162 = arith.subf %147, %161 : vector<24x32xf32>
    %cst_63 = arith.constant 9.99999974E-6 : f32
    %163 = vector.broadcast %cst_63 : f32 to vector<24x1xf32>
    %164 = arith.addf %160, %163 : vector<24x1xf32>
    %165 = math.rsqrt %164 : vector<24x1xf32>
    %166 = vector.broadcast %165 : vector<24x1xf32> to vector<24x32xf32>
    %167 = arith.mulf %162, %166 : vector<24x32xf32>
    %c4 = arith.constant 4 : index
    %c0_64 = arith.constant 0 : index
    %168 = vector.load %arg13[%c4, %c0_64] : memref<8x32xf32, #tpu.memory_space<vmem>>, vector<1x32xf32>
    %169 = vector.broadcast %168 : vector<1x32xf32> to vector<24x32xf32>
    %170 = arith.mulf %167, %169 : vector<24x32xf32>
    %c4_65 = arith.constant 4 : index
    %c0_66 = arith.constant 0 : index
    %171 = vector.load %arg14[%c4_65, %c0_66] : memref<8x32xf32, #tpu.memory_space<vmem>>, vector<1x32xf32>
    %172 = vector.broadcast %171 : vector<1x32xf32> to vector<24x32xf32>
    %173 = arith.addf %170, %172 : vector<24x32xf32>
    %cst_67 = arith.constant 0.000000e+00 : f32
    %174 = vector.broadcast %cst_67 : f32 to vector<24x32xf32>
    %175 = arith.maximumf %173, %174 : vector<24x32xf32>
    %c0_68 = arith.constant 0 : index
    %c256_69 = arith.constant 256 : index
    %176 = vector.load %arg10[%c0_68, %c256_69] : memref<32x896xf32, #tpu.memory_space<vmem>>, vector<32x96xf32>
    %c0_70 = arith.constant 0 : index
    %c384 = arith.constant 384 : index
    %177 = vector.load %arg12[%c0_70, %c384] : memref<1x1280xf32, #tpu.memory_space<vmem>>, vector<1x96xf32>
    %cst_71 = arith.constant dense<0.000000e+00> : vector<24x96xf32>
    %178 = tpu.matmul %175, %176, %cst_71 {dimension_numbers = #tpu.dot_dimension_numbers<[1], [0], [0], [1], [0, 0, 1, 1], [], []>} : vector<24x32xf32>, vector<32x96xf32>, vector<24x96xf32> -> vector<24x96xf32>
    %179 = vector.broadcast %177 : vector<1x96xf32> to vector<24x96xf32>
    %180 = arith.addf %178, %179 : vector<24x96xf32>
    %181 = vector.extract_strided_slice %180 {offsets = [0, 0], sizes = [24, 32], strides = [1, 1]} : vector<24x96xf32> to vector<24x32xf32>
    %cst_72 = arith.constant 5.000000e-01 : f32
    %182 = vector.broadcast %cst_72 : f32 to vector<24x32xf32>
    %183 = arith.mulf %181, %182 : vector<24x32xf32>
    %184 = vector.extract_strided_slice %180 {offsets = [0, 32], sizes = [24, 32], strides = [1, 1]} : vector<24x96xf32> to vector<24x32xf32>
    %185 = vector.extract_strided_slice %180 {offsets = [0, 64], sizes = [24, 32], strides = [1, 1]} : vector<24x96xf32> to vector<24x32xf32>
    %186 = tpu.concatenate %183, %183, %183, %183 in 0 : vector<24x32xf32>, vector<24x32xf32>, vector<24x32xf32>, vector<24x32xf32> -> vector<96x32xf32>
    %c0_73 = arith.constant 0 : index
    %c0_74 = arith.constant 0 : index
    %187 = vector.load %arg6[%c0_73, %c0_74] : memref<96x24xf32, #tpu.memory_space<vmem>>, vector<96x24xf32>
    %c0_75 = arith.constant 0 : index
    %c0_76 = arith.constant 0 : index
    %188 = vector.load %arg7[%c0_75, %c0_76] : memref<24x96xf32, #tpu.memory_space<vmem>>, vector<24x96xf32>
    %cst_77 = arith.constant 0.000000e+00 : f32
    %189 = vector.broadcast %cst_77 : f32 to vector<24x32xf32>
    %c0_78 = arith.constant 0 : index
    %c0_79 = arith.constant 0 : index
    %190 = vector.load %arg5[%c0_78, %c0_79] : memref<192x32xf32, #tpu.memory_space<vmem>>, vector<96x32xf32>
    %191 = arith.mulf %186, %190 : vector<96x32xf32>
    %cst_80 = arith.constant dense<0.000000e+00> : vector<96x24xf32>
    %192 = tpu.matmul %191, %184, %cst_80 {dimension_numbers = #tpu.dot_dimension_numbers<[1], [1], [0], [0], [0, 0, 1, 0], [], []>} : vector<96x32xf32>, vector<24x32xf32>, vector<96x24xf32> -> vector<96x24xf32>
    %193 = arith.addf %192, %187 : vector<96x24xf32>
    %cst_81 = arith.constant dense<0xFF800000> : vector<96xf32>
    %194 = vector.multi_reduction <maximumf>, %193, %cst_81 [1] : vector<96x24xf32> to vector<96xf32>
    %195 = vector.shape_cast %194 : vector<96xf32> to vector<96x1xf32>
    %196 = vector.broadcast %195 : vector<96x1xf32> to vector<96x24xf32>
    %197 = arith.subf %193, %196 : vector<96x24xf32>
    %198 = math.exp %197 : vector<96x24xf32>
    %cst_82 = arith.constant dense<0.000000e+00> : vector<96xf32>
    %199 = vector.multi_reduction <add>, %198, %cst_82 [1] : vector<96x24xf32> to vector<96xf32>
    %200 = vector.shape_cast %199 : vector<96xf32> to vector<96x1xf32>
    %201 = tpu.reciprocal %200 {approx = true} : vector<96x1xf32> -> vector<96x1xf32>
    %202 = vector.broadcast %201 : vector<96x1xf32> to vector<96x24xf32>
    %203 = arith.mulf %198, %202 : vector<96x24xf32>
    %cst_83 = arith.constant dense<0.000000e+00> : vector<96x32xf32>
    %204 = tpu.matmul %203, %185, %cst_83 {dimension_numbers = #tpu.dot_dimension_numbers<[1], [0], [0], [1], [0, 0, 1, 1], [], []>} : vector<96x24xf32>, vector<24x32xf32>, vector<96x32xf32> -> vector<96x32xf32>
    %205 = arith.mulf %204, %190 : vector<96x32xf32>
    %cst_84 = arith.constant dense<0.000000e+00> : vector<24x32xf32>
    %206 = tpu.matmul %188, %205, %cst_84 {dimension_numbers = #tpu.dot_dimension_numbers<[1], [0], [0], [1], [0, 0, 1, 1], [], []>} : vector<24x96xf32>, vector<96x32xf32>, vector<24x32xf32> -> vector<24x32xf32>
    %207 = arith.addf %189, %206 : vector<24x32xf32>
    %c96 = arith.constant 96 : index
    %c0_85 = arith.constant 0 : index
    %208 = vector.load %arg5[%c96, %c0_85] : memref<192x32xf32, #tpu.memory_space<vmem>>, vector<96x32xf32>
    %209 = arith.mulf %186, %208 : vector<96x32xf32>
    %cst_86 = arith.constant dense<0.000000e+00> : vector<96x24xf32>
    %210 = tpu.matmul %209, %184, %cst_86 {dimension_numbers = #tpu.dot_dimension_numbers<[1], [1], [0], [0], [0, 0, 1, 0], [], []>} : vector<96x32xf32>, vector<24x32xf32>, vector<96x24xf32> -> vector<96x24xf32>
    %211 = arith.addf %210, %187 : vector<96x24xf32>
    %cst_87 = arith.constant dense<0xFF800000> : vector<96xf32>
    %212 = vector.multi_reduction <maximumf>, %211, %cst_87 [1] : vector<96x24xf32> to vector<96xf32>
    %213 = vector.shape_cast %212 : vector<96xf32> to vector<96x1xf32>
    %214 = vector.broadcast %213 : vector<96x1xf32> to vector<96x24xf32>
    %215 = arith.subf %211, %214 : vector<96x24xf32>
    %216 = math.exp %215 : vector<96x24xf32>
    %cst_88 = arith.constant dense<0.000000e+00> : vector<96xf32>
    %217 = vector.multi_reduction <add>, %216, %cst_88 [1] : vector<96x24xf32> to vector<96xf32>
    %218 = vector.shape_cast %217 : vector<96xf32> to vector<96x1xf32>
    %219 = tpu.reciprocal %218 {approx = true} : vector<96x1xf32> -> vector<96x1xf32>
    %220 = vector.broadcast %219 : vector<96x1xf32> to vector<96x24xf32>
    %221 = arith.mulf %216, %220 : vector<96x24xf32>
    %cst_89 = arith.constant dense<0.000000e+00> : vector<96x32xf32>
    %222 = tpu.matmul %221, %185, %cst_89 {dimension_numbers = #tpu.dot_dimension_numbers<[1], [0], [0], [1], [0, 0, 1, 1], [], []>} : vector<96x24xf32>, vector<24x32xf32>, vector<96x32xf32> -> vector<96x32xf32>
    %223 = arith.mulf %222, %208 : vector<96x32xf32>
    %cst_90 = arith.constant dense<0.000000e+00> : vector<24x32xf32>
    %224 = tpu.matmul %188, %223, %cst_90 {dimension_numbers = #tpu.dot_dimension_numbers<[1], [0], [0], [1], [0, 0, 1, 1], [], []>} : vector<24x96xf32>, vector<96x32xf32>, vector<24x32xf32> -> vector<24x32xf32>
    %225 = arith.addf %207, %224 : vector<24x32xf32>
    %c0_91 = arith.constant 0 : index
    %c384_92 = arith.constant 384 : index
    %226 = vector.load %arg10[%c0_91, %c384_92] : memref<32x896xf32, #tpu.memory_space<vmem>>, vector<32x32xf32>
    %c0_93 = arith.constant 0 : index
    %c512 = arith.constant 512 : index
    %227 = vector.load %arg12[%c0_93, %c512] : memref<1x1280xf32, #tpu.memory_space<vmem>>, vector<1x32xf32>
    %cst_94 = arith.constant dense<0.000000e+00> : vector<24x32xf32>
    %228 = tpu.matmul %225, %226, %cst_94 {dimension_numbers = #tpu.dot_dimension_numbers<[1], [0], [0], [1], [0, 0, 1, 1], [], []>} : vector<24x32xf32>, vector<32x32xf32>, vector<24x32xf32> -> vector<24x32xf32>
    %229 = vector.broadcast %227 : vector<1x32xf32> to vector<24x32xf32>
    %230 = arith.addf %228, %229 : vector<24x32xf32>
    %231 = arith.addf %175, %230 : vector<24x32xf32>
    %cst_95 = arith.constant dense<0.000000e+00> : vector<24xf32>
    %232 = vector.multi_reduction <add>, %231, %cst_95 [1] : vector<24x32xf32> to vector<24xf32>
    %233 = vector.shape_cast %232 : vector<24xf32> to vector<24x1xf32>
    %cst_96 = arith.constant 3.125000e-02 : f32
    %234 = vector.broadcast %cst_96 : f32 to vector<24x1xf32>
    %235 = arith.mulf %233, %234 : vector<24x1xf32>
    %236 = arith.mulf %231, %231 : vector<24x32xf32>
    %cst_97 = arith.constant dense<0.000000e+00> : vector<24xf32>
    %237 = vector.multi_reduction <add>, %236, %cst_97 [1] : vector<24x32xf32> to vector<24xf32>
    %238 = vector.shape_cast %237 : vector<24xf32> to vector<24x1xf32>
    %cst_98 = arith.constant 3.125000e-02 : f32
    %239 = vector.broadcast %cst_98 : f32 to vector<24x1xf32>
    %240 = arith.mulf %238, %239 : vector<24x1xf32>
    %241 = arith.mulf %235, %235 : vector<24x1xf32>
    %242 = arith.subf %240, %241 : vector<24x1xf32>
    %cst_99 = arith.constant 0.000000e+00 : f32
    %243 = vector.broadcast %cst_99 : f32 to vector<24x1xf32>
    %244 = arith.maximumf %242, %243 : vector<24x1xf32>
    %245 = vector.broadcast %235 : vector<24x1xf32> to vector<24x32xf32>
    %246 = arith.subf %231, %245 : vector<24x32xf32>
    %cst_100 = arith.constant 9.99999974E-6 : f32
    %247 = vector.broadcast %cst_100 : f32 to vector<24x1xf32>
    %248 = arith.addf %244, %247 : vector<24x1xf32>
    %249 = math.rsqrt %248 : vector<24x1xf32>
    %250 = vector.broadcast %249 : vector<24x1xf32> to vector<24x32xf32>
    %251 = arith.mulf %246, %250 : vector<24x32xf32>
    %c5 = arith.constant 5 : index
    %c0_101 = arith.constant 0 : index
    %252 = vector.load %arg13[%c5, %c0_101] : memref<8x32xf32, #tpu.memory_space<vmem>>, vector<1x32xf32>
    %253 = vector.broadcast %252 : vector<1x32xf32> to vector<24x32xf32>
    %254 = arith.mulf %251, %253 : vector<24x32xf32>
    %c5_102 = arith.constant 5 : index
    %c0_103 = arith.constant 0 : index
    %255 = vector.load %arg14[%c5_102, %c0_103] : memref<8x32xf32, #tpu.memory_space<vmem>>, vector<1x32xf32>
    %256 = vector.broadcast %255 : vector<1x32xf32> to vector<24x32xf32>
    %257 = arith.addf %254, %256 : vector<24x32xf32>
    %c0_104 = arith.constant 0 : index
    %c512_105 = arith.constant 512 : index
    %258 = vector.load %arg10[%c0_104, %c512_105] : memref<32x896xf32, #tpu.memory_space<vmem>>, vector<32x128xf32>
    %c0_106 = arith.constant 0 : index
    %c640 = arith.constant 640 : index
    %259 = vector.load %arg12[%c0_106, %c640] : memref<1x1280xf32, #tpu.memory_space<vmem>>, vector<1x128xf32>
    %cst_107 = arith.constant dense<0.000000e+00> : vector<24x128xf32>
    %260 = tpu.matmul %257, %258, %cst_107 {dimension_numbers = #tpu.dot_dimension_numbers<[1], [0], [0], [1], [0, 0, 1, 1], [], []>} : vector<24x32xf32>, vector<32x128xf32>, vector<24x128xf32> -> vector<24x128xf32>
    %261 = vector.broadcast %259 : vector<1x128xf32> to vector<24x128xf32>
    %262 = arith.addf %260, %261 : vector<24x128xf32>
    %cst_108 = arith.constant 0.000000e+00 : f32
    %263 = vector.broadcast %cst_108 : f32 to vector<24x128xf32>
    %264 = arith.maximumf %262, %263 : vector<24x128xf32>
    %c0_109 = arith.constant 0 : index
    %c0_110 = arith.constant 0 : index
    %265 = vector.load %arg11[%c0_109, %c0_110] : memref<128x32xf32, #tpu.memory_space<vmem>>, vector<128x32xf32>
    %c0_111 = arith.constant 0 : index
    %c768 = arith.constant 768 : index
    %266 = vector.load %arg12[%c0_111, %c768] : memref<1x1280xf32, #tpu.memory_space<vmem>>, vector<1x32xf32>
    %cst_112 = arith.constant dense<0.000000e+00> : vector<24x32xf32>
    %267 = tpu.matmul %264, %265, %cst_112 {dimension_numbers = #tpu.dot_dimension_numbers<[1], [0], [0], [1], [0, 0, 1, 1], [], []>} : vector<24x128xf32>, vector<128x32xf32>, vector<24x32xf32> -> vector<24x32xf32>
    %268 = vector.broadcast %266 : vector<1x32xf32> to vector<24x32xf32>
    %269 = arith.addf %267, %268 : vector<24x32xf32>
    %270 = arith.addf %257, %269 : vector<24x32xf32>
    %cst_113 = arith.constant dense<0.000000e+00> : vector<24xf32>
    %271 = vector.multi_reduction <add>, %270, %cst_113 [1] : vector<24x32xf32> to vector<24xf32>
    %272 = vector.shape_cast %271 : vector<24xf32> to vector<24x1xf32>
    %cst_114 = arith.constant 3.125000e-02 : f32
    %273 = vector.broadcast %cst_114 : f32 to vector<24x1xf32>
    %274 = arith.mulf %272, %273 : vector<24x1xf32>
    %275 = arith.mulf %270, %270 : vector<24x32xf32>
    %cst_115 = arith.constant dense<0.000000e+00> : vector<24xf32>
    %276 = vector.multi_reduction <add>, %275, %cst_115 [1] : vector<24x32xf32> to vector<24xf32>
    %277 = vector.shape_cast %276 : vector<24xf32> to vector<24x1xf32>
    %cst_116 = arith.constant 3.125000e-02 : f32
    %278 = vector.broadcast %cst_116 : f32 to vector<24x1xf32>
    %279 = arith.mulf %277, %278 : vector<24x1xf32>
    %280 = arith.mulf %274, %274 : vector<24x1xf32>
    %281 = arith.subf %279, %280 : vector<24x1xf32>
    %cst_117 = arith.constant 0.000000e+00 : f32
    %282 = vector.broadcast %cst_117 : f32 to vector<24x1xf32>
    %283 = arith.maximumf %281, %282 : vector<24x1xf32>
    %284 = vector.broadcast %274 : vector<24x1xf32> to vector<24x32xf32>
    %285 = arith.subf %270, %284 : vector<24x32xf32>
    %cst_118 = arith.constant 9.99999974E-6 : f32
    %286 = vector.broadcast %cst_118 : f32 to vector<24x1xf32>
    %287 = arith.addf %283, %286 : vector<24x1xf32>
    %288 = math.rsqrt %287 : vector<24x1xf32>
    %289 = vector.broadcast %288 : vector<24x1xf32> to vector<24x32xf32>
    %290 = arith.mulf %285, %289 : vector<24x32xf32>
    %c6 = arith.constant 6 : index
    %c0_119 = arith.constant 0 : index
    %291 = vector.load %arg13[%c6, %c0_119] : memref<8x32xf32, #tpu.memory_space<vmem>>, vector<1x32xf32>
    %292 = vector.broadcast %291 : vector<1x32xf32> to vector<24x32xf32>
    %293 = arith.mulf %290, %292 : vector<24x32xf32>
    %c6_120 = arith.constant 6 : index
    %c0_121 = arith.constant 0 : index
    %294 = vector.load %arg14[%c6_120, %c0_121] : memref<8x32xf32, #tpu.memory_space<vmem>>, vector<1x32xf32>
    %295 = vector.broadcast %294 : vector<1x32xf32> to vector<24x32xf32>
    %296 = arith.addf %293, %295 : vector<24x32xf32>
    %c0_122 = arith.constant 0 : index
    %c0_123 = arith.constant 0 : index
    %297 = vector.load %arg17[%c0_122, %c0_123] : memref<24x32xf32, #tpu.memory_space<vmem>>, vector<24x32xf32>
    tpu.vector_store %arg17[%c0_122, %c0_123], %296 {strides = array<i32>} : memref<24x32xf32, #tpu.memory_space<vmem>>, vector<24x32xf32>,
    %c0_124 = arith.constant 0 : index
    %c640_125 = arith.constant 640 : index
    %298 = vector.load %arg10[%c0_124, %c640_125] : memref<32x896xf32, #tpu.memory_space<vmem>>, vector<32x64xf32>
    %c0_126 = arith.constant 0 : index
    %c896 = arith.constant 896 : index
    %299 = vector.load %arg12[%c0_126, %c896] : memref<1x1280xf32, #tpu.memory_space<vmem>>, vector<1x64xf32>
    %cst_127 = arith.constant dense<0.000000e+00> : vector<24x64xf32>
    %300 = tpu.matmul %296, %298, %cst_127 {dimension_numbers = #tpu.dot_dimension_numbers<[1], [0], [0], [1], [0, 0, 1, 1], [], []>} : vector<24x32xf32>, vector<32x64xf32>, vector<24x64xf32> -> vector<24x64xf32>
    %301 = vector.broadcast %299 : vector<1x64xf32> to vector<24x64xf32>
    %302 = arith.addf %300, %301 : vector<24x64xf32>
    %303 = vector.extract_strided_slice %302 {offsets = [0, 0], sizes = [24, 32], strides = [1, 1]} : vector<24x64xf32> to vector<24x32xf32>
    %cst_128 = arith.constant 0.000000e+00 : f32
    %304 = vector.broadcast %cst_128 : f32 to vector<24x32xf32>
    %305 = arith.maximumf %303, %304 : vector<24x32xf32>
    %306 = vector.extract_strided_slice %302 {offsets = [0, 32], sizes = [24, 32], strides = [1, 1]} : vector<24x64xf32> to vector<24x32xf32>
    %cst_129 = arith.constant dense<0.000000e+00> : vector<24xf32>
    %307 = vector.multi_reduction <add>, %306, %cst_129 [1] : vector<24x32xf32> to vector<24xf32>
    %308 = vector.shape_cast %307 : vector<24xf32> to vector<24x1xf32>
    %cst_130 = arith.constant 3.125000e-02 : f32
    %309 = vector.broadcast %cst_130 : f32 to vector<24x1xf32>
    %310 = arith.mulf %308, %309 : vector<24x1xf32>
    %311 = arith.mulf %306, %306 : vector<24x32xf32>
    %cst_131 = arith.constant dense<0.000000e+00> : vector<24xf32>
    %312 = vector.multi_reduction <add>, %311, %cst_131 [1] : vector<24x32xf32> to vector<24xf32>
    %313 = vector.shape_cast %312 : vector<24xf32> to vector<24x1xf32>
    %cst_132 = arith.constant 3.125000e-02 : f32
    %314 = vector.broadcast %cst_132 : f32 to vector<24x1xf32>
    %315 = arith.mulf %313, %314 : vector<24x1xf32>
    %316 = arith.mulf %310, %310 : vector<24x1xf32>
    %317 = arith.subf %315, %316 : vector<24x1xf32>
    %cst_133 = arith.constant 0.000000e+00 : f32
    %318 = vector.broadcast %cst_133 : f32 to vector<24x1xf32>
    %319 = arith.maximumf %317, %318 : vector<24x1xf32>
    %320 = vector.broadcast %310 : vector<24x1xf32> to vector<24x32xf32>
    %321 = arith.subf %306, %320 : vector<24x32xf32>
    %cst_134 = arith.constant 9.99999974E-6 : f32
    %322 = vector.broadcast %cst_134 : f32 to vector<24x1xf32>
    %323 = arith.addf %319, %322 : vector<24x1xf32>
    %324 = math.rsqrt %323 : vector<24x1xf32>
    %325 = vector.broadcast %324 : vector<24x1xf32> to vector<24x32xf32>
    %326 = arith.mulf %321, %325 : vector<24x32xf32>
    %c7 = arith.constant 7 : index
    %c0_135 = arith.constant 0 : index
    %327 = vector.load %arg13[%c7, %c0_135] : memref<8x32xf32, #tpu.memory_space<vmem>>, vector<1x32xf32>
    %328 = vector.broadcast %327 : vector<1x32xf32> to vector<24x32xf32>
    %329 = arith.mulf %326, %328 : vector<24x32xf32>
    %c7_136 = arith.constant 7 : index
    %c0_137 = arith.constant 0 : index
    %330 = vector.load %arg14[%c7_136, %c0_137] : memref<8x32xf32, #tpu.memory_space<vmem>>, vector<1x32xf32>
    %331 = vector.broadcast %330 : vector<1x32xf32> to vector<24x32xf32>
    %332 = arith.addf %329, %331 : vector<24x32xf32>
    %cst_138 = arith.constant 0.000000e+00 : f32
    %333 = vector.broadcast %cst_138 : f32 to vector<24x32xf32>
    %334 = arith.maximumf %332, %333 : vector<24x32xf32>
    %c0_139 = arith.constant 0 : index
    %c768_140 = arith.constant 768 : index
    %335 = vector.load %arg10[%c0_139, %c768_140] : memref<32x896xf32, #tpu.memory_space<vmem>>, vector<32x32xf32>
    %c0_141 = arith.constant 0 : index
    %c1024 = arith.constant 1024 : index
    %336 = vector.load %arg12[%c0_141, %c1024] : memref<1x1280xf32, #tpu.memory_space<vmem>>, vector<1x32xf32>
    %cst_142 = arith.constant dense<0.000000e+00> : vector<24x32xf32>
    %337 = tpu.matmul %305, %335, %cst_142 {dimension_numbers = #tpu.dot_dimension_numbers<[1], [0], [0], [1], [0, 0, 1, 1], [], []>} : vector<24x32xf32>, vector<32x32xf32>, vector<24x32xf32> -> vector<24x32xf32>
    %338 = vector.broadcast %336 : vector<1x32xf32> to vector<24x32xf32>
    %339 = arith.addf %337, %338 : vector<24x32xf32>
    %cst_143 = arith.constant 0.000000e+00 : f32
    %340 = vector.broadcast %cst_143 : f32 to vector<24x32xf32>
    %341 = arith.maximumf %339, %340 : vector<24x32xf32>
    %342 = tpu.concatenate %334, %341 in 1 : vector<24x32xf32>, vector<24x32xf32> -> vector<24x64xf32>
    %c0_144 = arith.constant 0 : index
    %c128_145 = arith.constant 128 : index
    %343 = vector.load %arg9[%c0_144, %c128_145] : memref<64x256xf32, #tpu.memory_space<vmem>>, vector<64x33xf32>
    %c0_146 = arith.constant 0 : index
    %c1152 = arith.constant 1152 : index
    %344 = vector.load %arg12[%c0_146, %c1152] : memref<1x1280xf32, #tpu.memory_space<vmem>>, vector<1x33xf32>
    %cst_147 = arith.constant dense<0.000000e+00> : vector<24x33xf32>
    %345 = tpu.matmul %342, %343, %cst_147 {dimension_numbers = #tpu.dot_dimension_numbers<[1], [0], [0], [1], [0, 0, 1, 1], [], []>} : vector<24x64xf32>, vector<64x33xf32>, vector<24x33xf32> -> vector<24x33xf32>
    %346 = vector.broadcast %344 : vector<1x33xf32> to vector<24x33xf32>
    %347 = arith.addf %345, %346 : vector<24x33xf32>
    %348 = vector.extract_strided_slice %347 {offsets = [0, 0], sizes = [24, 32], strides = [1, 1]} : vector<24x33xf32> to vector<24x32xf32>
    %349 = vector.extract_strided_slice %347 {offsets = [0, 32], sizes = [24, 1], strides = [1, 1]} : vector<24x33xf32> to vector<24x1xf32>
    %c0_148 = arith.constant 0 : index
    %c0_149 = arith.constant 0 : index
    %350 = vector.load %arg15[%c0_148, %c0_149] : memref<24x1xf32, #tpu.memory_space<vmem>>, vector<24x1xf32>
    tpu.vector_store %arg15[%c0_148, %c0_149], %349 {strides = array<i32>} : memref<24x1xf32, #tpu.memory_space<vmem>>, vector<24x1xf32>,
    %351 = tpu.concatenate %348, %348 in 1 : vector<24x32xf32>, vector<24x32xf32> -> vector<24x64xf32>
    %c0_150 = arith.constant 0 : index
    %c0_151 = arith.constant 0 : index
    %352 = vector.load %arg8[%c0_150, %c0_151] : memref<24x64xf32, #tpu.memory_space<vmem>>, vector<24x64xf32>
    %353 = arith.mulf %351, %352 : vector<24x64xf32>
    %c0_152 = arith.constant 0 : index
    %c0_153 = arith.constant 0 : index
    %354 = vector.load %arg3[%c0_152, %c0_153] : memref<64x256xf32, #tpu.memory_space<vmem>>, vector<64x256xf32>
    %cst_154 = arith.constant dense<0.000000e+00> : vector<24x256xf32>
    %355 = tpu.matmul %353, %354, %cst_154 {dimension_numbers = #tpu.dot_dimension_numbers<[1], [0], [0], [1], [0, 0, 1, 1], [], []>} : vector<24x64xf32>, vector<64x256xf32>, vector<24x256xf32> -> vector<24x256xf32>
    %c0_155 = arith.constant 0 : index
    %c0_156 = arith.constant 0 : index
    %356 = vector.load %arg16[%c0_155, %c0_156] : memref<24x256xf32, #tpu.memory_space<vmem>>, vector<24x256xf32>
    tpu.vector_store %arg16[%c0_155, %c0_156], %355 {strides = array<i32>} : memref<24x256xf32, #tpu.memory_space<vmem>>, vector<24x256xf32>,
    return
  }
  func.func @transform_0(%arg0: i32) -> (i32, i32) {
    %c0_i32 = arith.constant 0 : i32
    %c0_i32_0 = arith.constant 0 : i32
    %c0_i32_1 = arith.constant 0 : i32
    return %c0_i32, %c0_i32_0 : i32, i32
  }
  func.func @transform_1(%arg0: i32) -> (i32, i32) {
    %c0_i32 = arith.constant 0 : i32
    %c0_i32_0 = arith.constant 0 : i32
    %c0_i32_1 = arith.constant 0 : i32
    return %c0_i32, %c0_i32_0 : i32, i32
  }
  func.func @transform_2(%arg0: i32) -> (i32, i32) {
    %c0_i32 = arith.constant 0 : i32
    %c0_i32_0 = arith.constant 0 : i32
    %c0_i32_1 = arith.constant 0 : i32
    return %c0_i32, %c0_i32_0 : i32, i32
  }
  func.func @transform_3(%arg0: i32) -> (i32, i32) {
    %c0_i32 = arith.constant 0 : i32
    %c0_i32_0 = arith.constant 0 : i32
    %c0_i32_1 = arith.constant 0 : i32
    return %c0_i32, %c0_i32_0 : i32, i32
  }
  func.func @transform_4(%arg0: i32) -> (i32, i32) {
    %c0_i32 = arith.constant 0 : i32
    %c0_i32_0 = arith.constant 0 : i32
    %c0_i32_1 = arith.constant 0 : i32
    return %c0_i32, %c0_i32_0 : i32, i32
  }
  func.func @transform_5(%arg0: i32) -> (i32, i32) {
    %c0_i32 = arith.constant 0 : i32
    %c0_i32_0 = arith.constant 0 : i32
    %c0_i32_1 = arith.constant 0 : i32
    return %c0_i32, %c0_i32_0 : i32, i32
  }
  func.func @transform_6(%arg0: i32) -> (i32, i32) {
    %c0_i32 = arith.constant 0 : i32
    %c0_i32_0 = arith.constant 0 : i32
    %c0_i32_1 = arith.constant 0 : i32
    return %c0_i32, %c0_i32_0 : i32, i32
  }
  func.func @transform_7(%arg0: i32) -> (i32, i32) {
    %c0_i32 = arith.constant 0 : i32
    %c0_i32_0 = arith.constant 0 : i32
    %c0_i32_1 = arith.constant 0 : i32
    return %c0_i32, %c0_i32_0 : i32, i32
  }
  func.func @transform_8(%arg0: i32) -> (i32, i32) {
    %c0_i32 = arith.constant 0 : i32
    %c0_i32_0 = arith.constant 0 : i32
    %c0_i32_1 = arith.constant 0 : i32
    return %c0_i32, %c0_i32_0 : i32, i32
  }
  func.func @transform_9(%arg0: i32) -> (i32, i32) {
    %c0_i32 = arith.constant 0 : i32
    %c0_i32_0 = arith.constant 0 : i32
    %c0_i32_1 = arith.constant 0 : i32
    return %c0_i32, %c0_i32_0 : i32, i32
  }
  func.func @transform_10(%arg0: i32) -> (i32, i32) {
    %c0_i32 = arith.constant 0 : i32
    %c0_i32_0 = arith.constant 0 : i32
    %c0_i32_1 = arith.constant 0 : i32
    return %c0_i32, %c0_i32_0 : i32, i32
  }
  func.func @transform_11(%arg0: i32) -> (i32, i32) {
    %c0_i32 = arith.constant 0 : i32
    %c0_i32_0 = arith.constant 0 : i32
    %c0_i32_1 = arith.constant 0 : i32
    return %c0_i32, %c0_i32_0 : i32, i32
  }
  func.func @transform_12(%arg0: i32) -> (i32, i32) {
    %c0_i32 = arith.constant 0 : i32
    %c0_i32_0 = arith.constant 0 : i32
    %c0_i32_1 = arith.constant 0 : i32
    return %c0_i32, %c0_i32_0 : i32, i32
  }
  func.func @transform_13(%arg0: i32) -> (i32, i32) {
    %c0_i32 = arith.constant 0 : i32
    %c0_i32_0 = arith.constant 0 : i32
    %c0_i32_1 = arith.constant 0 : i32
    return %c0_i32, %c0_i32_0 : i32, i32
  }
  func.func @transform_14(%arg0: i32) -> (i32, i32) {
    %c0_i32 = arith.constant 0 : i32
    %c0_i32_0 = arith.constant 0 : i32
    %c0_i32_1 = arith.constant 0 : i32
    return %c0_i32, %c0_i32_0 : i32, i32
  }
  func.func @transform_15(%arg0: i32) -> (i32, i32) {
    %c0_i32 = arith.constant 0 : i32
    %c0_i32_0 = arith.constant 0 : i32
    %c0_i32_1 = arith.constant 0 : i32
    return %c0_i32, %c0_i32_0 : i32, i32
  }
  func.func @transform_16(%arg0: i32) -> (i32, i32) {
    %c0_i32 = arith.constant 0 : i32
    %c0_i32_0 = arith.constant 0 : i32
    %c0_i32_1 = arith.constant 0 : i32
    return %c0_i32, %c0_i32_0 : i32, i32
  }
}

</mosaic_0001>

<llo_original>
// kernel: cross_atten_head_forward.1
$region0: #{cross_atten_head_forward.1}
  #allocation0 [shape = 'u32[]', space=smem, size = 0x4, offset = 0x4, fixed_abs, tag = 'smem constant byte address 0x4 - core index']
  #allocation1 [shape = 'u32[144,128]{1,0:T(1,128)}', space=vmem, size = 0x12000, scoped, tag = 'internal scratch']
  %s0 = inlined_call_operand.vmem [shape: f32[24,512], index: 0, kind: input, shape index: {}]
  %s1 = inlined_call_operand.vmem [shape: f32[512,32], index: 1, kind: input, shape index: {}]
  %s2 = inlined_call_operand.vmem [shape: f32[64,256], index: 2, kind: input, shape index: {}]
  %s3 = inlined_call_operand.vmem [shape: f32[24,32], index: 3, kind: input, shape index: {}]
  %s4 = inlined_call_operand.vmem [shape: f32[192,32], index: 4, kind: input, shape index: {}]
  %s5 = inlined_call_operand.vmem [shape: f32[96,24], index: 5, kind: input, shape index: {}]
  %s6 = inlined_call_operand.vmem [shape: f32[24,96], index: 6, kind: input, shape index: {}]
  %s7 = inlined_call_operand.vmem [shape: f32[24,64], index: 7, kind: input, shape index: {}]
  %s8 = inlined_call_operand.vmem [shape: f32[64,256], index: 8, kind: input, shape index: {}]
  %s9 = inlined_call_operand.vmem [shape: f32[32,896], index: 9, kind: input, shape index: {}]
  %s10 = inlined_call_operand.vmem [shape: f32[128,32], index: 10, kind: input, shape index: {}]
  %s11 = inlined_call_operand.vmem [shape: f32[1,1280], index: 11, kind: input, shape index: {}]
  %s12 = inlined_call_operand.vmem [shape: f32[8,32], index: 12, kind: input, shape index: {}]
  %s13 = inlined_call_operand.vmem [shape: f32[8,32], index: 13, kind: input, shape index: {}]
  %s14 = inlined_call_operand.vmem [shape: f32[24,1], index: 14, kind: output, shape index: {0}]
  %s15 = inlined_call_operand.vmem [shape: f32[24,256], index: 15, kind: output, shape index: {1}]
  %s16 = inlined_call_operand.vmem [shape: f32[24,32], index: 16, kind: output, shape index: {2}]
  %17 = xla_tuple %s14, %s15, %s16
  %s18 = sld [smem:[#allocation0]]
  $region82: #{cross_atten_head_forward.1} parent=0
    _
  %s20 = ssub.s32 1, %s18
  %s21 = scalar_select 0, %s20, %s18
  // Predicated region
  $region2: #{cross_atten_head_forward.1} parent=0 // pred_check
    _
  $region3: #{cross_atten_head_forward.1} parent=0 // pred_check_branch
    %23 = sbr.rel (0) target = $region5
  $region4: #{cross_atten_head_forward.1} parent=0 // pred_region
    _
  $region5: #{cross_atten_head_forward.1} parent=0 // pred_fallthru
    _
  // Predicated region
  $region6: #{cross_atten_head_forward.1} parent=0 // pred_check
    _
  $region7: #{cross_atten_head_forward.1} parent=0 // pred_check_branch
    %25 = sbr.rel (0) target = $region9
  $region8: #{cross_atten_head_forward.1} parent=0 // pred_region
    _
  $region9: #{cross_atten_head_forward.1} parent=0 // pred_fallthru
    _
  // Predicated region
  $region10: #{cross_atten_head_forward.1} parent=0 // pred_check
    _
  $region11: #{cross_atten_head_forward.1} parent=0 // pred_check_branch
    %27 = sbr.rel (0) target = $region13
  $region12: #{cross_atten_head_forward.1} parent=0 // pred_region
    _
  $region13: #{cross_atten_head_forward.1} parent=0 // pred_fallthru
    _
  // Predicated region
  $region14: #{cross_atten_head_forward.1} parent=0 // pred_check
    _
  $region15: #{cross_atten_head_forward.1} parent=0 // pred_check_branch
    %29 = sbr.rel (0) target = $region17
  $region16: #{cross_atten_head_forward.1} parent=0 // pred_region
    _
  $region17: #{cross_atten_head_forward.1} parent=0 // pred_fallthru
    _
  // Predicated region
  $region18: #{cross_atten_head_forward.1} parent=0 // pred_check
    _
  $region19: #{cross_atten_head_forward.1} parent=0 // pred_check_branch
    %31 = sbr.rel (0) target = $region21
  $region20: #{cross_atten_head_forward.1} parent=0 // pred_region
    _
  $region21: #{cross_atten_head_forward.1} parent=0 // pred_fallthru
    _
  // Predicated region
  $region22: #{cross_atten_head_forward.1} parent=0 // pred_check
    _
  $region23: #{cross_atten_head_forward.1} parent=0 // pred_check_branch
    %33 = sbr.rel (0) target = $region25
  $region24: #{cross_atten_head_forward.1} parent=0 // pred_region
    _
  $region25: #{cross_atten_head_forward.1} parent=0 // pred_fallthru
    _
  // Predicated region
  $region26: #{cross_atten_head_forward.1} parent=0 // pred_check
    _
  $region27: #{cross_atten_head_forward.1} parent=0 // pred_check_branch
    %35 = sbr.rel (0) target = $region29
  $region28: #{cross_atten_head_forward.1} parent=0 // pred_region
    _
  $region29: #{cross_atten_head_forward.1} parent=0 // pred_fallthru
    _
  // Predicated region
  $region30: #{cross_atten_head_forward.1} parent=0 // pred_check
    _
  $region31: #{cross_atten_head_forward.1} parent=0 // pred_check_branch
    %37 = sbr.rel (0) target = $region33
  $region32: #{cross_atten_head_forward.1} parent=0 // pred_region
    _
  $region33: #{cross_atten_head_forward.1} parent=0 // pred_fallthru
    _
  // Predicated region
  $region34: #{cross_atten_head_forward.1} parent=0 // pred_check
    _
  $region35: #{cross_atten_head_forward.1} parent=0 // pred_check_branch
    %39 = sbr.rel (0) target = $region37
  $region36: #{cross_atten_head_forward.1} parent=0 // pred_region
    _
  $region37: #{cross_atten_head_forward.1} parent=0 // pred_fallthru
    _
  // Predicated region
  $region38: #{cross_atten_head_forward.1} parent=0 // pred_check
    _
  $region39: #{cross_atten_head_forward.1} parent=0 // pred_check_branch
    %41 = sbr.rel (0) target = $region41
  $region40: #{cross_atten_head_forward.1} parent=0 // pred_region
    _
  $region41: #{cross_atten_head_forward.1} parent=0 // pred_fallthru
    _
  // Predicated region
  $region42: #{cross_atten_head_forward.1} parent=0 // pred_check
    _
  $region43: #{cross_atten_head_forward.1} parent=0 // pred_check_branch
    %43 = sbr.rel (0) target = $region45
  $region44: #{cross_atten_head_forward.1} parent=0 // pred_region
    _
  $region45: #{cross_atten_head_forward.1} parent=0 // pred_fallthru
    _
  // Predicated region
  $region46: #{cross_atten_head_forward.1} parent=0 // pred_check
    _
  $region47: #{cross_atten_head_forward.1} parent=0 // pred_check_branch
    %45 = sbr.rel (0) target = $region49
  $region48: #{cross_atten_head_forward.1} parent=0 // pred_region
    _
  $region49: #{cross_atten_head_forward.1} parent=0 // pred_fallthru
    _
  // Predicated region
  $region50: #{cross_atten_head_forward.1} parent=0 // pred_check
    _
  $region51: #{cross_atten_head_forward.1} parent=0 // pred_check_branch
    %47 = sbr.rel (0) target = $region53
  $region52: #{cross_atten_head_forward.1} parent=0 // pred_region
    _
  $region53: #{cross_atten_head_forward.1} parent=0 // pred_fallthru
    _
  // Predicated region
  $region54: #{cross_atten_head_forward.1} parent=0 // pred_check
    _
  $region55: #{cross_atten_head_forward.1} parent=0 // pred_check_branch
    %49 = sbr.rel (0) target = $region57
  $region56: #{cross_atten_head_forward.1} parent=0 // pred_region
    _
  $region57: #{cross_atten_head_forward.1} parent=0 // pred_fallthru
    _
  %v50 = vld [vmem:[%s0] sm:$0xff]
  %v51 = vld [vmem:[%s0 + $0x8] sm:$0xff]
  %v52 = vld [vmem:[%s0 + $0x10] sm:$0xff]
  %v53 = vld [vmem:[%s0 + $0x18] sm:$0xff]
  %v54 = vld [vmem:[%s0 + $0x20] sm:$0xff]
  %v55 = vld [vmem:[%s0 + $0x28] sm:$0xff]
  %v56 = vld [vmem:[%s0 + $0x30] sm:$0xff]
  %v57 = vld [vmem:[%s0 + $0x38] sm:$0xff]
  %v58 = vld [vmem:[%s0 + $0x40] sm:$0xff]
  %v59 = vld [vmem:[%s0 + $0x48] sm:$0xff]
  %v60 = vld [vmem:[%s0 + $0x50] sm:$0xff]
  %v61 = vld [vmem:[%s0 + $0x58] sm:$0xff]
  %vm62 = vcmp.gt.f32.partialorder %v50, 0.0
  %vm63 = vcmp.gt.f32.partialorder %v51, 0.0
  %vm64 = vcmp.gt.f32.partialorder %v52, 0.0
  %vm65 = vcmp.gt.f32.partialorder %v53, 0.0
  %vm66 = vcmp.gt.f32.partialorder %v54, 0.0
  %vm67 = vcmp.gt.f32.partialorder %v55, 0.0
  %vm68 = vcmp.gt.f32.partialorder %v56, 0.0
  %vm69 = vcmp.gt.f32.partialorder %v57, 0.0
  %vm70 = vcmp.gt.f32.partialorder %v58, 0.0
  %vm71 = vcmp.gt.f32.partialorder %v59, 0.0
  %vm72 = vcmp.gt.f32.partialorder %v60, 0.0
  %vm73 = vcmp.gt.f32.partialorder %v61, 0.0
  %v74 = vsel %vm62, 1, 0
  %v75 = vsel %vm63, 1, 0
  %v76 = vsel %vm64, 1, 0
  %v77 = vsel %vm65, 1, 0
  %v78 = vsel %vm66, 1, 0
  %v79 = vsel %vm67, 1, 0
  %v80 = vsel %vm68, 1, 0
  %v81 = vsel %vm69, 1, 0
  %v82 = vsel %vm70, 1, 0
  %v83 = vsel %vm71, 1, 0
  %v84 = vsel %vm72, 1, 0
  %v85 = vsel %vm73, 1, 0
  %v86 = vcvt.s32.f32 %v74
  %v87 = vcvt.s32.f32 %v75
  %v88 = vcvt.s32.f32 %v76
  %v89 = vcvt.s32.f32 %v77
  %v90 = vcvt.s32.f32 %v78
  %v91 = vcvt.s32.f32 %v79
  %v92 = vcvt.s32.f32 %v80
  %v93 = vcvt.s32.f32 %v81
  %v94 = vcvt.s32.f32 %v82
  %v95 = vcvt.s32.f32 %v83
  %v96 = vcvt.s32.f32 %v84
  %v97 = vcvt.s32.f32 %v85
  %v98 = vld [vmem:[%s1] sm:$0xff]
  %v99 = vld [vmem:[%s1 + $0x8] sm:$0xff]
  %v100 = vld [vmem:[%s1 + $0x10] sm:$0xff]
  %v101 = vld [vmem:[%s1 + $0x18] sm:$0xff]
  %v102 = vld [vmem:[%s1 + $0x20] sm:$0xff]
  %v103 = vld [vmem:[%s1 + $0x28] sm:$0xff]
  %v104 = vld [vmem:[%s1 + $0x30] sm:$0xff]
  %v105 = vld [vmem:[%s1 + $0x38] sm:$0xff]
  %v106 = vld [vmem:[%s1 + $0x40] sm:$0xff]
  %v107 = vld [vmem:[%s1 + $0x48] sm:$0xff]
  %v108 = vld [vmem:[%s1 + $0x50] sm:$0xff]
  %v109 = vld [vmem:[%s1 + $0x58] sm:$0xff]
  %v110 = vld [vmem:[%s1 + $0x60] sm:$0xff]
  %v111 = vld [vmem:[%s1 + $0x68] sm:$0xff]
  %v112 = vld [vmem:[%s1 + $0x70] sm:$0xff]
  %v113 = vld [vmem:[%s1 + $0x78] sm:$0xff]
  %v114 = vld [vmem:[%s1 + $0x80] sm:$0xff]
  %v115 = vld [vmem:[%s1 + $0x88] sm:$0xff]
  %v116 = vld [vmem:[%s1 + $0x90] sm:$0xff]
  %v117 = vld [vmem:[%s1 + $0x98] sm:$0xff]
  %v118 = vld [vmem:[%s1 + $0xa0] sm:$0xff]
  %v119 = vld [vmem:[%s1 + $0xa8] sm:$0xff]
  %v120 = vld [vmem:[%s1 + $0xb0] sm:$0xff]
  %v121 = vld [vmem:[%s1 + $0xb8] sm:$0xff]
  %v122 = vld [vmem:[%s1 + $0xc0] sm:$0xff]
  %v123 = vld [vmem:[%s1 + $0xc8] sm:$0xff]
  %v124 = vld [vmem:[%s1 + $0xd0] sm:$0xff]
  %v125 = vld [vmem:[%s1 + $0xd8] sm:$0xff]
  %v126 = vld [vmem:[%s1 + $0xe0] sm:$0xff]
  %v127 = vld [vmem:[%s1 + $0xe8] sm:$0xff]
  %v128 = vld [vmem:[%s1 + $0xf0] sm:$0xff]
  %v129 = vld [vmem:[%s1 + $0xf8] sm:$0xff]
  %v130 = vld [vmem:[%s1 + $0x100] sm:$0xff]
  %v131 = vld [vmem:[%s1 + $0x108] sm:$0xff]
  %v132 = vld [vmem:[%s1 + $0x110] sm:$0xff]
  %v133 = vld [vmem:[%s1 + $0x118] sm:$0xff]
  %v134 = vld [vmem:[%s1 + $0x120] sm:$0xff]
  %v135 = vld [vmem:[%s1 + $0x128] sm:$0xff]
  %v136 = vld [vmem:[%s1 + $0x130] sm:$0xff]
  %v137 = vld [vmem:[%s1 + $0x138] sm:$0xff]
  %v138 = vld [vmem:[%s1 + $0x140] sm:$0xff]
  %v139 = vld [vmem:[%s1 + $0x148] sm:$0xff]
  %v140 = vld [vmem:[%s1 + $0x150] sm:$0xff]
  %v141 = vld [vmem:[%s1 + $0x158] sm:$0xff]
  %v142 = vld [vmem:[%s1 + $0x160] sm:$0xff]
  %v143 = vld [vmem:[%s1 + $0x168] sm:$0xff]
  %v144 = vld [vmem:[%s1 + $0x170] sm:$0xff]
  %v145 = vld [vmem:[%s1 + $0x178] sm:$0xff]
  %v146 = vld [vmem:[%s1 + $0x180] sm:$0xff]
  %v147 = vld [vmem:[%s1 + $0x188] sm:$0xff]
  %v148 = vld [vmem:[%s1 + $0x190] sm:$0xff]
  %v149 = vld [vmem:[%s1 + $0x198] sm:$0xff]
  %v150 = vld [vmem:[%s1 + $0x1a0] sm:$0xff]
  %v151 = vld [vmem:[%s1 + $0x1a8] sm:$0xff]
  %v152 = vld [vmem:[%s1 + $0x1b0] sm:$0xff]
  %v153 = vld [vmem:[%s1 + $0x1b8] sm:$0xff]
  %v154 = vld [vmem:[%s1 + $0x1c0] sm:$0xff]
  %v155 = vld [vmem:[%s1 + $0x1c8] sm:$0xff]
  %v156 = vld [vmem:[%s1 + $0x1d0] sm:$0xff]
  %v157 = vld [vmem:[%s1 + $0x1d8] sm:$0xff]
  %v158 = vld [vmem:[%s1 + $0x1e0] sm:$0xff]
  %v159 = vld [vmem:[%s1 + $0x1e8] sm:$0xff]
  %v160 = vld [vmem:[%s1 + $0x1f0] sm:$0xff]
  %v161 = vld [vmem:[%s1 + $0x1f8] sm:$0xff]
  %162 = vmatprep.subr.mxu0 0.0
  %163 = vmatpush1.msra.mxu0 %v98
  %164 = vmatprep.subr.mxu0 0.0
  %165 = vmatpush1.msra.mxu0 %v99
  %166 = vmatprep.subr.mxu0 0.0
  %167 = vmatpush1.msra.mxu0 %v100
  %168 = vmatprep.subr.mxu0 0.0
  %169 = vmatpush1.msra.mxu0 %v101
  %170 = vmatprep.subr.mxu0 0.0
  %171 = vmatpush1.msra.mxu0 %v102
  %172 = vmatprep.subr.mxu0 0.0
  %173 = vmatpush1.msra.mxu0 %v103
  %174 = vmatprep.subr.mxu0 0.0
  %175 = vmatpush1.msra.mxu0 %v104
  %176 = vmatprep.subr.mxu0 0.0
  %177 = vmatpush1.msra.mxu0 %v105
  %178 = vmatprep.subr.mxu0 0.0
  %179 = vmatpush1.msra.mxu0 %v106
  %180 = vmatprep.subr.mxu0 0.0
  %181 = vmatpush1.msra.mxu0 %v107
  %182 = vmatprep.subr.mxu0 0.0
  %183 = vmatpush1.msra.mxu0 %v108
  %184 = vmatprep.subr.mxu0 0.0
  %185 = vmatpush1.msra.mxu0 %v109
  %186 = vmatprep.subr.mxu0 0.0
  %187 = vmatpush1.msra.mxu0 %v110
  %188 = vmatprep.subr.mxu0 0.0
  %189 = vmatpush1.msra.mxu0 %v111
  %190 = vmatprep.subr.mxu0 0.0
  %191 = vmatpush1.msra.mxu0 %v112
  %192 = vmatprep.subr.mxu0 0.0
  %193 = vmatpush1.msra.mxu0 %v113
  %194 = vmatprep.subr.mxu0 0.0
  %195 = vmatpush1.msra.mxu0 %v114
  %196 = vmatprep.subr.mxu0 0.0
  %197 = vmatpush1.msra.mxu0 %v115
  %198 = vmatprep.subr.mxu0 0.0
  %199 = vmatpush1.msra.mxu0 %v116
  %200 = vmatprep.subr.mxu0 0.0
  %201 = vmatpush1.msra.mxu0 %v117
  %202 = vmatprep.subr.mxu0 0.0
  %203 = vmatpush1.msra.mxu0 %v118
  %204 = vmatprep.subr.mxu0 0.0
  %205 = vmatpush1.msra.mxu0 %v119
  %206 = vmatprep.subr.mxu0 0.0
  %207 = vmatpush1.msra.mxu0 %v120
  %208 = vmatprep.subr.mxu0 0.0
  %209 = vmatpush1.msra.mxu0 %v121
  %210 = vmatprep.subr.mxu0 0.0
  %211 = vmatpush1.msra.mxu0 %v122
  %212 = vmatprep.subr.mxu0 0.0
  %213 = vmatpush1.msra.mxu0 %v123
  %214 = vmatprep.subr.mxu0 0.0
  %215 = vmatpush1.msra.mxu0 %v124
  %216 = vmatprep.subr.mxu0 0.0
  %217 = vmatpush1.msra.mxu0 %v125
  %218 = vmatprep.subr.mxu0 0.0
  %219 = vmatpush1.msra.mxu0 %v126
  %220 = vmatprep.subr.mxu0 0.0
  %221 = vmatpush1.msra.mxu0 %v127
  %222 = vmatprep.subr.mxu0 0.0
  %223 = vmatpush1.msra.mxu0 %v128
  %224 = vmatprep.subr.mxu0 0.0
  %225 = vmatpush1.msra.mxu0 %v129
  %226 = vmatprep.mubr.f32.mxu0 %v87
  %227 = vmatmul.mubr.f32.gmra.mrb[0].mxu0 %v86
  %v228 = vpop.f32.mrb[0].mxu0
  %v229 = vadd.f32 0.0, %v228
  %v230 = vpop.f32.mrb[0].mxu0
  %231 = vmatprep.mubr.f32.mxu0 %v91
  %232 = vmatmul.mubr.f32.gmra.mrb[0].mxu0 %v90
  %v233 = vpop.f32.mrb[0].mxu0
  %v234 = vadd.f32 0.0, %v233
  %v235 = vpop.f32.mrb[0].mxu0
  %236 = vmatprep.mubr.f32.mxu0 %v95
  %237 = vmatmul.mubr.f32.gmra.mrb[0].mxu0 %v94
  %v238 = vpop.f32.mrb[0].mxu0
  %v239 = vadd.f32 0.0, %v238
  %v240 = vpop.f32.mrb[0].mxu0
  %241 = vdwg.mxu0
  %242 = vmatprep.subr.mxu0 0.0
  %243 = vmatpush1.msra.mxu0 %v130
  %244 = vmatprep.subr.mxu0 0.0
  %245 = vmatpush1.msra.mxu0 %v131
  %246 = vmatprep.subr.mxu0 0.0
  %247 = vmatpush1.msra.mxu0 %v132
  %248 = vmatprep.subr.mxu0 0.0
  %249 = vmatpush1.msra.mxu0 %v133
  %250 = vmatprep.subr.mxu0 0.0
  %251 = vmatpush1.msra.mxu0 %v134
  %252 = vmatprep.subr.mxu0 0.0
  %253 = vmatpush1.msra.mxu0 %v135
  %254 = vmatprep.subr.mxu0 0.0
  %255 = vmatpush1.msra.mxu0 %v136
  %256 = vmatprep.subr.mxu0 0.0
  %257 = vmatpush1.msra.mxu0 %v137
  %258 = vmatprep.subr.mxu0 0.0
  %259 = vmatpush1.msra.mxu0 %v138
  %260 = vmatprep.subr.mxu0 0.0
  %261 = vmatpush1.msra.mxu0 %v139
  %262 = vmatprep.subr.mxu0 0.0
  %263 = vmatpush1.msra.mxu0 %v140
  %264 = vmatprep.subr.mxu0 0.0
  %265 = vmatpush1.msra.mxu0 %v141
  %266 = vmatprep.subr.mxu0 0.0
  %267 = vmatpush1.msra.mxu0 %v142
  %268 = vmatprep.subr.mxu0 0.0
  %269 = vmatpush1.msra.mxu0 %v143
  %270 = vmatprep.subr.mxu0 0.0
  %271 = vmatpush1.msra.mxu0 %v144
  %272 = vmatprep.subr.mxu0 0.0
  %273 = vmatpush1.msra.mxu0 %v145
  %274 = vmatprep.subr.mxu0 0.0
  %275 = vmatpush1.msra.mxu0 %v146
  %276 = vmatprep.subr.mxu0 0.0
  %277 = vmatpush1.msra.mxu0 %v147
  %278 = vmatprep.subr.mxu0 0.0
  %279 = vmatpush1.msra.mxu0 %v148
  %280 = vmatprep.subr.mxu0 0.0
  %281 = vmatpush1.msra.mxu0 %v149
  %282 = vmatprep.subr.mxu0 0.0
  %283 = vmatpush1.msra.mxu0 %v150
  %284 = vmatprep.subr.mxu0 0.0
  %285 = vmatpush1.msra.mxu0 %v151
  %286 = vmatprep.subr.mxu0 0.0
  %287 = vmatpush1.msra.mxu0 %v152
  %288 = vmatprep.subr.mxu0 0.0
  %289 = vmatpush1.msra.mxu0 %v153
  %290 = vmatprep.subr.mxu0 0.0
  %291 = vmatpush1.msra.mxu0 %v154
  %292 = vmatprep.subr.mxu0 0.0
  %293 = vmatpush1.msra.mxu0 %v155
  %294 = vmatprep.subr.mxu0 0.0
  %295 = vmatpush1.msra.mxu0 %v156
  %296 = vmatprep.subr.mxu0 0.0
  %297 = vmatpush1.msra.mxu0 %v157
  %298 = vmatprep.subr.mxu0 0.0
  %299 = vmatpush1.msra.mxu0 %v158
  %300 = vmatprep.subr.mxu0 0.0
  %301 = vmatpush1.msra.mxu0 %v159
  %302 = vmatprep.subr.mxu0 0.0
  %303 = vmatpush1.msra.mxu0 %v160
  %304 = vmatprep.subr.mxu0 0.0
  %305 = vmatpush1.msra.mxu0 %v161
  %306 = vmatprep.mubr.f32.mxu0 %v89
  %307 = vmatmul.mubr.f32.gmra.mrb[0].mxu0 %v88
  %v308 = vpop.f32.mrb[0].mxu0
  %v309 = vadd.f32 %v229, %v308
  %v310 = vpop.f32.mrb[0].mxu0
  %311 = vmatprep.mubr.f32.mxu0 %v93
  %312 = vmatmul.mubr.f32.gmra.mrb[0].mxu0 %v92
  %v313 = vpop.f32.mrb[0].mxu0
  %v314 = vadd.f32 %v234, %v313
  %v315 = vpop.f32.mrb[0].mxu0
  %316 = vmatprep.mubr.f32.mxu0 %v97
  %317 = vmatmul.mubr.f32.gmra.mrb[0].mxu0 %v96
  %v318 = vpop.f32.mrb[0].mxu0
  %v319 = vadd.f32 %v239, %v318
  %v320 = vpop.f32.mrb[0].mxu0
  %321 = vdwg.mxu0
  %v322 = vld [vmem:[%s3] sm:$0xff]
  %v323 = vld [vmem:[%s3 + $0x8] sm:$0xff]
  %v324 = vld [vmem:[%s3 + $0x10] sm:$0xff]
  %328 = vrot.lane.b32.xlu0 %v322, 32
  %v329 = vpop.permute.xlu0 %328
  %330 = vrot.lane.b32.xlu0 %v323, 32
  %v331 = vpop.permute.xlu0 %330
  %332 = vrot.lane.b32.xlu0 %v324, 32
  %v333 = vpop.permute.xlu0 %332
  %vm337 = vcmask 261120
  %v338 = vsel %vm337, %v309, %v329
  %v339 = vsel %vm337, %v314, %v331
  %v340 = vsel %vm337, %v319, %v333
  %v341 = vld [vmem:[%s8] sm:$0xff]
  %v342 = vld [vmem:[%s8 + $0x10] sm:$0xff]
  %v343 = vld [vmem:[%s8 + $0x20] sm:$0xff]
  %v344 = vld [vmem:[%s8 + $0x30] sm:$0xff]
  %v345 = vld [vmem:[%s8 + $0x40] sm:$0xff]
  %v346 = vld [vmem:[%s8 + $0x50] sm:$0xff]
  %v347 = vld [vmem:[%s8 + $0x60] sm:$0xff]
  %v348 = vld [vmem:[%s8 + $0x70] sm:$0xff]
  %v349 = vld [vmem:[%s11] sm:$0x1]
  %v351 = vlaneseq
  %v352 = vshrl.u32 %v351, 7
  %v353 = vsub.s32 0, %v352
  %v354 = vrot.slane %v349, %v353
  %vm356 = vcmask 523264
  %v358 = vsel %vm356, %v338, 0
  %v361 = vsel %vm356, %v339, 0
  %v364 = vsel %vm356, %v340, 0
  %366 = vmatprep.subr.mxu0 0.0
  %367 = vmatpush1.msra.mxu0 %v341
  %368 = vmatprep.subr.mxu0 0.0
  %369 = vmatpush1.msra.mxu0 %v342
  %370 = vmatprep.subr.mxu0 0.0
  %371 = vmatpush1.msra.mxu0 %v343
  %372 = vmatprep.subr.mxu0 0.0
  %373 = vmatpush1.msra.mxu0 %v344
  %374 = vmatprep.subr.mxu0 0.0
  %375 = vmatpush1.msra.mxu0 %v345
  %376 = vmatprep.subr.mxu0 0.0
  %377 = vmatpush1.msra.mxu0 %v346
  %378 = vmatprep.subr.mxu0 0.0
  %379 = vmatpush1.msra.mxu0 %v347
  %380 = vmatprep.subr.mxu0 0.0
  %381 = vmatpush1.msra.mxu0 %v348
  %382 = vmatprep.subr.mxu0 0.0
  %383 = vmatpush1.msra.mxu0 0.0
  %384 = vmatprep.subr.mxu0 0.0
  %385 = vmatpush1.msra.mxu0 0.0
  %386 = vmatprep.subr.mxu0 0.0
  %387 = vmatpush1.msra.mxu0 0.0
  %388 = vmatprep.subr.mxu0 0.0
  %389 = vmatpush1.msra.mxu0 0.0
  %390 = vmatprep.subr.mxu0 0.0
  %391 = vmatpush1.msra.mxu0 0.0
  %392 = vmatprep.subr.mxu0 0.0
  %393 = vmatpush1.msra.mxu0 0.0
  %394 = vmatprep.subr.mxu0 0.0
  %395 = vmatpush1.msra.mxu0 0.0
  %396 = vmatprep.subr.mxu0 0.0
  %397 = vmatpush1.msra.mxu0 0.0
  %398 = vmatprep.subr.mxu0 0.0
  %399 = vmatpush1.msra.mxu0 0.0
  %400 = vmatprep.subr.mxu0 0.0
  %401 = vmatpush1.msra.mxu0 0.0
  %402 = vmatprep.subr.mxu0 0.0
  %403 = vmatpush1.msra.mxu0 0.0
  %404 = vmatprep.subr.mxu0 0.0
  %405 = vmatpush1.msra.mxu0 0.0
  %406 = vmatprep.subr.mxu0 0.0
  %407 = vmatpush1.msra.mxu0 0.0
  %408 = vmatprep.subr.mxu0 0.0
  %409 = vmatpush1.msra.mxu0 0.0
  %410 = vmatprep.subr.mxu0 0.0
  %411 = vmatpush1.msra.mxu0 0.0
  %412 = vmatprep.subr.mxu0 0.0
  %413 = vmatpush1.msra.mxu0 0.0
  %414 = vmatprep.subr.mxu0 0.0
  %415 = vmatpush1.msra.mxu0 0.0
  %416 = vmatprep.subr.mxu0 0.0
  %417 = vmatpush1.msra.mxu0 0.0
  %418 = vmatprep.subr.mxu0 0.0
  %419 = vmatpush1.msra.mxu0 0.0
  %420 = vmatprep.subr.mxu0 0.0
  %421 = vmatpush1.msra.mxu0 0.0
  %422 = vmatprep.subr.mxu0 0.0
  %423 = vmatpush1.msra.mxu0 0.0
  %424 = vmatprep.subr.mxu0 0.0
  %425 = vmatpush1.msra.mxu0 0.0
  %426 = vmatprep.subr.mxu0 0.0
  %427 = vmatpush1.msra.mxu0 0.0
  %428 = vmatprep.subr.mxu0 0.0
  %429 = vmatpush1.msra.mxu0 0.0
  %430 = vmatprep.mubr.f32.mxu0 0.0
  %431 = vmatmul.mubr.f32.gmra.mrb[0].mxu0 %v358
  %v432 = vpop.f32.mrb[0].mxu0
  %v433 = vadd.f32 %v354, %v432
  %v434 = vpop.f32.mrb[0].mxu0
  %435 = vmatprep.mubr.f32.mxu0 0.0
  %436 = vmatmul.mubr.f32.gmra.mrb[0].mxu0 %v361
  %v437 = vpop.f32.mrb[0].mxu0
  %v438 = vadd.f32 %v354, %v437
  %v439 = vpop.f32.mrb[0].mxu0
  %440 = vmatprep.mubr.f32.mxu0 0.0
  %441 = vmatmul.mubr.f32.gmra.mrb[0].mxu0 %v364
  %v442 = vpop.f32.mrb[0].mxu0
  %v443 = vadd.f32 %v354, %v442
  %v444 = vpop.f32.mrb[0].mxu0
  %445 = vdwg.mxu0
  %449 = vrot.lane.b32.xlu0 %v433, 64
  %v450 = vpop.permute.xlu0 %449
  %451 = vrot.lane.b32.xlu0 %v438, 64
  %v452 = vpop.permute.xlu0 %451
  %453 = vrot.lane.b32.xlu0 %v443, 64
  %v454 = vpop.permute.xlu0 %453
  %v458 = vmul.f32 %v433, %v450
  %v459 = vmul.f32 %v438, %v452
  %v460 = vmul.f32 %v443, %v454
  %v461 = vld [vmem:[%s9] sm:$0xff]
  %v462 = vld [vmem:[%s9 + $0x38] sm:$0xff]
  %v463 = vld [vmem:[%s9 + $0x70] sm:$0xff]
  %v464 = vld [vmem:[%s9 + $0xa8] sm:$0xff]
  %v465 = vld [vmem:[%s11 + $0x1] sm:$0x1]
  %v467 = vlaneseq
  %v468 = vshrl.u32 %v467, 7
  %v469 = vsub.s32 0, %v468
  %v470 = vrot.slane %v465, %v469
  %475 = vrot.lane.b32.xlu0 %v458, 64
  %v476 = vpop.permute.xlu0 %475
  %477 = vrot.lane.b32.xlu0 %v459, 64
  %v478 = vpop.permute.xlu0 %477
  %479 = vrot.lane.b32.xlu0 %v460, 64
  %v480 = vpop.permute.xlu0 %479
  %v481 = vsel %vm337, %v476, 0
  %v483 = vsel %vm337, %v478, 0
  %v485 = vsel %vm337, %v480, 0
  %487 = vmatprep.subr.mxu0 0.0
  %488 = vmatpush1.msra.mxu0 %v461
  %489 = vmatprep.subr.mxu0 0.0
  %490 = vmatpush1.msra.mxu0 %v462
  %491 = vmatprep.subr.mxu0 0.0
  %492 = vmatpush1.msra.mxu0 %v463
  %493 = vmatprep.subr.mxu0 0.0
  %494 = vmatpush1.msra.mxu0 %v464
  %495 = vmatprep.subr.mxu0 0.0
  %496 = vmatpush1.msra.mxu0 0.0
  %497 = vmatprep.subr.mxu0 0.0
  %498 = vmatpush1.msra.mxu0 0.0
  %499 = vmatprep.subr.mxu0 0.0
  %500 = vmatpush1.msra.mxu0 0.0
  %501 = vmatprep.subr.mxu0 0.0
  %502 = vmatpush1.msra.mxu0 0.0
  %503 = vmatprep.subr.mxu0 0.0
  %504 = vmatpush1.msra.mxu0 0.0
  %505 = vmatprep.subr.mxu0 0.0
  %506 = vmatpush1.msra.mxu0 0.0
  %507 = vmatprep.subr.mxu0 0.0
  %508 = vmatpush1.msra.mxu0 0.0
  %509 = vmatprep.subr.mxu0 0.0
  %510 = vmatpush1.msra.mxu0 0.0
  %511 = vmatprep.subr.mxu0 0.0
  %512 = vmatpush1.msra.mxu0 0.0
  %513 = vmatprep.subr.mxu0 0.0
  %514 = vmatpush1.msra.mxu0 0.0
  %515 = vmatprep.subr.mxu0 0.0
  %516 = vmatpush1.msra.mxu0 0.0
  %517 = vmatprep.subr.mxu0 0.0
  %518 = vmatpush1.msra.mxu0 0.0
  %519 = vmatprep.subr.mxu0 0.0
  %520 = vmatpush1.msra.mxu0 0.0
  %521 = vmatprep.subr.mxu0 0.0
  %522 = vmatpush1.msra.mxu0 0.0
  %523 = vmatprep.subr.mxu0 0.0
  %524 = vmatpush1.msra.mxu0 0.0
  %525 = vmatprep.subr.mxu0 0.0
  %526 = vmatpush1.msra.mxu0 0.0
  %527 = vmatprep.subr.mxu0 0.0
  %528 = vmatpush1.msra.mxu0 0.0
  %529 = vmatprep.subr.mxu0 0.0
  %530 = vmatpush1.msra.mxu0 0.0
  %531 = vmatprep.subr.mxu0 0.0
  %532 = vmatpush1.msra.mxu0 0.0
  %533 = vmatprep.subr.mxu0 0.0
  %534 = vmatpush1.msra.mxu0 0.0
  %535 = vmatprep.subr.mxu0 0.0
  %536 = vmatpush1.msra.mxu0 0.0
  %537 = vmatprep.subr.mxu0 0.0
  %538 = vmatpush1.msra.mxu0 0.0
  %539 = vmatprep.subr.mxu0 0.0
  %540 = vmatpush1.msra.mxu0 0.0
  %541 = vmatprep.subr.mxu0 0.0
  %542 = vmatpush1.msra.mxu0 0.0
  %543 = vmatprep.subr.mxu0 0.0
  %544 = vmatpush1.msra.mxu0 0.0
  %545 = vmatprep.subr.mxu0 0.0
  %546 = vmatpush1.msra.mxu0 0.0
  %547 = vmatprep.subr.mxu0 0.0
  %548 = vmatpush1.msra.mxu0 0.0
  %549 = vmatprep.subr.mxu0 0.0
  %550 = vmatpush1.msra.mxu0 0.0
  %551 = vmatprep.mubr.f32.mxu0 0.0
  %552 = vmatmul.mubr.f32.gmra.mrb[0].mxu0 %v481
  %v553 = vpop.f32.mrb[0].mxu0
  %v554 = vadd.f32 %v470, %v553
  %v555 = vpop.f32.mrb[0].mxu0
  %556 = vmatprep.mubr.f32.mxu0 0.0
  %557 = vmatmul.mubr.f32.gmra.mrb[0].mxu0 %v483
  %v558 = vpop.f32.mrb[0].mxu0
  %v559 = vadd.f32 %v470, %v558
  %v560 = vpop.f32.mrb[0].mxu0
  %561 = vmatprep.mubr.f32.mxu0 0.0
  %562 = vmatmul.mubr.f32.gmra.mrb[0].mxu0 %v485
  %v563 = vpop.f32.mrb[0].mxu0
  %v564 = vadd.f32 %v470, %v563
  %v565 = vpop.f32.mrb[0].mxu0
  %566 = vdwg.mxu0
  %v567 = vsel %vm337, %v554, 0.0
  %568 = vadd.xlane.f32.xlu0 %v567
  %v569 = vpop.xlane.xlu0 %568
  %v570 = vsel %vm337, %v559, 0.0
  %571 = vadd.xlane.f32.xlu0 %v570
  %v572 = vpop.xlane.xlu0 %571
  %v573 = vsel %vm337, %v564, 0.0
  %574 = vadd.xlane.f32.xlu0 %v573
  %v575 = vpop.xlane.xlu0 %574
  %v576 = vmul.f32 %v569, 0.03125
  %v577 = vmul.f32 %v572, 0.03125
  %v578 = vmul.f32 %v575, 0.03125
  %v579 = vmul.f32 %v554, %v554
  %v580 = vmul.f32 %v559, %v559
  %v581 = vmul.f32 %v564, %v564
  %v582 = vsel %vm337, %v579, 0.0
  %583 = vadd.xlane.f32.xlu0 %v582
  %v584 = vpop.xlane.xlu0 %583
  %v585 = vsel %vm337, %v580, 0.0
  %586 = vadd.xlane.f32.xlu0 %v585
  %v587 = vpop.xlane.xlu0 %586
  %v588 = vsel %vm337, %v581, 0.0
  %589 = vadd.xlane.f32.xlu0 %v588
  %v590 = vpop.xlane.xlu0 %589
  %v591 = vmul.f32 %v584, 0.03125
  %v592 = vmul.f32 %v587, 0.03125
  %v593 = vmul.f32 %v590, 0.03125
  %v594 = vmul.f32 %v576, %v576
  %v595 = vmul.f32 %v577, %v577
  %v596 = vmul.f32 %v578, %v578
  %v597 = vsub.f32 %v591, %v594
  %v598 = vsub.f32 %v592, %v595
  %v599 = vsub.f32 %v593, %v596
  %v600 = vmax.f32 %v597, 0.0
  %v601 = vmax.f32 %v598, 0.0
  %v602 = vmax.f32 %v599, 0.0
  %v603 = vsub.f32 %v554, %v576
  %v604 = vsub.f32 %v559, %v577
  %v605 = vsub.f32 %v564, %v578
  %v606 = vadd.f32 %v600, 1e-05
  %v607 = vadd.f32 %v601, 1e-05
  %v608 = vadd.f32 %v602, 1e-05
  %v609 = vrsqrt.pop %v606
  %v610 = vrsqrt.pop %v607
  %v611 = vrsqrt.pop %v608
  %v612 = vmul.f32 %v603, %v609
  %v613 = vmul.f32 %v604, %v610
  %v614 = vmul.f32 %v605, %v611
  %v615 = vld [vmem:[%s12 + $0x2] sm:$0x1]
  %v616 = vlaneseq
  %v617 = vshrl.u32 %v616, 7
  %v618 = vsub.s32 0, %v617
  %v619 = vrot.slane %v615, %v618
  %v620 = vmul.f32 %v612, %v619
  %v621 = vmul.f32 %v613, %v619
  %v622 = vmul.f32 %v614, %v619
  %v623 = vld [vmem:[%s13 + $0x2] sm:$0x1]
  %v624 = vlaneseq
  %v625 = vshrl.u32 %v624, 7
  %v626 = vsub.s32 0, %v625
  %v627 = vrot.slane %v623, %v626
  %v628 = vadd.f32 %v620, %v627
  %v629 = vadd.f32 %v621, %v627
  %v630 = vadd.f32 %v622, %v627
  %v631 = vxor.u32 %v628, 2147483648
  %v632 = vxor.u32 %v629, 2147483648
  %v633 = vxor.u32 %v630, 2147483648
  %v634 = vmul.f32 %v631, 1.442695
  %v635 = vpow.pop %v634
  %v636 = vmul.f32 %v632, 1.442695
  %v637 = vpow.pop %v636
  %v638 = vmul.f32 %v633, 1.442695
  %v639 = vpow.pop %v638
  %v640 = vadd.f32 %v635, 1.0
  %v641 = vadd.f32 %v637, 1.0
  %v642 = vadd.f32 %v639, 1.0
  %v643 = vrcp.pop %v640
  %v644 = vmul.f32 1.0, %v643
  %v645 = vrcp.pop %v641
  %v646 = vmul.f32 1.0, %v645
  %v647 = vrcp.pop %v642
  %v648 = vmul.f32 1.0, %v647
  %652 = vrot.lane.b32.xlu0 %v554, 96
  %v653 = vpop.permute.xlu0 %652
  %654 = vrot.lane.b32.xlu0 %v559, 96
  %v655 = vpop.permute.xlu0 %654
  %656 = vrot.lane.b32.xlu0 %v564, 96
  %v657 = vpop.permute.xlu0 %656
  %v661 = vsel %vm337, %v653, 0.0
  %662 = vadd.xlane.f32.xlu0 %v661
  %v663 = vpop.xlane.xlu0 %662
  %v664 = vsel %vm337, %v655, 0.0
  %665 = vadd.xlane.f32.xlu0 %v664
  %v666 = vpop.xlane.xlu0 %665
  %v667 = vsel %vm337, %v657, 0.0
  %668 = vadd.xlane.f32.xlu0 %v667
  %v669 = vpop.xlane.xlu0 %668
  %v670 = vmul.f32 %v663, 0.03125
  %v671 = vmul.f32 %v666, 0.03125
  %v672 = vmul.f32 %v669, 0.03125
  %676 = vrot.lane.b32.xlu0 %v579, 96
  %v677 = vpop.permute.xlu0 %676
  %678 = vrot.lane.b32.xlu0 %v580, 96
  %v679 = vpop.permute.xlu0 %678
  %680 = vrot.lane.b32.xlu0 %v581, 96
  %v681 = vpop.permute.xlu0 %680
  %v685 = vsel %vm337, %v677, 0.0
  %686 = vadd.xlane.f32.xlu0 %v685
  %v687 = vpop.xlane.xlu0 %686
  %v688 = vsel %vm337, %v679, 0.0
  %689 = vadd.xlane.f32.xlu0 %v688
  %v690 = vpop.xlane.xlu0 %689
  %v691 = vsel %vm337, %v681, 0.0
  %692 = vadd.xlane.f32.xlu0 %v691
  %v693 = vpop.xlane.xlu0 %692
  %v694 = vmul.f32 %v687, 0.03125
  %v695 = vmul.f32 %v690, 0.03125
  %v696 = vmul.f32 %v693, 0.03125
  %v697 = vmul.f32 %v670, %v670
  %v698 = vmul.f32 %v671, %v671
  %v699 = vmul.f32 %v672, %v672
  %v700 = vsub.f32 %v694, %v697
  %v701 = vsub.f32 %v695, %v698
  %v702 = vsub.f32 %v696, %v699
  %v703 = vmax.f32 %v700, 0.0
  %v704 = vmax.f32 %v701, 0.0
  %v705 = vmax.f32 %v702, 0.0
  %v706 = vsub.f32 %v554, %v670
  %v707 = vsub.f32 %v559, %v671
  %v708 = vsub.f32 %v564, %v672
  %v709 = vadd.f32 %v703, 1e-05
  %v710 = vadd.f32 %v704, 1e-05
  %v711 = vadd.f32 %v705, 1e-05
  %v712 = vrsqrt.pop %v709
  %v713 = vrsqrt.pop %v710
  %v714 = vrsqrt.pop %v711
  %v715 = vmul.f32 %v706, %v712
  %v716 = vmul.f32 %v707, %v713
  %v717 = vmul.f32 %v708, %v714
  %v718 = vld [vmem:[%s12] sm:$0x1]
  %v719 = vlaneseq
  %v720 = vshrl.u32 %v719, 7
  %v721 = vsub.s32 0, %v720
  %v722 = vrot.slane %v718, %v721
  %724 = vrot.lane.b32.xlu0 %v722, 32
  %v725 = vpop.permute.xlu0 %724
  %v727 = vmul.f32 %v715, %v725
  %v728 = vmul.f32 %v716, %v725
  %v729 = vmul.f32 %v717, %v725
  %v730 = vld [vmem:[%s13] sm:$0x1]
  %v731 = vlaneseq
  %v732 = vshrl.u32 %v731, 7
  %v733 = vsub.s32 0, %v732
  %v734 = vrot.slane %v730, %v733
  %736 = vrot.lane.b32.xlu0 %v734, 32
  %v737 = vpop.permute.xlu0 %736
  %v739 = vadd.f32 %v727, %v737
  %v740 = vadd.f32 %v728, %v737
  %v741 = vadd.f32 %v729, %v737
  %v742 = vxor.u32 %v739, 2147483648
  %v743 = vxor.u32 %v740, 2147483648
  %v744 = vxor.u32 %v741, 2147483648
  %v745 = vmul.f32 %v742, 1.442695
  %v746 = vpow.pop %v745
  %v747 = vmul.f32 %v743, 1.442695
  %v748 = vpow.pop %v747
  %v749 = vmul.f32 %v744, 1.442695
  %v750 = vpow.pop %v749
  %v751 = vadd.f32 %v746, 1.0
  %v752 = vadd.f32 %v748, 1.0
  %v753 = vadd.f32 %v750, 1.0
  %v754 = vrcp.pop %v751
  %v755 = vmul.f32 1.0, %v754
  %v756 = vrcp.pop %v752
  %v757 = vmul.f32 1.0, %v756
  %v758 = vrcp.pop %v753
  %v759 = vmul.f32 1.0, %v758
  %760 = vrot.lane.b32.xlu0 %v433, 96
  %v761 = vpop.permute.xlu0 %760
  %762 = vrot.lane.b32.xlu0 %v438, 96
  %v763 = vpop.permute.xlu0 %762
  %764 = vrot.lane.b32.xlu0 %v443, 96
  %v765 = vpop.permute.xlu0 %764
  %v769 = vsel %vm337, %v761, 0.0
  %770 = vadd.xlane.f32.xlu0 %v769
  %v771 = vpop.xlane.xlu0 %770
  %v772 = vsel %vm337, %v763, 0.0
  %773 = vadd.xlane.f32.xlu0 %v772
  %v774 = vpop.xlane.xlu0 %773
  %v775 = vsel %vm337, %v765, 0.0
  %776 = vadd.xlane.f32.xlu0 %v775
  %v777 = vpop.xlane.xlu0 %776
  %v778 = vmul.f32 %v771, 0.03125
  %v779 = vmul.f32 %v774, 0.03125
  %v780 = vmul.f32 %v777, 0.03125
  %v781 = vmul.f32 %v433, %v433
  %v782 = vmul.f32 %v438, %v438
  %v783 = vmul.f32 %v443, %v443
  %787 = vrot.lane.b32.xlu0 %v781, 96
  %v788 = vpop.permute.xlu0 %787
  %789 = vrot.lane.b32.xlu0 %v782, 96
  %v790 = vpop.permute.xlu0 %789
  %791 = vrot.lane.b32.xlu0 %v783, 96
  %v792 = vpop.permute.xlu0 %791
  %v796 = vsel %vm337, %v788, 0.0
  %797 = vadd.xlane.f32.xlu0 %v796
  %v798 = vpop.xlane.xlu0 %797
  %v799 = vsel %vm337, %v790, 0.0
  %800 = vadd.xlane.f32.xlu0 %v799
  %v801 = vpop.xlane.xlu0 %800
  %v802 = vsel %vm337, %v792, 0.0
  %803 = vadd.xlane.f32.xlu0 %v802
  %v804 = vpop.xlane.xlu0 %803
  %v805 = vmul.f32 %v798, 0.03125
  %v806 = vmul.f32 %v801, 0.03125
  %v807 = vmul.f32 %v804, 0.03125
  %v808 = vmul.f32 %v778, %v778
  %v809 = vmul.f32 %v779, %v779
  %v810 = vmul.f32 %v780, %v780
  %v811 = vsub.f32 %v805, %v808
  %v812 = vsub.f32 %v806, %v809
  %v813 = vsub.f32 %v807, %v810
  %v814 = vmax.f32 %v811, 0.0
  %v815 = vmax.f32 %v812, 0.0
  %v816 = vmax.f32 %v813, 0.0
  %v817 = vsub.f32 %v433, %v778
  %v818 = vsub.f32 %v438, %v779
  %v819 = vsub.f32 %v443, %v780
  %v820 = vadd.f32 %v814, 1e-05
  %v821 = vadd.f32 %v815, 1e-05
  %v822 = vadd.f32 %v816, 1e-05
  %v823 = vrsqrt.pop %v820
  %v824 = vrsqrt.pop %v821
  %v825 = vrsqrt.pop %v822
  %v826 = vmul.f32 %v817, %v823
  %v827 = vmul.f32 %v818, %v824
  %v828 = vmul.f32 %v819, %v825
  %v829 = vld [vmem:[%s12 + $0x1] sm:$0x1]
  %v830 = vlaneseq
  %v831 = vshrl.u32 %v830, 7
  %v832 = vsub.s32 0, %v831
  %v833 = vrot.slane %v829, %v832
  %835 = vrot.lane.b32.xlu0 %v833, 32
  %v836 = vpop.permute.xlu0 %835
  %v838 = vmul.f32 %v826, %v836
  %v839 = vmul.f32 %v827, %v836
  %v840 = vmul.f32 %v828, %v836
  %v841 = vld [vmem:[%s13 + $0x1] sm:$0x1]
  %v842 = vlaneseq
  %v843 = vshrl.u32 %v842, 7
  %v844 = vsub.s32 0, %v843
  %v845 = vrot.slane %v841, %v844
  %847 = vrot.lane.b32.xlu0 %v845, 32
  %v848 = vpop.permute.xlu0 %847
  %v850 = vadd.f32 %v838, %v848
  %v851 = vadd.f32 %v839, %v848
  %v852 = vadd.f32 %v840, %v848
  %v853 = vmul.f32 %v755, %v850
  %v854 = vmul.f32 %v757, %v851
  %v855 = vmul.f32 %v759, %v852
  %856 = vrot.lane.b32.xlu0 %v433, 32
  %v857 = vpop.permute.xlu0 %856
  %858 = vrot.lane.b32.xlu0 %v438, 32
  %v859 = vpop.permute.xlu0 %858
  %860 = vrot.lane.b32.xlu0 %v443, 32
  %v861 = vpop.permute.xlu0 %860
  %v865 = vsel %vm337, %v857, 0.0
  %866 = vadd.xlane.f32.xlu0 %v865
  %v867 = vpop.xlane.xlu0 %866
  %v868 = vsel %vm337, %v859, 0.0
  %869 = vadd.xlane.f32.xlu0 %v868
  %v870 = vpop.xlane.xlu0 %869
  %v871 = vsel %vm337, %v861, 0.0
  %872 = vadd.xlane.f32.xlu0 %v871
  %v873 = vpop.xlane.xlu0 %872
  %v874 = vmul.f32 %v867, 0.03125
  %v875 = vmul.f32 %v870, 0.03125
  %v876 = vmul.f32 %v873, 0.03125
  %877 = vrot.lane.b32.xlu0 %v781, 32
  %v878 = vpop.permute.xlu0 %877
  %879 = vrot.lane.b32.xlu0 %v782, 32
  %v880 = vpop.permute.xlu0 %879
  %881 = vrot.lane.b32.xlu0 %v783, 32
  %v882 = vpop.permute.xlu0 %881
  %v886 = vsel %vm337, %v878, 0.0
  %887 = vadd.xlane.f32.xlu0 %v886
  %v888 = vpop.xlane.xlu0 %887
  %v889 = vsel %vm337, %v880, 0.0
  %890 = vadd.xlane.f32.xlu0 %v889
  %v891 = vpop.xlane.xlu0 %890
  %v892 = vsel %vm337, %v882, 0.0
  %893 = vadd.xlane.f32.xlu0 %v892
  %v894 = vpop.xlane.xlu0 %893
  %v895 = vmul.f32 %v888, 0.03125
  %v896 = vmul.f32 %v891, 0.03125
  %v897 = vmul.f32 %v894, 0.03125
  %v898 = vmul.f32 %v874, %v874
  %v899 = vmul.f32 %v875, %v875
  %v900 = vmul.f32 %v876, %v876
  %v901 = vsub.f32 %v895, %v898
  %v902 = vsub.f32 %v896, %v899
  %v903 = vsub.f32 %v897, %v900
  %v904 = vmax.f32 %v901, 0.0
  %v905 = vmax.f32 %v902, 0.0
  %v906 = vmax.f32 %v903, 0.0
  %v907 = vsub.f32 %v433, %v874
  %v908 = vsub.f32 %v438, %v875
  %v909 = vsub.f32 %v443, %v876
  %v910 = vadd.f32 %v904, 1e-05
  %v911 = vadd.f32 %v905, 1e-05
  %v912 = vadd.f32 %v906, 1e-05
  %v913 = vrsqrt.pop %v910
  %v914 = vrsqrt.pop %v911
  %v915 = vrsqrt.pop %v912
  %v916 = vmul.f32 %v907, %v913
  %v917 = vmul.f32 %v908, %v914
  %v918 = vmul.f32 %v909, %v915
  %v919 = vld [vmem:[%s12 + $0x3] sm:$0x1]
  %v920 = vlaneseq
  %v921 = vshrl.u32 %v920, 7
  %v922 = vsub.s32 0, %v921
  %v923 = vrot.slane %v919, %v922
  %925 = vrot.lane.b32.xlu0 %v923, 96
  %v926 = vpop.permute.xlu0 %925
  %v928 = vmul.f32 %v916, %v926
  %v929 = vmul.f32 %v917, %v926
  %v930 = vmul.f32 %v918, %v926
  %v931 = vld [vmem:[%s13 + $0x3] sm:$0x1]
  %v932 = vlaneseq
  %v933 = vshrl.u32 %v932, 7
  %v934 = vsub.s32 0, %v933
  %v935 = vrot.slane %v931, %v934
  %937 = vrot.lane.b32.xlu0 %v935, 96
  %v938 = vpop.permute.xlu0 %937
  %v940 = vadd.f32 %v928, %v938
  %v941 = vadd.f32 %v929, %v938
  %v942 = vadd.f32 %v930, %v938
  %946 = vrot.lane.b32.xlu0 %v940, 32
  %v947 = vpop.permute.xlu0 %946
  %948 = vrot.lane.b32.xlu0 %v941, 32
  %v949 = vpop.permute.xlu0 %948
  %950 = vrot.lane.b32.xlu0 %v942, 32
  %v951 = vpop.permute.xlu0 %950
  %v955 = vmul.f32 %v644, %v947
  %v956 = vmul.f32 %v646, %v949
  %v957 = vmul.f32 %v648, %v951
  %961 = vrot.lane.b32.xlu0 %v955, 32
  %v962 = vpop.permute.xlu0 %961
  %963 = vrot.lane.b32.xlu0 %v956, 32
  %v964 = vpop.permute.xlu0 %963
  %965 = vrot.lane.b32.xlu0 %v957, 32
  %v966 = vpop.permute.xlu0 %965
  %v970 = vadd.f32 %v853, %v962
  %v971 = vadd.f32 %v854, %v964
  %v972 = vadd.f32 %v855, %v966
  %v973 = vld [vmem:[%s9 + $0x8] sm:$0xff]
  %v974 = vld [vmem:[%s9 + $0x40] sm:$0xff]
  %v975 = vld [vmem:[%s9 + $0x78] sm:$0xff]
  %v976 = vld [vmem:[%s9 + $0xb0] sm:$0xff]
  %v977 = vld [vmem:[%s11 + $0x2] sm:$0x1]
  %v979 = vlaneseq
  %v980 = vshrl.u32 %v979, 7
  %v981 = vsub.s32 0, %v980
  %v982 = vrot.slane %v977, %v981
  %987 = vrot.lane.b32.xlu0 %v970, 96
  %v988 = vpop.permute.xlu0 %987
  %989 = vrot.lane.b32.xlu0 %v971, 96
  %v990 = vpop.permute.xlu0 %989
  %991 = vrot.lane.b32.xlu0 %v972, 96
  %v992 = vpop.permute.xlu0 %991
  %v993 = vsel %vm337, %v988, 0
  %v995 = vsel %vm337, %v990, 0
  %v997 = vsel %vm337, %v992, 0
  %999 = vmatprep.subr.mxu0 0.0
  %1000 = vmatpush1.msra.mxu0 %v973
  %1001 = vmatprep.subr.mxu0 0.0
  %1002 = vmatpush1.msra.mxu0 %v974
  %1003 = vmatprep.subr.mxu0 0.0
  %1004 = vmatpush1.msra.mxu0 %v975
  %1005 = vmatprep.subr.mxu0 0.0
  %1006 = vmatpush1.msra.mxu0 %v976
  %1007 = vmatprep.subr.mxu0 0.0
  %1008 = vmatpush1.msra.mxu0 0.0
  %1009 = vmatprep.subr.mxu0 0.0
  %1010 = vmatpush1.msra.mxu0 0.0
  %1011 = vmatprep.subr.mxu0 0.0
  %1012 = vmatpush1.msra.mxu0 0.0
  %1013 = vmatprep.subr.mxu0 0.0
  %1014 = vmatpush1.msra.mxu0 0.0
  %1015 = vmatprep.subr.mxu0 0.0
  %1016 = vmatpush1.msra.mxu0 0.0
  %1017 = vmatprep.subr.mxu0 0.0
  %1018 = vmatpush1.msra.mxu0 0.0
  %1019 = vmatprep.subr.mxu0 0.0
  %1020 = vmatpush1.msra.mxu0 0.0
  %1021 = vmatprep.subr.mxu0 0.0
  %1022 = vmatpush1.msra.mxu0 0.0
  %1023 = vmatprep.subr.mxu0 0.0
  %1024 = vmatpush1.msra.mxu0 0.0
  %1025 = vmatprep.subr.mxu0 0.0
  %1026 = vmatpush1.msra.mxu0 0.0
  %1027 = vmatprep.subr.mxu0 0.0
  %1028 = vmatpush1.msra.mxu0 0.0
  %1029 = vmatprep.subr.mxu0 0.0
  %1030 = vmatpush1.msra.mxu0 0.0
  %1031 = vmatprep.subr.mxu0 0.0
  %1032 = vmatpush1.msra.mxu0 0.0
  %1033 = vmatprep.subr.mxu0 0.0
  %1034 = vmatpush1.msra.mxu0 0.0
  %1035 = vmatprep.subr.mxu0 0.0
  %1036 = vmatpush1.msra.mxu0 0.0
  %1037 = vmatprep.subr.mxu0 0.0
  %1038 = vmatpush1.msra.mxu0 0.0
  %1039 = vmatprep.subr.mxu0 0.0
  %1040 = vmatpush1.msra.mxu0 0.0
  %1041 = vmatprep.subr.mxu0 0.0
  %1042 = vmatpush1.msra.mxu0 0.0
  %1043 = vmatprep.subr.mxu0 0.0
  %1044 = vmatpush1.msra.mxu0 0.0
  %1045 = vmatprep.subr.mxu0 0.0
  %1046 = vmatpush1.msra.mxu0 0.0
  %1047 = vmatprep.subr.mxu0 0.0
  %1048 = vmatpush1.msra.mxu0 0.0
  %1049 = vmatprep.subr.mxu0 0.0
  %1050 = vmatpush1.msra.mxu0 0.0
  %1051 = vmatprep.subr.mxu0 0.0
  %1052 = vmatpush1.msra.mxu0 0.0
  %1053 = vmatprep.subr.mxu0 0.0
  %1054 = vmatpush1.msra.mxu0 0.0
  %1055 = vmatprep.subr.mxu0 0.0
  %1056 = vmatpush1.msra.mxu0 0.0
  %1057 = vmatprep.subr.mxu0 0.0
  %1058 = vmatpush1.msra.mxu0 0.0
  %1059 = vmatprep.subr.mxu0 0.0
  %1060 = vmatpush1.msra.mxu0 0.0
  %1061 = vmatprep.subr.mxu0 0.0
  %1062 = vmatpush1.msra.mxu0 0.0
  %1063 = vmatprep.mubr.f32.mxu0 0.0
  %1064 = vmatmul.mubr.f32.gmra.mrb[0].mxu0 %v993
  %v1065 = vpop.f32.mrb[0].mxu0
  %v1066 = vadd.f32 %v982, %v1065
  %v1067 = vpop.f32.mrb[0].mxu0
  %1068 = vmatprep.mubr.f32.mxu0 0.0
  %1069 = vmatmul.mubr.f32.gmra.mrb[0].mxu0 %v995
  %v1070 = vpop.f32.mrb[0].mxu0
  %v1071 = vadd.f32 %v982, %v1070
  %v1072 = vpop.f32.mrb[0].mxu0
  %1073 = vmatprep.mubr.f32.mxu0 0.0
  %1074 = vmatmul.mubr.f32.gmra.mrb[0].mxu0 %v997
  %v1075 = vpop.f32.mrb[0].mxu0
  %v1076 = vadd.f32 %v982, %v1075
  %v1077 = vpop.f32.mrb[0].mxu0
  %1078 = vdwg.mxu0
  %v1079 = vsel %vm337, %v1066, 0.0
  %1080 = vadd.xlane.f32.xlu0 %v1079
  %v1081 = vpop.xlane.xlu0 %1080
  %v1082 = vsel %vm337, %v1071, 0.0
  %1083 = vadd.xlane.f32.xlu0 %v1082
  %v1084 = vpop.xlane.xlu0 %1083
  %v1085 = vsel %vm337, %v1076, 0.0
  %1086 = vadd.xlane.f32.xlu0 %v1085
  %v1087 = vpop.xlane.xlu0 %1086
  %v1088 = vmul.f32 %v1081, 0.03125
  %v1089 = vmul.f32 %v1084, 0.03125
  %v1090 = vmul.f32 %v1087, 0.03125
  %v1091 = vmul.f32 %v1066, %v1066
  %v1092 = vmul.f32 %v1071, %v1071
  %v1093 = vmul.f32 %v1076, %v1076
  %v1094 = vsel %vm337, %v1091, 0.0
  %1095 = vadd.xlane.f32.xlu0 %v1094
  %v1096 = vpop.xlane.xlu0 %1095
  %v1097 = vsel %vm337, %v1092, 0.0
  %1098 = vadd.xlane.f32.xlu0 %v1097
  %v1099 = vpop.xlane.xlu0 %1098
  %v1100 = vsel %vm337, %v1093, 0.0
  %1101 = vadd.xlane.f32.xlu0 %v1100
  %v1102 = vpop.xlane.xlu0 %1101
  %v1103 = vmul.f32 %v1096, 0.03125
  %v1104 = vmul.f32 %v1099, 0.03125
  %v1105 = vmul.f32 %v1102, 0.03125
  %v1106 = vmul.f32 %v1088, %v1088
  %v1107 = vmul.f32 %v1089, %v1089
  %v1108 = vmul.f32 %v1090, %v1090
  %v1109 = vsub.f32 %v1103, %v1106
  %v1110 = vsub.f32 %v1104, %v1107
  %v1111 = vsub.f32 %v1105, %v1108
  %v1112 = vmax.f32 %v1109, 0.0
  %v1113 = vmax.f32 %v1110, 0.0
  %v1114 = vmax.f32 %v1111, 0.0
  %v1115 = vsub.f32 %v1066, %v1088
  %v1116 = vsub.f32 %v1071, %v1089
  %v1117 = vsub.f32 %v1076, %v1090
  %v1118 = vadd.f32 %v1112, 1e-05
  %v1119 = vadd.f32 %v1113, 1e-05
  %v1120 = vadd.f32 %v1114, 1e-05
  %v1121 = vrsqrt.pop %v1118
  %v1122 = vrsqrt.pop %v1119
  %v1123 = vrsqrt.pop %v1120
  %v1124 = vmul.f32 %v1115, %v1121
  %v1125 = vmul.f32 %v1116, %v1122
  %v1126 = vmul.f32 %v1117, %v1123
  %v1127 = vld [vmem:[%s12 + $0x4] sm:$0x1]
  %v1128 = vlaneseq
  %v1129 = vshrl.u32 %v1128, 7
  %v1130 = vsub.s32 0, %v1129
  %v1131 = vrot.slane %v1127, %v1130
  %v1132 = vmul.f32 %v1124, %v1131
  %v1133 = vmul.f32 %v1125, %v1131
  %v1134 = vmul.f32 %v1126, %v1131
  %v1135 = vld [vmem:[%s13 + $0x4] sm:$0x1]
  %v1136 = vlaneseq
  %v1137 = vshrl.u32 %v1136, 7
  %v1138 = vsub.s32 0, %v1137
  %v1139 = vrot.slane %v1135, %v1138
  %v1140 = vadd.f32 %v1132, %v1139
  %v1141 = vadd.f32 %v1133, %v1139
  %v1142 = vadd.f32 %v1134, %v1139
  %v1143 = vmax.f32 %v1140, 0.0
  %v1144 = vmax.f32 %v1141, 0.0
  %v1145 = vmax.f32 %v1142, 0.0
  %v1146 = vld [vmem:[%s9 + $0x10] sm:$0xff]
  %v1147 = vld [vmem:[%s9 + $0x48] sm:$0xff]
  %v1148 = vld [vmem:[%s9 + $0x80] sm:$0xff]
  %v1149 = vld [vmem:[%s9 + $0xb8] sm:$0xff]
  %v1150 = vld [vmem:[%s11 + $0x3] sm:$0x1]
  %v1152 = vlaneseq
  %v1153 = vshrl.u32 %v1152, 7
  %v1154 = vsub.s32 0, %v1153
  %v1155 = vrot.slane %v1150, %v1154
  %v1158 = vsel %vm337, %v1143, 0
  %v1161 = vsel %vm337, %v1144, 0
  %v1164 = vsel %vm337, %v1145, 0
  %1166 = vmatprep.subr.mxu0 0.0
  %1167 = vmatpush1.msra.mxu0 %v1146
  %1168 = vmatprep.subr.mxu0 0.0
  %1169 = vmatpush1.msra.mxu0 %v1147
  %1170 = vmatprep.subr.mxu0 0.0
  %1171 = vmatpush1.msra.mxu0 %v1148
  %1172 = vmatprep.subr.mxu0 0.0
  %1173 = vmatpush1.msra.mxu0 %v1149
  %1174 = vmatprep.subr.mxu0 0.0
  %1175 = vmatpush1.msra.mxu0 0.0
  %1176 = vmatprep.subr.mxu0 0.0
  %1177 = vmatpush1.msra.mxu0 0.0
  %1178 = vmatprep.subr.mxu0 0.0
  %1179 = vmatpush1.msra.mxu0 0.0
  %1180 = vmatprep.subr.mxu0 0.0
  %1181 = vmatpush1.msra.mxu0 0.0
  %1182 = vmatprep.subr.mxu0 0.0
  %1183 = vmatpush1.msra.mxu0 0.0
  %1184 = vmatprep.subr.mxu0 0.0
  %1185 = vmatpush1.msra.mxu0 0.0
  %1186 = vmatprep.subr.mxu0 0.0
  %1187 = vmatpush1.msra.mxu0 0.0
  %1188 = vmatprep.subr.mxu0 0.0
  %1189 = vmatpush1.msra.mxu0 0.0
  %1190 = vmatprep.subr.mxu0 0.0
  %1191 = vmatpush1.msra.mxu0 0.0
  %1192 = vmatprep.subr.mxu0 0.0
  %1193 = vmatpush1.msra.mxu0 0.0
  %1194 = vmatprep.subr.mxu0 0.0
  %1195 = vmatpush1.msra.mxu0 0.0
  %1196 = vmatprep.subr.mxu0 0.0
  %1197 = vmatpush1.msra.mxu0 0.0
  %1198 = vmatprep.subr.mxu0 0.0
  %1199 = vmatpush1.msra.mxu0 0.0
  %1200 = vmatprep.subr.mxu0 0.0
  %1201 = vmatpush1.msra.mxu0 0.0
  %1202 = vmatprep.subr.mxu0 0.0
  %1203 = vmatpush1.msra.mxu0 0.0
  %1204 = vmatprep.subr.mxu0 0.0
  %1205 = vmatpush1.msra.mxu0 0.0
  %1206 = vmatprep.subr.mxu0 0.0
  %1207 = vmatpush1.msra.mxu0 0.0
  %1208 = vmatprep.subr.mxu0 0.0
  %1209 = vmatpush1.msra.mxu0 0.0
  %1210 = vmatprep.subr.mxu0 0.0
  %1211 = vmatpush1.msra.mxu0 0.0
  %1212 = vmatprep.subr.mxu0 0.0
  %1213 = vmatpush1.msra.mxu0 0.0
  %1214 = vmatprep.subr.mxu0 0.0
  %1215 = vmatpush1.msra.mxu0 0.0
  %1216 = vmatprep.subr.mxu0 0.0
  %1217 = vmatpush1.msra.mxu0 0.0
  %1218 = vmatprep.subr.mxu0 0.0
  %1219 = vmatpush1.msra.mxu0 0.0
  %1220 = vmatprep.subr.mxu0 0.0
  %1221 = vmatpush1.msra.mxu0 0.0
  %1222 = vmatprep.subr.mxu0 0.0
  %1223 = vmatpush1.msra.mxu0 0.0
  %1224 = vmatprep.subr.mxu0 0.0
  %1225 = vmatpush1.msra.mxu0 0.0
  %1226 = vmatprep.subr.mxu0 0.0
  %1227 = vmatpush1.msra.mxu0 0.0
  %1228 = vmatprep.subr.mxu0 0.0
  %1229 = vmatpush1.msra.mxu0 0.0
  %1230 = vmatprep.mubr.f32.mxu0 0.0
  %1231 = vmatmul.mubr.f32.gmra.mrb[0].mxu0 %v1158
  %v1232 = vpop.f32.mrb[0].mxu0
  %v1233 = vadd.f32 %v1155, %v1232
  %v1234 = vpop.f32.mrb[0].mxu0
  %1235 = vmatprep.mubr.f32.mxu0 0.0
  %1236 = vmatmul.mubr.f32.gmra.mrb[0].mxu0 %v1161
  %v1237 = vpop.f32.mrb[0].mxu0
  %v1238 = vadd.f32 %v1155, %v1237
  %v1239 = vpop.f32.mrb[0].mxu0
  %1240 = vmatprep.mubr.f32.mxu0 0.0
  %1241 = vmatmul.mubr.f32.gmra.mrb[0].mxu0 %v1164
  %v1242 = vpop.f32.mrb[0].mxu0
  %v1243 = vadd.f32 %v1155, %v1242
  %v1244 = vpop.f32.mrb[0].mxu0
  %1245 = vdwg.mxu0
  %v1246 = vmul.f32 %v1233, 0.5
  %v1247 = vmul.f32 %v1238, 0.5
  %v1248 = vmul.f32 %v1243, 0.5
  %v1249 = vld [vmem:[%s5] sm:$0xff]
  %v1250 = vld [vmem:[%s5 + $0x8] sm:$0xff]
  %v1251 = vld [vmem:[%s5 + $0x10] sm:$0xff]
  %v1252 = vld [vmem:[%s5 + $0x18] sm:$0xff]
  %v1253 = vld [vmem:[%s5 + $0x20] sm:$0xff]
  %v1254 = vld [vmem:[%s5 + $0x28] sm:$0xff]
  %v1255 = vld [vmem:[%s5 + $0x30] sm:$0xff]
  %v1256 = vld [vmem:[%s5 + $0x38] sm:$0xff]
  %v1257 = vld [vmem:[%s5 + $0x40] sm:$0xff]
  %v1258 = vld [vmem:[%s5 + $0x48] sm:$0xff]
  %v1259 = vld [vmem:[%s5 + $0x50] sm:$0xff]
  %v1260 = vld [vmem:[%s5 + $0x58] sm:$0xff]
  %v1261 = vld [vmem:[%s6] sm:$0xff]
  %v1262 = vld [vmem:[%s6 + $0x8] sm:$0xff]
  %v1263 = vld [vmem:[%s6 + $0x10] sm:$0xff]
  %v1264 = vld [vmem:[%s4] sm:$0xff]
  %v1265 = vld [vmem:[%s4 + $0x8] sm:$0xff]
  %v1266 = vld [vmem:[%s4 + $0x10] sm:$0xff]
  %v1267 = vld [vmem:[%s4 + $0x18] sm:$0xff]
  %v1268 = vld [vmem:[%s4 + $0x20] sm:$0xff]
  %v1269 = vld [vmem:[%s4 + $0x28] sm:$0xff]
  %v1270 = vld [vmem:[%s4 + $0x30] sm:$0xff]
  %v1271 = vld [vmem:[%s4 + $0x38] sm:$0xff]
  %v1272 = vld [vmem:[%s4 + $0x40] sm:$0xff]
  %v1273 = vld [vmem:[%s4 + $0x48] sm:$0xff]
  %v1274 = vld [vmem:[%s4 + $0x50] sm:$0xff]
  %v1275 = vld [vmem:[%s4 + $0x58] sm:$0xff]
  %v1276 = vmul.f32 %v1246, %v1264
  %v1277 = vmul.f32 %v1247, %v1265
  %v1278 = vmul.f32 %v1248, %v1266
  %v1279 = vmul.f32 %v1246, %v1267
  %v1280 = vmul.f32 %v1247, %v1268
  %v1281 = vmul.f32 %v1248, %v1269
  %v1282 = vmul.f32 %v1246, %v1270
  %v1283 = vmul.f32 %v1247, %v1271
  %v1284 = vmul.f32 %v1248, %v1272
  %v1285 = vmul.f32 %v1246, %v1273
  %v1286 = vmul.f32 %v1247, %v1274
  %v1287 = vmul.f32 %v1248, %v1275
  %1291 = vrot.lane.b32.xlu0 %v1233, 96
  %v1292 = vpop.permute.xlu0 %1291
  %1293 = vrot.lane.b32.xlu0 %v1238, 96
  %v1294 = vpop.permute.xlu0 %1293
  %1295 = vrot.lane.b32.xlu0 %v1243, 96
  %v1296 = vpop.permute.xlu0 %1295
  %v1298 = vsel %vm337, %v1276, 0
  %v1301 = vsel %vm337, %v1277, 0
  %v1304 = vsel %vm337, %v1278, 0
  %v1307 = vsel %vm337, %v1279, 0
  %v1310 = vsel %vm337, %v1280, 0
  %v1313 = vsel %vm337, %v1281, 0
  %v1316 = vsel %vm337, %v1282, 0
  %v1319 = vsel %vm337, %v1283, 0
  %v1322 = vsel %vm337, %v1284, 0
  %v1325 = vsel %vm337, %v1285, 0
  %v1328 = vsel %vm337, %v1286, 0
  %v1331 = vsel %vm337, %v1287, 0
  %v1333 = vsel %vm337, %v1292, 0
  %v1335 = vsel %vm337, %v1294, 0
  %v1337 = vsel %vm337, %v1296, 0
  %1339 = vmatprep.subr.mxu0 0.0
  %1340 = vmatpush1.xpose.msra.mxu0 %v1333
  %1341 = vmatprep.subr.mxu0 0.0
  %1342 = vmatpush1.xpose.msra.mxu0 %v1335
  %1343 = vmatprep.subr.mxu0 0.0
  %1344 = vmatpush1.xpose.msra.mxu0 %v1337
  %1345 = vmatprep.subr.mxu0 0.0
  %1346 = vmatpush1.xpose.msra.mxu0 0.0
  %1347 = vmatprep.subr.mxu0 0.0
  %1348 = vmatpush1.xpose.msra.mxu0 0.0
  %1349 = vmatprep.subr.mxu0 0.0
  %1350 = vmatpush1.xpose.msra.mxu0 0.0
  %1351 = vmatprep.subr.mxu0 0.0
  %1352 = vmatpush1.xpose.msra.mxu0 0.0
  %1353 = vmatprep.subr.mxu0 0.0
  %1354 = vmatpush1.xpose.msra.mxu0 0.0
  %1355 = vmatprep.subr.mxu0 0.0
  %1356 = vmatpush1.xpose.msra.mxu0 0.0
  %1357 = vmatprep.subr.mxu0 0.0
  %1358 = vmatpush1.xpose.msra.mxu0 0.0
  %1359 = vmatprep.subr.mxu0 0.0
  %1360 = vmatpush1.xpose.msra.mxu0 0.0
  %1361 = vmatprep.subr.mxu0 0.0
  %1362 = vmatpush1.xpose.msra.mxu0 0.0
  %1363 = vmatprep.subr.mxu0 0.0
  %1364 = vmatpush1.xpose.msra.mxu0 0.0
  %1365 = vmatprep.subr.mxu0 0.0
  %1366 = vmatpush1.xpose.msra.mxu0 0.0
  %1367 = vmatprep.subr.mxu0 0.0
  %1368 = vmatpush1.xpose.msra.mxu0 0.0
  %1369 = vmatprep.subr.mxu0 0.0
  %1370 = vmatpush1.xpose.msra.mxu0 0.0
  %1371 = vmatprep.subr.mxu0 0.0
  %1372 = vmatpush1.xpose.msra.mxu0 0.0
  %1373 = vmatprep.subr.mxu0 0.0
  %1374 = vmatpush1.xpose.msra.mxu0 0.0
  %1375 = vmatprep.subr.mxu0 0.0
  %1376 = vmatpush1.xpose.msra.mxu0 0.0
  %1377 = vmatprep.subr.mxu0 0.0
  %1378 = vmatpush1.xpose.msra.mxu0 0.0
  %1379 = vmatprep.subr.mxu0 0.0
  %1380 = vmatpush1.xpose.msra.mxu0 0.0
  %1381 = vmatprep.subr.mxu0 0.0
  %1382 = vmatpush1.xpose.msra.mxu0 0.0
  %1383 = vmatprep.subr.mxu0 0.0
  %1384 = vmatpush1.xpose.msra.mxu0 0.0
  %1385 = vmatprep.subr.mxu0 0.0
  %1386 = vmatpush1.xpose.msra.mxu0 0.0
  %1387 = vmatprep.subr.mxu0 0.0
  %1388 = vmatpush1.xpose.msra.mxu0 0.0
  %1389 = vmatprep.subr.mxu0 0.0
  %1390 = vmatpush1.xpose.msra.mxu0 0.0
  %1391 = vmatprep.subr.mxu0 0.0
  %1392 = vmatpush1.xpose.msra.mxu0 0.0
  %1393 = vmatprep.subr.mxu0 0.0
  %1394 = vmatpush1.xpose.msra.mxu0 0.0
  %1395 = vmatprep.subr.mxu0 0.0
  %1396 = vmatpush1.xpose.msra.mxu0 0.0
  %1397 = vmatprep.subr.mxu0 0.0
  %1398 = vmatpush1.xpose.msra.mxu0 0.0
  %1399 = vmatprep.subr.mxu0 0.0
  %1400 = vmatpush1.xpose.msra.mxu0 0.0
  %1401 = vmatprep.subr.mxu0 0.0
  %1402 = vmatpush1.xpose.msra.mxu0 0.0
  %1403 = vmatprep.mubr.f32.mxu0 0.0
  %1404 = vmatmul.mubr.f32.gmra.mrb[0].mxu0 %v1298
  %v1405 = vpop.f32.mrb[0].mxu0
  %v1406 = vadd.f32 %v1249, %v1405
  %v1407 = vpop.f32.mrb[0].mxu0
  %1408 = vmatprep.mubr.f32.mxu0 0.0
  %1409 = vmatmul.mubr.f32.gmra.mrb[0].mxu0 %v1301
  %v1410 = vpop.f32.mrb[0].mxu0
  %v1411 = vadd.f32 %v1250, %v1410
  %v1412 = vpop.f32.mrb[0].mxu0
  %1413 = vmatprep.mubr.f32.mxu0 0.0
  %1414 = vmatmul.mubr.f32.gmra.mrb[0].mxu0 %v1304
  %v1415 = vpop.f32.mrb[0].mxu0
  %v1416 = vadd.f32 %v1251, %v1415
  %v1417 = vpop.f32.mrb[0].mxu0
  %1418 = vmatprep.mubr.f32.mxu0 0.0
  %1419 = vmatmul.mubr.f32.gmra.mrb[0].mxu0 %v1307
  %v1420 = vpop.f32.mrb[0].mxu0
  %v1421 = vadd.f32 %v1252, %v1420
  %v1422 = vpop.f32.mrb[0].mxu0
  %1423 = vmatprep.mubr.f32.mxu0 0.0
  %1424 = vmatmul.mubr.f32.gmra.mrb[0].mxu0 %v1310
  %v1425 = vpop.f32.mrb[0].mxu0
  %v1426 = vadd.f32 %v1253, %v1425
  %v1427 = vpop.f32.mrb[0].mxu0
  %1428 = vmatprep.mubr.f32.mxu0 0.0
  %1429 = vmatmul.mubr.f32.gmra.mrb[0].mxu0 %v1313
  %v1430 = vpop.f32.mrb[0].mxu0
  %v1431 = vadd.f32 %v1254, %v1430
  %v1432 = vpop.f32.mrb[0].mxu0
  %1433 = vmatprep.mubr.f32.mxu0 0.0
  %1434 = vmatmul.mubr.f32.gmra.mrb[0].mxu0 %v1316
  %v1435 = vpop.f32.mrb[0].mxu0
  %v1436 = vadd.f32 %v1255, %v1435
  %v1437 = vpop.f32.mrb[0].mxu0
  %1438 = vmatprep.mubr.f32.mxu0 0.0
  %1439 = vmatmul.mubr.f32.gmra.mrb[0].mxu0 %v1319
  %v1440 = vpop.f32.mrb[0].mxu0
  %v1441 = vadd.f32 %v1256, %v1440
  %v1442 = vpop.f32.mrb[0].mxu0
  %1443 = vmatprep.mubr.f32.mxu0 0.0
  %1444 = vmatmul.mubr.f32.gmra.mrb[0].mxu0 %v1322
  %v1445 = vpop.f32.mrb[0].mxu0
  %v1446 = vadd.f32 %v1257, %v1445
  %v1447 = vpop.f32.mrb[0].mxu0
  %1448 = vmatprep.mubr.f32.mxu0 0.0
  %1449 = vmatmul.mubr.f32.gmra.mrb[0].mxu0 %v1325
  %v1450 = vpop.f32.mrb[0].mxu0
  %v1451 = vadd.f32 %v1258, %v1450
  %v1452 = vpop.f32.mrb[0].mxu0
  %1453 = vmatprep.mubr.f32.mxu0 0.0
  %1454 = vmatmul.mubr.f32.gmra.mrb[0].mxu0 %v1328
  %v1455 = vpop.f32.mrb[0].mxu0
  %v1456 = vadd.f32 %v1259, %v1455
  %v1457 = vpop.f32.mrb[0].mxu0
  %1458 = vmatprep.mubr.f32.mxu0 0.0
  %1459 = vmatmul.mubr.f32.gmra.mrb[0].mxu0 %v1331
  %v1460 = vpop.f32.mrb[0].mxu0
  %v1461 = vadd.f32 %v1260, %v1460
  %v1462 = vpop.f32.mrb[0].mxu0
  %1463 = vdwg.mxu0
  %vm1464 = vcmask 195584
  %v1465 = vsel %vm1464, %v1406, -inf
  %1466 = vmax.xlane.f32.xlu0 %v1465
  %v1467 = vpop.xlane.xlu0 %1466
  %v1468 = vsel %vm1464, %v1411, -inf
  %1469 = vmax.xlane.f32.xlu0 %v1468
  %v1470 = vpop.xlane.xlu0 %1469
  %v1471 = vsel %vm1464, %v1416, -inf
  %1472 = vmax.xlane.f32.xlu0 %v1471
  %v1473 = vpop.xlane.xlu0 %1472
  %v1474 = vsel %vm1464, %v1421, -inf
  %1475 = vmax.xlane.f32.xlu0 %v1474
  %v1476 = vpop.xlane.xlu0 %1475
  %v1477 = vsel %vm1464, %v1426, -inf
  %1478 = vmax.xlane.f32.xlu0 %v1477
  %v1479 = vpop.xlane.xlu0 %1478
  %v1480 = vsel %vm1464, %v1431, -inf
  %1481 = vmax.xlane.f32.xlu0 %v1480
  %v1482 = vpop.xlane.xlu0 %1481
  %v1483 = vsel %vm1464, %v1436, -inf
  %1484 = vmax.xlane.f32.xlu0 %v1483
  %v1485 = vpop.xlane.xlu0 %1484
  %v1486 = vsel %vm1464, %v1441, -inf
  %1487 = vmax.xlane.f32.xlu0 %v1486
  %v1488 = vpop.xlane.xlu0 %1487
  %v1489 = vsel %vm1464, %v1446, -inf
  %1490 = vmax.xlane.f32.xlu0 %v1489
  %v1491 = vpop.xlane.xlu0 %1490
  %v1492 = vsel %vm1464, %v1451, -inf
  %1493 = vmax.xlane.f32.xlu0 %v1492
  %v1494 = vpop.xlane.xlu0 %1493
  %v1495 = vsel %vm1464, %v1456, -inf
  %1496 = vmax.xlane.f32.xlu0 %v1495
  %v1497 = vpop.xlane.xlu0 %1496
  %v1498 = vsel %vm1464, %v1461, -inf
  %1499 = vmax.xlane.f32.xlu0 %v1498
  %v1500 = vpop.xlane.xlu0 %1499
  %v1501 = vsub.f32 %v1406, %v1467
  %v1502 = vsub.f32 %v1411, %v1470
  %v1503 = vsub.f32 %v1416, %v1473
  %v1504 = vsub.f32 %v1421, %v1476
  %v1505 = vsub.f32 %v1426, %v1479
  %v1506 = vsub.f32 %v1431, %v1482
  %v1507 = vsub.f32 %v1436, %v1485
  %v1508 = vsub.f32 %v1441, %v1488
  %v1509 = vsub.f32 %v1446, %v1491
  %v1510 = vsub.f32 %v1451, %v1494
  %v1511 = vsub.f32 %v1456, %v1497
  %v1512 = vsub.f32 %v1461, %v1500
  %v1513 = vmul.f32 %v1501, 1.442695
  %v1514 = vpow.pop %v1513
  %v1515 = vmul.f32 %v1502, 1.442695
  %v1516 = vpow.pop %v1515
  %v1517 = vmul.f32 %v1503, 1.442695
  %v1518 = vpow.pop %v1517
  %v1519 = vmul.f32 %v1504, 1.442695
  %v1520 = vpow.pop %v1519
  %v1521 = vmul.f32 %v1505, 1.442695
  %v1522 = vpow.pop %v1521
  %v1523 = vmul.f32 %v1506, 1.442695
  %v1524 = vpow.pop %v1523
  %v1525 = vmul.f32 %v1507, 1.442695
  %v1526 = vpow.pop %v1525
  %v1527 = vmul.f32 %v1508, 1.442695
  %v1528 = vpow.pop %v1527
  %v1529 = vmul.f32 %v1509, 1.442695
  %v1530 = vpow.pop %v1529
  %v1531 = vmul.f32 %v1510, 1.442695
  %v1532 = vpow.pop %v1531
  %v1533 = vmul.f32 %v1511, 1.442695
  %v1534 = vpow.pop %v1533
  %v1535 = vmul.f32 %v1512, 1.442695
  %v1536 = vpow.pop %v1535
  %v1537 = vsel %vm1464, %v1514, 0.0
  %1538 = vadd.xlane.f32.xlu0 %v1537
  %v1539 = vpop.xlane.xlu0 %1538
  %v1540 = vsel %vm1464, %v1516, 0.0
  %1541 = vadd.xlane.f32.xlu0 %v1540
  %v1542 = vpop.xlane.xlu0 %1541
  %v1543 = vsel %vm1464, %v1518, 0.0
  %1544 = vadd.xlane.f32.xlu0 %v1543
  %v1545 = vpop.xlane.xlu0 %1544
  %v1546 = vsel %vm1464, %v1520, 0.0
  %1547 = vadd.xlane.f32.xlu0 %v1546
  %v1548 = vpop.xlane.xlu0 %1547
  %v1549 = vsel %vm1464, %v1522, 0.0
  %1550 = vadd.xlane.f32.xlu0 %v1549
  %v1551 = vpop.xlane.xlu0 %1550
  %v1552 = vsel %vm1464, %v1524, 0.0
  %1553 = vadd.xlane.f32.xlu0 %v1552
  %v1554 = vpop.xlane.xlu0 %1553
  %v1555 = vsel %vm1464, %v1526, 0.0
  %1556 = vadd.xlane.f32.xlu0 %v1555
  %v1557 = vpop.xlane.xlu0 %1556
  %v1558 = vsel %vm1464, %v1528, 0.0
  %1559 = vadd.xlane.f32.xlu0 %v1558
  %v1560 = vpop.xlane.xlu0 %1559
  %v1561 = vsel %vm1464, %v1530, 0.0
  %1562 = vadd.xlane.f32.xlu0 %v1561
  %v1563 = vpop.xlane.xlu0 %1562
  %v1564 = vsel %vm1464, %v1532, 0.0
  %1565 = vadd.xlane.f32.xlu0 %v1564
  %v1566 = vpop.xlane.xlu0 %1565
  %v1567 = vsel %vm1464, %v1534, 0.0
  %1568 = vadd.xlane.f32.xlu0 %v1567
  %v1569 = vpop.xlane.xlu0 %1568
  %v1570 = vsel %vm1464, %v1536, 0.0
  %1571 = vadd.xlane.f32.xlu0 %v1570
  %v1572 = vpop.xlane.xlu0 %1571
  %v1573 = vrcp.pop %v1539
  %v1574 = vrcp.pop %v1542
  %v1575 = vrcp.pop %v1545
  %v1576 = vrcp.pop %v1548
  %v1577 = vrcp.pop %v1551
  %v1578 = vrcp.pop %v1554
  %v1579 = vrcp.pop %v1557
  %v1580 = vrcp.pop %v1560
  %v1581 = vrcp.pop %v1563
  %v1582 = vrcp.pop %v1566
  %v1583 = vrcp.pop %v1569
  %v1584 = vrcp.pop %v1572
  %v1585 = vmul.f32 %v1514, %v1573
  %v1586 = vmul.f32 %v1516, %v1574
  %v1587 = vmul.f32 %v1518, %v1575
  %v1588 = vmul.f32 %v1520, %v1576
  %v1589 = vmul.f32 %v1522, %v1577
  %v1590 = vmul.f32 %v1524, %v1578
  %v1591 = vmul.f32 %v1526, %v1579
  %v1592 = vmul.f32 %v1528, %v1580
  %v1593 = vmul.f32 %v1530, %v1581
  %v1594 = vmul.f32 %v1532, %v1582
  %v1595 = vmul.f32 %v1534, %v1583
  %v1596 = vmul.f32 %v1536, %v1584
  %1597 = vrot.lane.b32.xlu0 %v1233, 64
  %v1598 = vpop.permute.xlu0 %1597
  %1599 = vrot.lane.b32.xlu0 %v1238, 64
  %v1600 = vpop.permute.xlu0 %1599
  %1601 = vrot.lane.b32.xlu0 %v1243, 64
  %v1602 = vpop.permute.xlu0 %1601
  %v1607 = vsel %vm1464, %v1585, 0
  %v1610 = vsel %vm1464, %v1586, 0
  %v1613 = vsel %vm1464, %v1587, 0
  %v1616 = vsel %vm1464, %v1588, 0
  %v1619 = vsel %vm1464, %v1589, 0
  %v1622 = vsel %vm1464, %v1590, 0
  %v1625 = vsel %vm1464, %v1591, 0
  %v1628 = vsel %vm1464, %v1592, 0
  %v1631 = vsel %vm1464, %v1593, 0
  %v1634 = vsel %vm1464, %v1594, 0
  %v1637 = vsel %vm1464, %v1595, 0
  %v1640 = vsel %vm1464, %v1596, 0
  %1642 = vmatprep.subr.mxu0 0.0
  %1643 = vmatpush1.msra.mxu0 %v1598
  %1644 = vmatprep.subr.mxu0 0.0
  %1645 = vmatpush1.msra.mxu0 %v1600
  %1646 = vmatprep.subr.mxu0 0.0
  %1647 = vmatpush1.msra.mxu0 %v1602
  %1648 = vmatprep.subr.mxu0 0.0
  %1649 = vmatpush1.msra.mxu0 0.0
  %1650 = vmatprep.subr.mxu0 0.0
  %1651 = vmatpush1.msra.mxu0 0.0
  %1652 = vmatprep.subr.mxu0 0.0
  %1653 = vmatpush1.msra.mxu0 0.0
  %1654 = vmatprep.subr.mxu0 0.0
  %1655 = vmatpush1.msra.mxu0 0.0
  %1656 = vmatprep.subr.mxu0 0.0
  %1657 = vmatpush1.msra.mxu0 0.0
  %1658 = vmatprep.subr.mxu0 0.0
  %1659 = vmatpush1.msra.mxu0 0.0
  %1660 = vmatprep.subr.mxu0 0.0
  %1661 = vmatpush1.msra.mxu0 0.0
  %1662 = vmatprep.subr.mxu0 0.0
  %1663 = vmatpush1.msra.mxu0 0.0
  %1664 = vmatprep.subr.mxu0 0.0
  %1665 = vmatpush1.msra.mxu0 0.0
  %1666 = vmatprep.subr.mxu0 0.0
  %1667 = vmatpush1.msra.mxu0 0.0
  %1668 = vmatprep.subr.mxu0 0.0
  %1669 = vmatpush1.msra.mxu0 0.0
  %1670 = vmatprep.subr.mxu0 0.0
  %1671 = vmatpush1.msra.mxu0 0.0
  %1672 = vmatprep.subr.mxu0 0.0
  %1673 = vmatpush1.msra.mxu0 0.0
  %1674 = vmatprep.subr.mxu0 0.0
  %1675 = vmatpush1.msra.mxu0 0.0
  %1676 = vmatprep.subr.mxu0 0.0
  %1677 = vmatpush1.msra.mxu0 0.0
  %1678 = vmatprep.subr.mxu0 0.0
  %1679 = vmatpush1.msra.mxu0 0.0
  %1680 = vmatprep.subr.mxu0 0.0
  %1681 = vmatpush1.msra.mxu0 0.0
  %1682 = vmatprep.subr.mxu0 0.0
  %1683 = vmatpush1.msra.mxu0 0.0
  %1684 = vmatprep.subr.mxu0 0.0
  %1685 = vmatpush1.msra.mxu0 0.0
  %1686 = vmatprep.subr.mxu0 0.0
  %1687 = vmatpush1.msra.mxu0 0.0
  %1688 = vmatprep.subr.mxu0 0.0
  %1689 = vmatpush1.msra.mxu0 0.0
  %1690 = vmatprep.subr.mxu0 0.0
  %1691 = vmatpush1.msra.mxu0 0.0
  %1692 = vmatprep.subr.mxu0 0.0
  %1693 = vmatpush1.msra.mxu0 0.0
  %1694 = vmatprep.subr.mxu0 0.0
  %1695 = vmatpush1.msra.mxu0 0.0
  %1696 = vmatprep.subr.mxu0 0.0
  %1697 = vmatpush1.msra.mxu0 0.0
  %1698 = vmatprep.subr.mxu0 0.0
  %1699 = vmatpush1.msra.mxu0 0.0
  %1700 = vmatprep.subr.mxu0 0.0
  %1701 = vmatpush1.msra.mxu0 0.0
  %1702 = vmatprep.subr.mxu0 0.0
  %1703 = vmatpush1.msra.mxu0 0.0
  %1704 = vmatprep.subr.mxu0 0.0
  %1705 = vmatpush1.msra.mxu0 0.0
  %1706 = vmatprep.mubr.f32.mxu0 0.0
  %1707 = vmatmul.mubr.f32.gmra.mrb[0].mxu0 %v1607
  %v1708 = vpop.f32.mrb[0].mxu0
  %v1709 = vadd.f32 0.0, %v1708
  %v1710 = vpop.f32.mrb[0].mxu0
  %1711 = vmatprep.mubr.f32.mxu0 0.0
  %1712 = vmatmul.mubr.f32.gmra.mrb[0].mxu0 %v1610
  %v1713 = vpop.f32.mrb[0].mxu0
  %v1714 = vadd.f32 0.0, %v1713
  %v1715 = vpop.f32.mrb[0].mxu0
  %1716 = vmatprep.mubr.f32.mxu0 0.0
  %1717 = vmatmul.mubr.f32.gmra.mrb[0].mxu0 %v1613
  %v1718 = vpop.f32.mrb[0].mxu0
  %v1719 = vadd.f32 0.0, %v1718
  %v1720 = vpop.f32.mrb[0].mxu0
  %1721 = vmatprep.mubr.f32.mxu0 0.0
  %1722 = vmatmul.mubr.f32.gmra.mrb[0].mxu0 %v1616
  %v1723 = vpop.f32.mrb[0].mxu0
  %v1724 = vadd.f32 0.0, %v1723
  %v1725 = vpop.f32.mrb[0].mxu0
  %1726 = vmatprep.mubr.f32.mxu0 0.0
  %1727 = vmatmul.mubr.f32.gmra.mrb[0].mxu0 %v1619
  %v1728 = vpop.f32.mrb[0].mxu0
  %v1729 = vadd.f32 0.0, %v1728
  %v1730 = vpop.f32.mrb[0].mxu0
  %1731 = vmatprep.mubr.f32.mxu0 0.0
  %1732 = vmatmul.mubr.f32.gmra.mrb[0].mxu0 %v1622
  %v1733 = vpop.f32.mrb[0].mxu0
  %v1734 = vadd.f32 0.0, %v1733
  %v1735 = vpop.f32.mrb[0].mxu0
  %1736 = vmatprep.mubr.f32.mxu0 0.0
  %1737 = vmatmul.mubr.f32.gmra.mrb[0].mxu0 %v1625
  %v1738 = vpop.f32.mrb[0].mxu0
  %v1739 = vadd.f32 0.0, %v1738
  %v1740 = vpop.f32.mrb[0].mxu0
  %1741 = vmatprep.mubr.f32.mxu0 0.0
  %1742 = vmatmul.mubr.f32.gmra.mrb[0].mxu0 %v1628
  %v1743 = vpop.f32.mrb[0].mxu0
  %v1744 = vadd.f32 0.0, %v1743
  %v1745 = vpop.f32.mrb[0].mxu0
  %1746 = vmatprep.mubr.f32.mxu0 0.0
  %1747 = vmatmul.mubr.f32.gmra.mrb[0].mxu0 %v1631
  %v1748 = vpop.f32.mrb[0].mxu0
  %v1749 = vadd.f32 0.0, %v1748
  %v1750 = vpop.f32.mrb[0].mxu0
  %1751 = vmatprep.mubr.f32.mxu0 0.0
  %1752 = vmatmul.mubr.f32.gmra.mrb[0].mxu0 %v1634
  %v1753 = vpop.f32.mrb[0].mxu0
  %v1754 = vadd.f32 0.0, %v1753
  %v1755 = vpop.f32.mrb[0].mxu0
  %1756 = vmatprep.mubr.f32.mxu0 0.0
  %1757 = vmatmul.mubr.f32.gmra.mrb[0].mxu0 %v1637
  %v1758 = vpop.f32.mrb[0].mxu0
  %v1759 = vadd.f32 0.0, %v1758
  %v1760 = vpop.f32.mrb[0].mxu0
  %1761 = vmatprep.mubr.f32.mxu0 0.0
  %1762 = vmatmul.mubr.f32.gmra.mrb[0].mxu0 %v1640
  %v1763 = vpop.f32.mrb[0].mxu0
  %v1764 = vadd.f32 0.0, %v1763
  %v1765 = vpop.f32.mrb[0].mxu0
  %1766 = vdwg.mxu0
  %v1767 = vmul.f32 %v1709, %v1264
  %v1768 = vmul.f32 %v1714, %v1265
  %v1769 = vmul.f32 %v1719, %v1266
  %v1770 = vmul.f32 %v1724, %v1267
  %v1771 = vmul.f32 %v1729, %v1268
  %v1772 = vmul.f32 %v1734, %v1269
  %v1773 = vmul.f32 %v1739, %v1270
  %v1774 = vmul.f32 %v1744, %v1271
  %v1775 = vmul.f32 %v1749, %v1272
  %v1776 = vmul.f32 %v1754, %v1273
  %v1777 = vmul.f32 %v1759, %v1274
  %v1778 = vmul.f32 %v1764, %v1275
  %v1779 = vld [vmem:[%s4 + $0x60] sm:$0xff]
  %v1780 = vld [vmem:[%s4 + $0x68] sm:$0xff]
  %v1781 = vld [vmem:[%s4 + $0x70] sm:$0xff]
  %v1782 = vld [vmem:[%s4 + $0x78] sm:$0xff]
  %v1783 = vld [vmem:[%s4 + $0x80] sm:$0xff]
  %v1784 = vld [vmem:[%s4 + $0x88] sm:$0xff]
  %v1785 = vld [vmem:[%s4 + $0x90] sm:$0xff]
  %v1786 = vld [vmem:[%s4 + $0x98] sm:$0xff]
  %v1787 = vld [vmem:[%s4 + $0xa0] sm:$0xff]
  %v1788 = vld [vmem:[%s4 + $0xa8] sm:$0xff]
  %v1789 = vld [vmem:[%s4 + $0xb0] sm:$0xff]
  %v1790 = vld [vmem:[%s4 + $0xb8] sm:$0xff]
  %v1791 = vmul.f32 %v1246, %v1779
  %v1792 = vmul.f32 %v1247, %v1780
  %v1793 = vmul.f32 %v1248, %v1781
  %v1794 = vmul.f32 %v1246, %v1782
  %v1795 = vmul.f32 %v1247, %v1783
  %v1796 = vmul.f32 %v1248, %v1784
  %v1797 = vmul.f32 %v1246, %v1785
  %v1798 = vmul.f32 %v1247, %v1786
  %v1799 = vmul.f32 %v1248, %v1787
  %v1800 = vmul.f32 %v1246, %v1788
  %v1801 = vmul.f32 %v1247, %v1789
  %v1802 = vmul.f32 %v1248, %v1790
  %v1804 = vsel %vm337, %v1791, 0
  %v1807 = vsel %vm337, %v1792, 0
  %v1810 = vsel %vm337, %v1793, 0
  %v1813 = vsel %vm337, %v1794, 0
  %v1816 = vsel %vm337, %v1795, 0
  %v1819 = vsel %vm337, %v1796, 0
  %v1822 = vsel %vm337, %v1797, 0
  %v1825 = vsel %vm337, %v1798, 0
  %v1828 = vsel %vm337, %v1799, 0
  %v1831 = vsel %vm337, %v1800, 0
  %v1834 = vsel %vm337, %v1801, 0
  %v1837 = vsel %vm337, %v1802, 0
  %1839 = vmatprep.subr.mxu0 0.0
  %1840 = vmatpush1.xpose.msra.mxu0 %v1333
  %1841 = vmatprep.subr.mxu0 0.0
  %1842 = vmatpush1.xpose.msra.mxu0 %v1335
  %1843 = vmatprep.subr.mxu0 0.0
  %1844 = vmatpush1.xpose.msra.mxu0 %v1337
  %1845 = vmatprep.subr.mxu0 0.0
  %1846 = vmatpush1.xpose.msra.mxu0 0.0
  %1847 = vmatprep.subr.mxu0 0.0
  %1848 = vmatpush1.xpose.msra.mxu0 0.0
  %1849 = vmatprep.subr.mxu0 0.0
  %1850 = vmatpush1.xpose.msra.mxu0 0.0
  %1851 = vmatprep.subr.mxu0 0.0
  %1852 = vmatpush1.xpose.msra.mxu0 0.0
  %1853 = vmatprep.subr.mxu0 0.0
  %1854 = vmatpush1.xpose.msra.mxu0 0.0
  %1855 = vmatprep.subr.mxu0 0.0
  %1856 = vmatpush1.xpose.msra.mxu0 0.0
  %1857 = vmatprep.subr.mxu0 0.0
  %1858 = vmatpush1.xpose.msra.mxu0 0.0
  %1859 = vmatprep.subr.mxu0 0.0
  %1860 = vmatpush1.xpose.msra.mxu0 0.0
  %1861 = vmatprep.subr.mxu0 0.0
  %1862 = vmatpush1.xpose.msra.mxu0 0.0
  %1863 = vmatprep.subr.mxu0 0.0
  %1864 = vmatpush1.xpose.msra.mxu0 0.0
  %1865 = vmatprep.subr.mxu0 0.0
  %1866 = vmatpush1.xpose.msra.mxu0 0.0
  %1867 = vmatprep.subr.mxu0 0.0
  %1868 = vmatpush1.xpose.msra.mxu0 0.0
  %1869 = vmatprep.subr.mxu0 0.0
  %1870 = vmatpush1.xpose.msra.mxu0 0.0
  %1871 = vmatprep.subr.mxu0 0.0
  %1872 = vmatpush1.xpose.msra.mxu0 0.0
  %1873 = vmatprep.subr.mxu0 0.0
  %1874 = vmatpush1.xpose.msra.mxu0 0.0
  %1875 = vmatprep.subr.mxu0 0.0
  %1876 = vmatpush1.xpose.msra.mxu0 0.0
  %1877 = vmatprep.subr.mxu0 0.0
  %1878 = vmatpush1.xpose.msra.mxu0 0.0
  %1879 = vmatprep.subr.mxu0 0.0
  %1880 = vmatpush1.xpose.msra.mxu0 0.0
  %1881 = vmatprep.subr.mxu0 0.0
  %1882 = vmatpush1.xpose.msra.mxu0 0.0
  %1883 = vmatprep.subr.mxu0 0.0
  %1884 = vmatpush1.xpose.msra.mxu0 0.0
  %1885 = vmatprep.subr.mxu0 0.0
  %1886 = vmatpush1.xpose.msra.mxu0 0.0
  %1887 = vmatprep.subr.mxu0 0.0
  %1888 = vmatpush1.xpose.msra.mxu0 0.0
  %1889 = vmatprep.subr.mxu0 0.0
  %1890 = vmatpush1.xpose.msra.mxu0 0.0
  %1891 = vmatprep.subr.mxu0 0.0
  %1892 = vmatpush1.xpose.msra.mxu0 0.0
  %1893 = vmatprep.subr.mxu0 0.0
  %1894 = vmatpush1.xpose.msra.mxu0 0.0
  %1895 = vmatprep.subr.mxu0 0.0
  %1896 = vmatpush1.xpose.msra.mxu0 0.0
  %1897 = vmatprep.subr.mxu0 0.0
  %1898 = vmatpush1.xpose.msra.mxu0 0.0
  %1899 = vmatprep.subr.mxu0 0.0
  %1900 = vmatpush1.xpose.msra.mxu0 0.0
  %1901 = vmatprep.subr.mxu0 0.0
  %1902 = vmatpush1.xpose.msra.mxu0 0.0
  %1903 = vmatprep.mubr.f32.mxu0 0.0
  %1904 = vmatmul.mubr.f32.gmra.mrb[0].mxu0 %v1804
  %v1905 = vpop.f32.mrb[0].mxu0
  %v1906 = vadd.f32 %v1249, %v1905
  %v1907 = vpop.f32.mrb[0].mxu0
  %1908 = vmatprep.mubr.f32.mxu0 0.0
  %1909 = vmatmul.mubr.f32.gmra.mrb[0].mxu0 %v1807
  %v1910 = vpop.f32.mrb[0].mxu0
  %v1911 = vadd.f32 %v1250, %v1910
  %v1912 = vpop.f32.mrb[0].mxu0
  %1913 = vmatprep.mubr.f32.mxu0 0.0
  %1914 = vmatmul.mubr.f32.gmra.mrb[0].mxu0 %v1810
  %v1915 = vpop.f32.mrb[0].mxu0
  %v1916 = vadd.f32 %v1251, %v1915
  %v1917 = vpop.f32.mrb[0].mxu0
  %1918 = vmatprep.mubr.f32.mxu0 0.0
  %1919 = vmatmul.mubr.f32.gmra.mrb[0].mxu0 %v1813
  %v1920 = vpop.f32.mrb[0].mxu0
  %v1921 = vadd.f32 %v1252, %v1920
  %v1922 = vpop.f32.mrb[0].mxu0
  %1923 = vmatprep.mubr.f32.mxu0 0.0
  %1924 = vmatmul.mubr.f32.gmra.mrb[0].mxu0 %v1816
  %v1925 = vpop.f32.mrb[0].mxu0
  %v1926 = vadd.f32 %v1253, %v1925
  %v1927 = vpop.f32.mrb[0].mxu0
  %1928 = vmatprep.mubr.f32.mxu0 0.0
  %1929 = vmatmul.mubr.f32.gmra.mrb[0].mxu0 %v1819
  %v1930 = vpop.f32.mrb[0].mxu0
  %v1931 = vadd.f32 %v1254, %v1930
  %v1932 = vpop.f32.mrb[0].mxu0
  %1933 = vmatprep.mubr.f32.mxu0 0.0
  %1934 = vmatmul.mubr.f32.gmra.mrb[0].mxu0 %v1822
  %v1935 = vpop.f32.mrb[0].mxu0
  %v1936 = vadd.f32 %v1255, %v1935
  %v1937 = vpop.f32.mrb[0].mxu0
  %1938 = vmatprep.mubr.f32.mxu0 0.0
  %1939 = vmatmul.mubr.f32.gmra.mrb[0].mxu0 %v1825
  %v1940 = vpop.f32.mrb[0].mxu0
  %v1941 = vadd.f32 %v1256, %v1940
  %v1942 = vpop.f32.mrb[0].mxu0
  %1943 = vmatprep.mubr.f32.mxu0 0.0
  %1944 = vmatmul.mubr.f32.gmra.mrb[0].mxu0 %v1828
  %v1945 = vpop.f32.mrb[0].mxu0
  %v1946 = vadd.f32 %v1257, %v1945
  %v1947 = vpop.f32.mrb[0].mxu0
  %1948 = vmatprep.mubr.f32.mxu0 0.0
  %1949 = vmatmul.mubr.f32.gmra.mrb[0].mxu0 %v1831
  %v1950 = vpop.f32.mrb[0].mxu0
  %v1951 = vadd.f32 %v1258, %v1950
  %v1952 = vpop.f32.mrb[0].mxu0
  %1953 = vmatprep.mubr.f32.mxu0 0.0
  %1954 = vmatmul.mubr.f32.gmra.mrb[0].mxu0 %v1834
  %v1955 = vpop.f32.mrb[0].mxu0
  %v1956 = vadd.f32 %v1259, %v1955
  %v1957 = vpop.f32.mrb[0].mxu0
  %1958 = vmatprep.mubr.f32.mxu0 0.0
  %1959 = vmatmul.mubr.f32.gmra.mrb[0].mxu0 %v1837
  %v1960 = vpop.f32.mrb[0].mxu0
  %v1961 = vadd.f32 %v1260, %v1960
  %v1962 = vpop.f32.mrb[0].mxu0
  %1963 = vdwg.mxu0
  %v1964 = vsel %vm1464, %v1906, -inf
  %1965 = vmax.xlane.f32.xlu0 %v1964
  %v1966 = vpop.xlane.xlu0 %1965
  %v1967 = vsel %vm1464, %v1911, -inf
  %1968 = vmax.xlane.f32.xlu0 %v1967
  %v1969 = vpop.xlane.xlu0 %1968
  %v1970 = vsel %vm1464, %v1916, -inf
  %1971 = vmax.xlane.f32.xlu0 %v1970
  %v1972 = vpop.xlane.xlu0 %1971
  %v1973 = vsel %vm1464, %v1921, -inf
  %1974 = vmax.xlane.f32.xlu0 %v1973
  %v1975 = vpop.xlane.xlu0 %1974
  %v1976 = vsel %vm1464, %v1926, -inf
  %1977 = vmax.xlane.f32.xlu0 %v1976
  %v1978 = vpop.xlane.xlu0 %1977
  %v1979 = vsel %vm1464, %v1931, -inf
  %1980 = vmax.xlane.f32.xlu0 %v1979
  %v1981 = vpop.xlane.xlu0 %1980
  %v1982 = vsel %vm1464, %v1936, -inf
  %1983 = vmax.xlane.f32.xlu0 %v1982
  %v1984 = vpop.xlane.xlu0 %1983
  %v1985 = vsel %vm1464, %v1941, -inf
  %1986 = vmax.xlane.f32.xlu0 %v1985
  %v1987 = vpop.xlane.xlu0 %1986
  %v1988 = vsel %vm1464, %v1946, -inf
  %1989 = vmax.xlane.f32.xlu0 %v1988
  %v1990 = vpop.xlane.xlu0 %1989
  %v1991 = vsel %vm1464, %v1951, -inf
  %1992 = vmax.xlane.f32.xlu0 %v1991
  %v1993 = vpop.xlane.xlu0 %1992
  %v1994 = vsel %vm1464, %v1956, -inf
  %1995 = vmax.xlane.f32.xlu0 %v1994
  %v1996 = vpop.xlane.xlu0 %1995
  %v1997 = vsel %vm1464, %v1961, -inf
  %1998 = vmax.xlane.f32.xlu0 %v1997
  %v1999 = vpop.xlane.xlu0 %1998
  %v2000 = vsub.f32 %v1906, %v1966
  %v2001 = vsub.f32 %v1911, %v1969
  %v2002 = vsub.f32 %v1916, %v1972
  %v2003 = vsub.f32 %v1921, %v1975
  %v2004 = vsub.f32 %v1926, %v1978
  %v2005 = vsub.f32 %v1931, %v1981
  %v2006 = vsub.f32 %v1936, %v1984
  %v2007 = vsub.f32 %v1941, %v1987
  %v2008 = vsub.f32 %v1946, %v1990
  %v2009 = vsub.f32 %v1951, %v1993
  %v2010 = vsub.f32 %v1956, %v1996
  %v2011 = vsub.f32 %v1961, %v1999
  %v2012 = vmul.f32 %v2000, 1.442695
  %v2013 = vpow.pop %v2012
  %v2014 = vmul.f32 %v2001, 1.442695
  %v2015 = vpow.pop %v2014
  %v2016 = vmul.f32 %v2002, 1.442695
  %v2017 = vpow.pop %v2016
  %v2018 = vmul.f32 %v2003, 1.442695
  %v2019 = vpow.pop %v2018
  %v2020 = vmul.f32 %v2004, 1.442695
  %v2021 = vpow.pop %v2020
  %v2022 = vmul.f32 %v2005, 1.442695
  %v2023 = vpow.pop %v2022
  %v2024 = vmul.f32 %v2006, 1.442695
  %v2025 = vpow.pop %v2024
  %v2026 = vmul.f32 %v2007, 1.442695
  %v2027 = vpow.pop %v2026
  %v2028 = vmul.f32 %v2008, 1.442695
  %v2029 = vpow.pop %v2028
  %v2030 = vmul.f32 %v2009, 1.442695
  %v2031 = vpow.pop %v2030
  %v2032 = vmul.f32 %v2010, 1.442695
  %v2033 = vpow.pop %v2032
  %v2034 = vmul.f32 %v2011, 1.442695
  %v2035 = vpow.pop %v2034
  %v2036 = vsel %vm1464, %v2013, 0.0
  %2037 = vadd.xlane.f32.xlu0 %v2036
  %v2038 = vpop.xlane.xlu0 %2037
  %v2039 = vsel %vm1464, %v2015, 0.0
  %2040 = vadd.xlane.f32.xlu0 %v2039
  %v2041 = vpop.xlane.xlu0 %2040
  %v2042 = vsel %vm1464, %v2017, 0.0
  %2043 = vadd.xlane.f32.xlu0 %v2042
  %v2044 = vpop.xlane.xlu0 %2043
  %v2045 = vsel %vm1464, %v2019, 0.0
  %2046 = vadd.xlane.f32.xlu0 %v2045
  %v2047 = vpop.xlane.xlu0 %2046
  %v2048 = vsel %vm1464, %v2021, 0.0
  %2049 = vadd.xlane.f32.xlu0 %v2048
  %v2050 = vpop.xlane.xlu0 %2049
  %v2051 = vsel %vm1464, %v2023, 0.0
  %2052 = vadd.xlane.f32.xlu0 %v2051
  %v2053 = vpop.xlane.xlu0 %2052
  %v2054 = vsel %vm1464, %v2025, 0.0
  %2055 = vadd.xlane.f32.xlu0 %v2054
  %v2056 = vpop.xlane.xlu0 %2055
  %v2057 = vsel %vm1464, %v2027, 0.0
  %2058 = vadd.xlane.f32.xlu0 %v2057
  %v2059 = vpop.xlane.xlu0 %2058
  %v2060 = vsel %vm1464, %v2029, 0.0
  %2061 = vadd.xlane.f32.xlu0 %v2060
  %v2062 = vpop.xlane.xlu0 %2061
  %v2063 = vsel %vm1464, %v2031, 0.0
  %2064 = vadd.xlane.f32.xlu0 %v2063
  %v2065 = vpop.xlane.xlu0 %2064
  %v2066 = vsel %vm1464, %v2033, 0.0
  %2067 = vadd.xlane.f32.xlu0 %v2066
  %v2068 = vpop.xlane.xlu0 %2067
  %v2069 = vsel %vm1464, %v2035, 0.0
  %2070 = vadd.xlane.f32.xlu0 %v2069
  %v2071 = vpop.xlane.xlu0 %2070
  %v2072 = vrcp.pop %v2038
  %v2073 = vrcp.pop %v2041
  %v2074 = vrcp.pop %v2044
  %v2075 = vrcp.pop %v2047
  %v2076 = vrcp.pop %v2050
  %v2077 = vrcp.pop %v2053
  %v2078 = vrcp.pop %v2056
  %v2079 = vrcp.pop %v2059
  %v2080 = vrcp.pop %v2062
  %v2081 = vrcp.pop %v2065
  %v2082 = vrcp.pop %v2068
  %v2083 = vrcp.pop %v2071
  %v2084 = vmul.f32 %v2013, %v2072
  %v2085 = vmul.f32 %v2015, %v2073
  %v2086 = vmul.f32 %v2017, %v2074
  %v2087 = vmul.f32 %v2019, %v2075
  %v2088 = vmul.f32 %v2021, %v2076
  %v2089 = vmul.f32 %v2023, %v2077
  %v2090 = vmul.f32 %v2025, %v2078
  %v2091 = vmul.f32 %v2027, %v2079
  %v2092 = vmul.f32 %v2029, %v2080
  %v2093 = vmul.f32 %v2031, %v2081
  %v2094 = vmul.f32 %v2033, %v2082
  %v2095 = vmul.f32 %v2035, %v2083
  %v2097 = vsel %vm1464, %v2084, 0
  %v2100 = vsel %vm1464, %v2085, 0
  %v2103 = vsel %vm1464, %v2086, 0
  %v2106 = vsel %vm1464, %v2087, 0
  %v2109 = vsel %vm1464, %v2088, 0
  %v2112 = vsel %vm1464, %v2089, 0
  %v2115 = vsel %vm1464, %v2090, 0
  %v2118 = vsel %vm1464, %v2091, 0
  %v2121 = vsel %vm1464, %v2092, 0
  %v2124 = vsel %vm1464, %v2093, 0
  %v2127 = vsel %vm1464, %v2094, 0
  %v2130 = vsel %vm1464, %v2095, 0
  %2132 = vmatprep.subr.mxu0 0.0
  %2133 = vmatpush1.msra.mxu0 %v1598
  %2134 = vmatprep.subr.mxu0 0.0
  %2135 = vmatpush1.msra.mxu0 %v1600
  %2136 = vmatprep.subr.mxu0 0.0
  %2137 = vmatpush1.msra.mxu0 %v1602
  %2138 = vmatprep.subr.mxu0 0.0
  %2139 = vmatpush1.msra.mxu0 0.0
  %2140 = vmatprep.subr.mxu0 0.0
  %2141 = vmatpush1.msra.mxu0 0.0
  %2142 = vmatprep.subr.mxu0 0.0
  %2143 = vmatpush1.msra.mxu0 0.0
  %2144 = vmatprep.subr.mxu0 0.0
  %2145 = vmatpush1.msra.mxu0 0.0
  %2146 = vmatprep.subr.mxu0 0.0
  %2147 = vmatpush1.msra.mxu0 0.0
  %2148 = vmatprep.subr.mxu0 0.0
  %2149 = vmatpush1.msra.mxu0 0.0
  %2150 = vmatprep.subr.mxu0 0.0
  %2151 = vmatpush1.msra.mxu0 0.0
  %2152 = vmatprep.subr.mxu0 0.0
  %2153 = vmatpush1.msra.mxu0 0.0
  %2154 = vmatprep.subr.mxu0 0.0
  %2155 = vmatpush1.msra.mxu0 0.0
  %2156 = vmatprep.subr.mxu0 0.0
  %2157 = vmatpush1.msra.mxu0 0.0
  %2158 = vmatprep.subr.mxu0 0.0
  %2159 = vmatpush1.msra.mxu0 0.0
  %2160 = vmatprep.subr.mxu0 0.0
  %2161 = vmatpush1.msra.mxu0 0.0
  %2162 = vmatprep.subr.mxu0 0.0
  %2163 = vmatpush1.msra.mxu0 0.0
  %2164 = vmatprep.subr.mxu0 0.0
  %2165 = vmatpush1.msra.mxu0 0.0
  %2166 = vmatprep.subr.mxu0 0.0
  %2167 = vmatpush1.msra.mxu0 0.0
  %2168 = vmatprep.subr.mxu0 0.0
  %2169 = vmatpush1.msra.mxu0 0.0
  %2170 = vmatprep.subr.mxu0 0.0
  %2171 = vmatpush1.msra.mxu0 0.0
  %2172 = vmatprep.subr.mxu0 0.0
  %2173 = vmatpush1.msra.mxu0 0.0
  %2174 = vmatprep.subr.mxu0 0.0
  %2175 = vmatpush1.msra.mxu0 0.0
  %2176 = vmatprep.subr.mxu0 0.0
  %2177 = vmatpush1.msra.mxu0 0.0
  %2178 = vmatprep.subr.mxu0 0.0
  %2179 = vmatpush1.msra.mxu0 0.0
  %2180 = vmatprep.subr.mxu0 0.0
  %2181 = vmatpush1.msra.mxu0 0.0
  %2182 = vmatprep.subr.mxu0 0.0
  %2183 = vmatpush1.msra.mxu0 0.0
  %2184 = vmatprep.subr.mxu0 0.0
  %2185 = vmatpush1.msra.mxu0 0.0
  %2186 = vmatprep.subr.mxu0 0.0
  %2187 = vmatpush1.msra.mxu0 0.0
  %2188 = vmatprep.subr.mxu0 0.0
  %2189 = vmatpush1.msra.mxu0 0.0
  %2190 = vmatprep.subr.mxu0 0.0
  %2191 = vmatpush1.msra.mxu0 0.0
  %2192 = vmatprep.subr.mxu0 0.0
  %2193 = vmatpush1.msra.mxu0 0.0
  %2194 = vmatprep.subr.mxu0 0.0
  %2195 = vmatpush1.msra.mxu0 0.0
  %2196 = vmatprep.mubr.f32.mxu0 0.0
  %2197 = vmatmul.mubr.f32.gmra.mrb[0].mxu0 %v2097
  %v2198 = vpop.f32.mrb[0].mxu0
  %v2199 = vadd.f32 0.0, %v2198
  %v2200 = vpop.f32.mrb[0].mxu0
  %2201 = vmatprep.mubr.f32.mxu0 0.0
  %2202 = vmatmul.mubr.f32.gmra.mrb[0].mxu0 %v2100
  %v2203 = vpop.f32.mrb[0].mxu0
  %v2204 = vadd.f32 0.0, %v2203
  %v2205 = vpop.f32.mrb[0].mxu0
  %2206 = vmatprep.mubr.f32.mxu0 0.0
  %2207 = vmatmul.mubr.f32.gmra.mrb[0].mxu0 %v2103
  %v2208 = vpop.f32.mrb[0].mxu0
  %v2209 = vadd.f32 0.0, %v2208
  %v2210 = vpop.f32.mrb[0].mxu0
  %2211 = vmatprep.mubr.f32.mxu0 0.0
  %2212 = vmatmul.mubr.f32.gmra.mrb[0].mxu0 %v2106
  %v2213 = vpop.f32.mrb[0].mxu0
  %v2214 = vadd.f32 0.0, %v2213
  %v2215 = vpop.f32.mrb[0].mxu0
  %2216 = vmatprep.mubr.f32.mxu0 0.0
  %2217 = vmatmul.mubr.f32.gmra.mrb[0].mxu0 %v2109
  %v2218 = vpop.f32.mrb[0].mxu0
  %v2219 = vadd.f32 0.0, %v2218
  %v2220 = vpop.f32.mrb[0].mxu0
  %2221 = vmatprep.mubr.f32.mxu0 0.0
  %2222 = vmatmul.mubr.f32.gmra.mrb[0].mxu0 %v2112
  %v2223 = vpop.f32.mrb[0].mxu0
  %v2224 = vadd.f32 0.0, %v2223
  %v2225 = vpop.f32.mrb[0].mxu0
  %2226 = vmatprep.mubr.f32.mxu0 0.0
  %2227 = vmatmul.mubr.f32.gmra.mrb[0].mxu0 %v2115
  %v2228 = vpop.f32.mrb[0].mxu0
  %v2229 = vadd.f32 0.0, %v2228
  %v2230 = vpop.f32.mrb[0].mxu0
  %2231 = vmatprep.mubr.f32.mxu0 0.0
  %2232 = vmatmul.mubr.f32.gmra.mrb[0].mxu0 %v2118
  %v2233 = vpop.f32.mrb[0].mxu0
  %v2234 = vadd.f32 0.0, %v2233
  %v2235 = vpop.f32.mrb[0].mxu0
  %2236 = vmatprep.mubr.f32.mxu0 0.0
  %2237 = vmatmul.mubr.f32.gmra.mrb[0].mxu0 %v2121
  %v2238 = vpop.f32.mrb[0].mxu0
  %v2239 = vadd.f32 0.0, %v2238
  %v2240 = vpop.f32.mrb[0].mxu0
  %2241 = vmatprep.mubr.f32.mxu0 0.0
  %2242 = vmatmul.mubr.f32.gmra.mrb[0].mxu0 %v2124
  %v2243 = vpop.f32.mrb[0].mxu0
  %v2244 = vadd.f32 0.0, %v2243
  %v2245 = vpop.f32.mrb[0].mxu0
  %2246 = vmatprep.mubr.f32.mxu0 0.0
  %2247 = vmatmul.mubr.f32.gmra.mrb[0].mxu0 %v2127
  %v2248 = vpop.f32.mrb[0].mxu0
  %v2249 = vadd.f32 0.0, %v2248
  %v2250 = vpop.f32.mrb[0].mxu0
  %2251 = vmatprep.mubr.f32.mxu0 0.0
  %2252 = vmatmul.mubr.f32.gmra.mrb[0].mxu0 %v2130
  %v2253 = vpop.f32.mrb[0].mxu0
  %v2254 = vadd.f32 0.0, %v2253
  %v2255 = vpop.f32.mrb[0].mxu0
  %2256 = vdwg.mxu0
  %v2257 = vmul.f32 %v2199, %v1779
  %v2258 = vmul.f32 %v2204, %v1780
  %v2259 = vmul.f32 %v2209, %v1781
  %v2260 = vmul.f32 %v2214, %v1782
  %v2261 = vmul.f32 %v2219, %v1783
  %v2262 = vmul.f32 %v2224, %v1784
  %v2263 = vmul.f32 %v2229, %v1785
  %v2264 = vmul.f32 %v2234, %v1786
  %v2265 = vmul.f32 %v2239, %v1787
  %v2266 = vmul.f32 %v2244, %v1788
  %v2267 = vmul.f32 %v2249, %v1789
  %v2268 = vmul.f32 %v2254, %v1790
  %vm2269 = vcmask 785408
  %v2271 = vsel %vm2269, %v1261, 0
  %v2274 = vsel %vm2269, %v1262, 0
  %v2277 = vsel %vm2269, %v1263, 0
  %2279 = vmatprep.subr.mxu0 0.0
  %2280 = vmatpush1.msra.mxu0 %v2257
  %2281 = vmatprep.subr.mxu0 0.0
  %2282 = vmatpush1.msra.mxu0 %v2258
  %2283 = vmatprep.subr.mxu0 0.0
  %2284 = vmatpush1.msra.mxu0 %v2259
  %2285 = vmatprep.subr.mxu0 0.0
  %2286 = vmatpush1.msra.mxu0 %v2260
  %2287 = vmatprep.subr.mxu0 0.0
  %2288 = vmatpush1.msra.mxu0 %v2261
  %2289 = vmatprep.subr.mxu0 0.0
  %2290 = vmatpush1.msra.mxu0 %v2262
  %2291 = vmatprep.subr.mxu0 0.0
  %2292 = vmatpush1.msra.mxu0 %v2263
  %2293 = vmatprep.subr.mxu0 0.0
  %2294 = vmatpush1.msra.mxu0 %v2264
  %2295 = vmatprep.subr.mxu0 0.0
  %2296 = vmatpush1.msra.mxu0 %v2265
  %2297 = vmatprep.subr.mxu0 0.0
  %2298 = vmatpush1.msra.mxu0 %v2266
  %2299 = vmatprep.subr.mxu0 0.0
  %2300 = vmatpush1.msra.mxu0 %v2267
  %2301 = vmatprep.subr.mxu0 0.0
  %2302 = vmatpush1.msra.mxu0 %v2268
  %2303 = vmatprep.subr.mxu0 0.0
  %2304 = vmatpush1.msra.mxu0 0.0
  %2305 = vmatprep.subr.mxu0 0.0
  %2306 = vmatpush1.msra.mxu0 0.0
  %2307 = vmatprep.subr.mxu0 0.0
  %2308 = vmatpush1.msra.mxu0 0.0
  %2309 = vmatprep.subr.mxu0 0.0
  %2310 = vmatpush1.msra.mxu0 0.0
  %2311 = vmatprep.subr.mxu0 0.0
  %2312 = vmatpush1.msra.mxu0 0.0
  %2313 = vmatprep.subr.mxu0 0.0
  %2314 = vmatpush1.msra.mxu0 0.0
  %2315 = vmatprep.subr.mxu0 0.0
  %2316 = vmatpush1.msra.mxu0 0.0
  %2317 = vmatprep.subr.mxu0 0.0
  %2318 = vmatpush1.msra.mxu0 0.0
  %2319 = vmatprep.subr.mxu0 0.0
  %2320 = vmatpush1.msra.mxu0 0.0
  %2321 = vmatprep.subr.mxu0 0.0
  %2322 = vmatpush1.msra.mxu0 0.0
  %2323 = vmatprep.subr.mxu0 0.0
  %2324 = vmatpush1.msra.mxu0 0.0
  %2325 = vmatprep.subr.mxu0 0.0
  %2326 = vmatpush1.msra.mxu0 0.0
  %2327 = vmatprep.subr.mxu0 0.0
  %2328 = vmatpush1.msra.mxu0 0.0
  %2329 = vmatprep.subr.mxu0 0.0
  %2330 = vmatpush1.msra.mxu0 0.0
  %2331 = vmatprep.subr.mxu0 0.0
  %2332 = vmatpush1.msra.mxu0 0.0
  %2333 = vmatprep.subr.mxu0 0.0
  %2334 = vmatpush1.msra.mxu0 0.0
  %2335 = vmatprep.subr.mxu0 0.0
  %2336 = vmatpush1.msra.mxu0 0.0
  %2337 = vmatprep.subr.mxu0 0.0
  %2338 = vmatpush1.msra.mxu0 0.0
  %2339 = vmatprep.subr.mxu0 0.0
  %2340 = vmatpush1.msra.mxu0 0.0
  %2341 = vmatprep.subr.mxu0 0.0
  %2342 = vmatpush1.msra.mxu0 0.0
  %2343 = vmatprep.mubr.f32.mxu0 0.0
  %2344 = vmatmul.mubr.f32.gmra.mrb[0].mxu0 %v2271
  %v2345 = vpop.f32.mrb[0].mxu0
  %v2346 = vadd.f32 0.0, %v2345
  %v2347 = vpop.f32.mrb[0].mxu0
  %2348 = vmatprep.mubr.f32.mxu0 0.0
  %2349 = vmatmul.mubr.f32.gmra.mrb[0].mxu0 %v2274
  %v2350 = vpop.f32.mrb[0].mxu0
  %v2351 = vadd.f32 0.0, %v2350
  %v2352 = vpop.f32.mrb[0].mxu0
  %2353 = vmatprep.mubr.f32.mxu0 0.0
  %2354 = vmatmul.mubr.f32.gmra.mrb[0].mxu0 %v2277
  %v2355 = vpop.f32.mrb[0].mxu0
  %v2356 = vadd.f32 0.0, %v2355
  %v2357 = vpop.f32.mrb[0].mxu0
  %2358 = vdwg.mxu0
  %2359 = vmatprep.subr.mxu0 0.0
  %2360 = vmatpush1.msra.mxu0 %v1767
  %2361 = vmatprep.subr.mxu0 0.0
  %2362 = vmatpush1.msra.mxu0 %v1768
  %2363 = vmatprep.subr.mxu0 0.0
  %2364 = vmatpush1.msra.mxu0 %v1769
  %2365 = vmatprep.subr.mxu0 0.0
  %2366 = vmatpush1.msra.mxu0 %v1770
  %2367 = vmatprep.subr.mxu0 0.0
  %2368 = vmatpush1.msra.mxu0 %v1771
  %2369 = vmatprep.subr.mxu0 0.0
  %2370 = vmatpush1.msra.mxu0 %v1772
  %2371 = vmatprep.subr.mxu0 0.0
  %2372 = vmatpush1.msra.mxu0 %v1773
  %2373 = vmatprep.subr.mxu0 0.0
  %2374 = vmatpush1.msra.mxu0 %v1774
  %2375 = vmatprep.subr.mxu0 0.0
  %2376 = vmatpush1.msra.mxu0 %v1775
  %2377 = vmatprep.subr.mxu0 0.0
  %2378 = vmatpush1.msra.mxu0 %v1776
  %2379 = vmatprep.subr.mxu0 0.0
  %2380 = vmatpush1.msra.mxu0 %v1777
  %2381 = vmatprep.subr.mxu0 0.0
  %2382 = vmatpush1.msra.mxu0 %v1778
  %2383 = vmatprep.subr.mxu0 0.0
  %2384 = vmatpush1.msra.mxu0 0.0
  %2385 = vmatprep.subr.mxu0 0.0
  %2386 = vmatpush1.msra.mxu0 0.0
  %2387 = vmatprep.subr.mxu0 0.0
  %2388 = vmatpush1.msra.mxu0 0.0
  %2389 = vmatprep.subr.mxu0 0.0
  %2390 = vmatpush1.msra.mxu0 0.0
  %2391 = vmatprep.subr.mxu0 0.0
  %2392 = vmatpush1.msra.mxu0 0.0
  %2393 = vmatprep.subr.mxu0 0.0
  %2394 = vmatpush1.msra.mxu0 0.0
  %2395 = vmatprep.subr.mxu0 0.0
  %2396 = vmatpush1.msra.mxu0 0.0
  %2397 = vmatprep.subr.mxu0 0.0
  %2398 = vmatpush1.msra.mxu0 0.0
  %2399 = vmatprep.subr.mxu0 0.0
  %2400 = vmatpush1.msra.mxu0 0.0
  %2401 = vmatprep.subr.mxu0 0.0
  %2402 = vmatpush1.msra.mxu0 0.0
  %2403 = vmatprep.subr.mxu0 0.0
  %2404 = vmatpush1.msra.mxu0 0.0
  %2405 = vmatprep.subr.mxu0 0.0
  %2406 = vmatpush1.msra.mxu0 0.0
  %2407 = vmatprep.subr.mxu0 0.0
  %2408 = vmatpush1.msra.mxu0 0.0
  %2409 = vmatprep.subr.mxu0 0.0
  %2410 = vmatpush1.msra.mxu0 0.0
  %2411 = vmatprep.subr.mxu0 0.0
  %2412 = vmatpush1.msra.mxu0 0.0
  %2413 = vmatprep.subr.mxu0 0.0
  %2414 = vmatpush1.msra.mxu0 0.0
  %2415 = vmatprep.subr.mxu0 0.0
  %2416 = vmatpush1.msra.mxu0 0.0
  %2417 = vmatprep.subr.mxu0 0.0
  %2418 = vmatpush1.msra.mxu0 0.0
  %2419 = vmatprep.subr.mxu0 0.0
  %2420 = vmatpush1.msra.mxu0 0.0
  %2421 = vmatprep.subr.mxu0 0.0
  %2422 = vmatpush1.msra.mxu0 0.0
  %2423 = vmatprep.mubr.f32.mxu0 0.0
  %2424 = vmatmul.mubr.f32.gmra.mrb[0].mxu0 %v2271
  %v2425 = vpop.f32.mrb[0].mxu0
  %v2426 = vadd.f32 %v2346, %v2425
  %v2427 = vpop.f32.mrb[0].mxu0
  %2428 = vmatprep.mubr.f32.mxu0 0.0
  %2429 = vmatmul.mubr.f32.gmra.mrb[0].mxu0 %v2274
  %v2430 = vpop.f32.mrb[0].mxu0
  %v2431 = vadd.f32 %v2351, %v2430
  %v2432 = vpop.f32.mrb[0].mxu0
  %2433 = vmatprep.mubr.f32.mxu0 0.0
  %2434 = vmatmul.mubr.f32.gmra.mrb[0].mxu0 %v2277
  %v2435 = vpop.f32.mrb[0].mxu0
  %v2436 = vadd.f32 %v2356, %v2435
  %v2437 = vpop.f32.mrb[0].mxu0
  %2438 = vdwg.mxu0
  %v2439 = vld [vmem:[%s9 + $0x18] sm:$0xff]
  %v2440 = vld [vmem:[%s9 + $0x50] sm:$0xff]
  %v2441 = vld [vmem:[%s9 + $0x88] sm:$0xff]
  %v2442 = vld [vmem:[%s9 + $0xc0] sm:$0xff]
  %v2443 = vld [vmem:[%s11 + $0x4] sm:$0x1]
  %v2445 = vlaneseq
  %v2446 = vshrl.u32 %v2445, 7
  %v2447 = vsub.s32 0, %v2446
  %v2448 = vrot.slane %v2443, %v2447
  %v2451 = vsel %vm337, %v2426, 0
  %v2454 = vsel %vm337, %v2431, 0
  %v2457 = vsel %vm337, %v2436, 0
  %2459 = vmatprep.subr.mxu0 0.0
  %2460 = vmatpush1.msra.mxu0 %v2439
  %2461 = vmatprep.subr.mxu0 0.0
  %2462 = vmatpush1.msra.mxu0 %v2440
  %2463 = vmatprep.subr.mxu0 0.0
  %2464 = vmatpush1.msra.mxu0 %v2441
  %2465 = vmatprep.subr.mxu0 0.0
  %2466 = vmatpush1.msra.mxu0 %v2442
  %2467 = vmatprep.subr.mxu0 0.0
  %2468 = vmatpush1.msra.mxu0 0.0
  %2469 = vmatprep.subr.mxu0 0.0
  %2470 = vmatpush1.msra.mxu0 0.0
  %2471 = vmatprep.subr.mxu0 0.0
  %2472 = vmatpush1.msra.mxu0 0.0
  %2473 = vmatprep.subr.mxu0 0.0
  %2474 = vmatpush1.msra.mxu0 0.0
  %2475 = vmatprep.subr.mxu0 0.0
  %2476 = vmatpush1.msra.mxu0 0.0
  %2477 = vmatprep.subr.mxu0 0.0
  %2478 = vmatpush1.msra.mxu0 0.0
  %2479 = vmatprep.subr.mxu0 0.0
  %2480 = vmatpush1.msra.mxu0 0.0
  %2481 = vmatprep.subr.mxu0 0.0
  %2482 = vmatpush1.msra.mxu0 0.0
  %2483 = vmatprep.subr.mxu0 0.0
  %2484 = vmatpush1.msra.mxu0 0.0
  %2485 = vmatprep.subr.mxu0 0.0
  %2486 = vmatpush1.msra.mxu0 0.0
  %2487 = vmatprep.subr.mxu0 0.0
  %2488 = vmatpush1.msra.mxu0 0.0
  %2489 = vmatprep.subr.mxu0 0.0
  %2490 = vmatpush1.msra.mxu0 0.0
  %2491 = vmatprep.subr.mxu0 0.0
  %2492 = vmatpush1.msra.mxu0 0.0
  %2493 = vmatprep.subr.mxu0 0.0
  %2494 = vmatpush1.msra.mxu0 0.0
  %2495 = vmatprep.subr.mxu0 0.0
  %2496 = vmatpush1.msra.mxu0 0.0
  %2497 = vmatprep.subr.mxu0 0.0
  %2498 = vmatpush1.msra.mxu0 0.0
  %2499 = vmatprep.subr.mxu0 0.0
  %2500 = vmatpush1.msra.mxu0 0.0
  %2501 = vmatprep.subr.mxu0 0.0
  %2502 = vmatpush1.msra.mxu0 0.0
  %2503 = vmatprep.subr.mxu0 0.0
  %2504 = vmatpush1.msra.mxu0 0.0
  %2505 = vmatprep.subr.mxu0 0.0
  %2506 = vmatpush1.msra.mxu0 0.0
  %2507 = vmatprep.subr.mxu0 0.0
  %2508 = vmatpush1.msra.mxu0 0.0
  %2509 = vmatprep.subr.mxu0 0.0
  %2510 = vmatpush1.msra.mxu0 0.0
  %2511 = vmatprep.subr.mxu0 0.0
  %2512 = vmatpush1.msra.mxu0 0.0
  %2513 = vmatprep.subr.mxu0 0.0
  %2514 = vmatpush1.msra.mxu0 0.0
  %2515 = vmatprep.subr.mxu0 0.0
  %2516 = vmatpush1.msra.mxu0 0.0
  %2517 = vmatprep.subr.mxu0 0.0
  %2518 = vmatpush1.msra.mxu0 0.0
  %2519 = vmatprep.subr.mxu0 0.0
  %2520 = vmatpush1.msra.mxu0 0.0
  %2521 = vmatprep.subr.mxu0 0.0
  %2522 = vmatpush1.msra.mxu0 0.0
  %2523 = vmatprep.mubr.f32.mxu0 0.0
  %2524 = vmatmul.mubr.f32.gmra.mrb[0].mxu0 %v2451
  %v2525 = vpop.f32.mrb[0].mxu0
  %v2526 = vadd.f32 %v2448, %v2525
  %v2527 = vpop.f32.mrb[0].mxu0
  %2528 = vmatprep.mubr.f32.mxu0 0.0
  %2529 = vmatmul.mubr.f32.gmra.mrb[0].mxu0 %v2454
  %v2530 = vpop.f32.mrb[0].mxu0
  %v2531 = vadd.f32 %v2448, %v2530
  %v2532 = vpop.f32.mrb[0].mxu0
  %2533 = vmatprep.mubr.f32.mxu0 0.0
  %2534 = vmatmul.mubr.f32.gmra.mrb[0].mxu0 %v2457
  %v2535 = vpop.f32.mrb[0].mxu0
  %v2536 = vadd.f32 %v2448, %v2535
  %v2537 = vpop.f32.mrb[0].mxu0
  %2538 = vdwg.mxu0
  %v2539 = vadd.f32 %v1143, %v2526
  %v2540 = vadd.f32 %v1144, %v2531
  %v2541 = vadd.f32 %v1145, %v2536
  %v2542 = vsel %vm337, %v2539, 0.0
  %2543 = vadd.xlane.f32.xlu0 %v2542
  %v2544 = vpop.xlane.xlu0 %2543
  %v2545 = vsel %vm337, %v2540, 0.0
  %2546 = vadd.xlane.f32.xlu0 %v2545
  %v2547 = vpop.xlane.xlu0 %2546
  %v2548 = vsel %vm337, %v2541, 0.0
  %2549 = vadd.xlane.f32.xlu0 %v2548
  %v2550 = vpop.xlane.xlu0 %2549
  %v2551 = vmul.f32 %v2544, 0.03125
  %v2552 = vmul.f32 %v2547, 0.03125
  %v2553 = vmul.f32 %v2550, 0.03125
  %v2554 = vmul.f32 %v2539, %v2539
  %v2555 = vmul.f32 %v2540, %v2540
  %v2556 = vmul.f32 %v2541, %v2541
  %v2557 = vsel %vm337, %v2554, 0.0
  %2558 = vadd.xlane.f32.xlu0 %v2557
  %v2559 = vpop.xlane.xlu0 %2558
  %v2560 = vsel %vm337, %v2555, 0.0
  %2561 = vadd.xlane.f32.xlu0 %v2560
  %v2562 = vpop.xlane.xlu0 %2561
  %v2563 = vsel %vm337, %v2556, 0.0
  %2564 = vadd.xlane.f32.xlu0 %v2563
  %v2565 = vpop.xlane.xlu0 %2564
  %v2566 = vmul.f32 %v2559, 0.03125
  %v2567 = vmul.f32 %v2562, 0.03125
  %v2568 = vmul.f32 %v2565, 0.03125
  %v2569 = vmul.f32 %v2551, %v2551
  %v2570 = vmul.f32 %v2552, %v2552
  %v2571 = vmul.f32 %v2553, %v2553
  %v2572 = vsub.f32 %v2566, %v2569
  %v2573 = vsub.f32 %v2567, %v2570
  %v2574 = vsub.f32 %v2568, %v2571
  %v2575 = vmax.f32 %v2572, 0.0
  %v2576 = vmax.f32 %v2573, 0.0
  %v2577 = vmax.f32 %v2574, 0.0
  %v2578 = vsub.f32 %v2539, %v2551
  %v2579 = vsub.f32 %v2540, %v2552
  %v2580 = vsub.f32 %v2541, %v2553
  %v2581 = vadd.f32 %v2575, 1e-05
  %v2582 = vadd.f32 %v2576, 1e-05
  %v2583 = vadd.f32 %v2577, 1e-05
  %v2584 = vrsqrt.pop %v2581
  %v2585 = vrsqrt.pop %v2582
  %v2586 = vrsqrt.pop %v2583
  %v2587 = vmul.f32 %v2578, %v2584
  %v2588 = vmul.f32 %v2579, %v2585
  %v2589 = vmul.f32 %v2580, %v2586
  %v2590 = vld [vmem:[%s12 + $0x5] sm:$0x1]
  %v2591 = vlaneseq
  %v2592 = vshrl.u32 %v2591, 7
  %v2593 = vsub.s32 0, %v2592
  %v2594 = vrot.slane %v2590, %v2593
  %v2595 = vmul.f32 %v2587, %v2594
  %v2596 = vmul.f32 %v2588, %v2594
  %v2597 = vmul.f32 %v2589, %v2594
  %v2598 = vld [vmem:[%s13 + $0x5] sm:$0x1]
  %v2599 = vlaneseq
  %v2600 = vshrl.u32 %v2599, 7
  %v2601 = vsub.s32 0, %v2600
  %v2602 = vrot.slane %v2598, %v2601
  %v2603 = vadd.f32 %v2595, %v2602
  %v2604 = vadd.f32 %v2596, %v2602
  %v2605 = vadd.f32 %v2597, %v2602
  %v2606 = vld [vmem:[%s9 + $0x20] sm:$0xff]
  %v2607 = vld [vmem:[%s9 + $0x58] sm:$0xff]
  %v2608 = vld [vmem:[%s9 + $0x90] sm:$0xff]
  %v2609 = vld [vmem:[%s9 + $0xc8] sm:$0xff]
  %v2610 = vld [vmem:[%s11 + $0x5] sm:$0x1]
  %v2612 = vlaneseq
  %v2613 = vshrl.u32 %v2612, 7
  %v2614 = vsub.s32 0, %v2613
  %v2615 = vrot.slane %v2610, %v2614
  %v2618 = vsel %vm337, %v2603, 0
  %v2621 = vsel %vm337, %v2604, 0
  %v2624 = vsel %vm337, %v2605, 0
  %2626 = vmatprep.subr.mxu0 0.0
  %2627 = vmatpush1.msra.mxu0 %v2606
  %2628 = vmatprep.subr.mxu0 0.0
  %2629 = vmatpush1.msra.mxu0 %v2607
  %2630 = vmatprep.subr.mxu0 0.0
  %2631 = vmatpush1.msra.mxu0 %v2608
  %2632 = vmatprep.subr.mxu0 0.0
  %2633 = vmatpush1.msra.mxu0 %v2609
  %2634 = vmatprep.subr.mxu0 0.0
  %2635 = vmatpush1.msra.mxu0 0.0
  %2636 = vmatprep.subr.mxu0 0.0
  %2637 = vmatpush1.msra.mxu0 0.0
  %2638 = vmatprep.subr.mxu0 0.0
  %2639 = vmatpush1.msra.mxu0 0.0
  %2640 = vmatprep.subr.mxu0 0.0
  %2641 = vmatpush1.msra.mxu0 0.0
  %2642 = vmatprep.subr.mxu0 0.0
  %2643 = vmatpush1.msra.mxu0 0.0
  %2644 = vmatprep.subr.mxu0 0.0
  %2645 = vmatpush1.msra.mxu0 0.0
  %2646 = vmatprep.subr.mxu0 0.0
  %2647 = vmatpush1.msra.mxu0 0.0
  %2648 = vmatprep.subr.mxu0 0.0
  %2649 = vmatpush1.msra.mxu0 0.0
  %2650 = vmatprep.subr.mxu0 0.0
  %2651 = vmatpush1.msra.mxu0 0.0
  %2652 = vmatprep.subr.mxu0 0.0
  %2653 = vmatpush1.msra.mxu0 0.0
  %2654 = vmatprep.subr.mxu0 0.0
  %2655 = vmatpush1.msra.mxu0 0.0
  %2656 = vmatprep.subr.mxu0 0.0
  %2657 = vmatpush1.msra.mxu0 0.0
  %2658 = vmatprep.subr.mxu0 0.0
  %2659 = vmatpush1.msra.mxu0 0.0
  %2660 = vmatprep.subr.mxu0 0.0
  %2661 = vmatpush1.msra.mxu0 0.0
  %2662 = vmatprep.subr.mxu0 0.0
  %2663 = vmatpush1.msra.mxu0 0.0
  %2664 = vmatprep.subr.mxu0 0.0
  %2665 = vmatpush1.msra.mxu0 0.0
  %2666 = vmatprep.subr.mxu0 0.0
  %2667 = vmatpush1.msra.mxu0 0.0
  %2668 = vmatprep.subr.mxu0 0.0
  %2669 = vmatpush1.msra.mxu0 0.0
  %2670 = vmatprep.subr.mxu0 0.0
  %2671 = vmatpush1.msra.mxu0 0.0
  %2672 = vmatprep.subr.mxu0 0.0
  %2673 = vmatpush1.msra.mxu0 0.0
  %2674 = vmatprep.subr.mxu0 0.0
  %2675 = vmatpush1.msra.mxu0 0.0
  %2676 = vmatprep.subr.mxu0 0.0
  %2677 = vmatpush1.msra.mxu0 0.0
  %2678 = vmatprep.subr.mxu0 0.0
  %2679 = vmatpush1.msra.mxu0 0.0
  %2680 = vmatprep.subr.mxu0 0.0
  %2681 = vmatpush1.msra.mxu0 0.0
  %2682 = vmatprep.subr.mxu0 0.0
  %2683 = vmatpush1.msra.mxu0 0.0
  %2684 = vmatprep.subr.mxu0 0.0
  %2685 = vmatpush1.msra.mxu0 0.0
  %2686 = vmatprep.subr.mxu0 0.0
  %2687 = vmatpush1.msra.mxu0 0.0
  %2688 = vmatprep.subr.mxu0 0.0
  %2689 = vmatpush1.msra.mxu0 0.0
  %2690 = vmatprep.mubr.f32.mxu0 0.0
  %2691 = vmatmul.mubr.f32.gmra.mrb[0].mxu0 %v2618
  %v2692 = vpop.f32.mrb[0].mxu0
  %v2693 = vadd.f32 %v2615, %v2692
  %v2694 = vpop.f32.mrb[0].mxu0
  %2695 = vmatprep.mubr.f32.mxu0 0.0
  %2696 = vmatmul.mubr.f32.gmra.mrb[0].mxu0 %v2621
  %v2697 = vpop.f32.mrb[0].mxu0
  %v2698 = vadd.f32 %v2615, %v2697
  %v2699 = vpop.f32.mrb[0].mxu0
  %2700 = vmatprep.mubr.f32.mxu0 0.0
  %2701 = vmatmul.mubr.f32.gmra.mrb[0].mxu0 %v2624
  %v2702 = vpop.f32.mrb[0].mxu0
  %v2703 = vadd.f32 %v2615, %v2702
  %v2704 = vpop.f32.mrb[0].mxu0
  %2705 = vdwg.mxu0
  %v2706 = vmax.f32 %v2693, 0.0
  %v2707 = vmax.f32 %v2698, 0.0
  %v2708 = vmax.f32 %v2703, 0.0
  %v2709 = vld [vmem:[%s10] sm:$0xff]
  %v2710 = vld [vmem:[%s10 + $0x8] sm:$0xff]
  %v2711 = vld [vmem:[%s10 + $0x10] sm:$0xff]
  %v2712 = vld [vmem:[%s10 + $0x18] sm:$0xff]
  %v2713 = vld [vmem:[%s10 + $0x20] sm:$0xff]
  %v2714 = vld [vmem:[%s10 + $0x28] sm:$0xff]
  %v2715 = vld [vmem:[%s10 + $0x30] sm:$0xff]
  %v2716 = vld [vmem:[%s10 + $0x38] sm:$0xff]
  %v2717 = vld [vmem:[%s10 + $0x40] sm:$0xff]
  %v2718 = vld [vmem:[%s10 + $0x48] sm:$0xff]
  %v2719 = vld [vmem:[%s10 + $0x50] sm:$0xff]
  %v2720 = vld [vmem:[%s10 + $0x58] sm:$0xff]
  %v2721 = vld [vmem:[%s10 + $0x60] sm:$0xff]
  %v2722 = vld [vmem:[%s10 + $0x68] sm:$0xff]
  %v2723 = vld [vmem:[%s10 + $0x70] sm:$0xff]
  %v2724 = vld [vmem:[%s10 + $0x78] sm:$0xff]
  %v2725 = vld [vmem:[%s11 + $0x6] sm:$0x1]
  %v2727 = vlaneseq
  %v2728 = vshrl.u32 %v2727, 7
  %v2729 = vsub.s32 0, %v2728
  %v2730 = vrot.slane %v2725, %v2729
  %2732 = vmatprep.subr.mxu0 0.0
  %2733 = vmatpush1.msra.mxu0 %v2709
  %2734 = vmatprep.subr.mxu0 0.0
  %2735 = vmatpush1.msra.mxu0 %v2710
  %2736 = vmatprep.subr.mxu0 0.0
  %2737 = vmatpush1.msra.mxu0 %v2711
  %2738 = vmatprep.subr.mxu0 0.0
  %2739 = vmatpush1.msra.mxu0 %v2712
  %2740 = vmatprep.subr.mxu0 0.0
  %2741 = vmatpush1.msra.mxu0 %v2713
  %2742 = vmatprep.subr.mxu0 0.0
  %2743 = vmatpush1.msra.mxu0 %v2714
  %2744 = vmatprep.subr.mxu0 0.0
  %2745 = vmatpush1.msra.mxu0 %v2715
  %2746 = vmatprep.subr.mxu0 0.0
  %2747 = vmatpush1.msra.mxu0 %v2716
  %2748 = vmatprep.subr.mxu0 0.0
  %2749 = vmatpush1.msra.mxu0 %v2717
  %2750 = vmatprep.subr.mxu0 0.0
  %2751 = vmatpush1.msra.mxu0 %v2718
  %2752 = vmatprep.subr.mxu0 0.0
  %2753 = vmatpush1.msra.mxu0 %v2719
  %2754 = vmatprep.subr.mxu0 0.0
  %2755 = vmatpush1.msra.mxu0 %v2720
  %2756 = vmatprep.subr.mxu0 0.0
  %2757 = vmatpush1.msra.mxu0 %v2721
  %2758 = vmatprep.subr.mxu0 0.0
  %2759 = vmatpush1.msra.mxu0 %v2722
  %2760 = vmatprep.subr.mxu0 0.0
  %2761 = vmatpush1.msra.mxu0 %v2723
  %2762 = vmatprep.subr.mxu0 0.0
  %2763 = vmatpush1.msra.mxu0 %v2724
  %2764 = vmatprep.subr.mxu0 0.0
  %2765 = vmatpush1.msra.mxu0 0.0
  %2766 = vmatprep.subr.mxu0 0.0
  %2767 = vmatpush1.msra.mxu0 0.0
  %2768 = vmatprep.subr.mxu0 0.0
  %2769 = vmatpush1.msra.mxu0 0.0
  %2770 = vmatprep.subr.mxu0 0.0
  %2771 = vmatpush1.msra.mxu0 0.0
  %2772 = vmatprep.subr.mxu0 0.0
  %2773 = vmatpush1.msra.mxu0 0.0
  %2774 = vmatprep.subr.mxu0 0.0
  %2775 = vmatpush1.msra.mxu0 0.0
  %2776 = vmatprep.subr.mxu0 0.0
  %2777 = vmatpush1.msra.mxu0 0.0
  %2778 = vmatprep.subr.mxu0 0.0
  %2779 = vmatpush1.msra.mxu0 0.0
  %2780 = vmatprep.subr.mxu0 0.0
  %2781 = vmatpush1.msra.mxu0 0.0
  %2782 = vmatprep.subr.mxu0 0.0
  %2783 = vmatpush1.msra.mxu0 0.0
  %2784 = vmatprep.subr.mxu0 0.0
  %2785 = vmatpush1.msra.mxu0 0.0
  %2786 = vmatprep.subr.mxu0 0.0
  %2787 = vmatpush1.msra.mxu0 0.0
  %2788 = vmatprep.subr.mxu0 0.0
  %2789 = vmatpush1.msra.mxu0 0.0
  %2790 = vmatprep.subr.mxu0 0.0
  %2791 = vmatpush1.msra.mxu0 0.0
  %2792 = vmatprep.subr.mxu0 0.0
  %2793 = vmatpush1.msra.mxu0 0.0
  %2794 = vmatprep.subr.mxu0 0.0
  %2795 = vmatpush1.msra.mxu0 0.0
  %2796 = vmatprep.mubr.f32.mxu0 0.0
  %2797 = vmatmul.mubr.f32.gmra.mrb[0].mxu0 %v2706
  %v2798 = vpop.f32.mrb[0].mxu0
  %v2799 = vadd.f32 %v2730, %v2798
  %v2800 = vpop.f32.mrb[0].mxu0
  %2801 = vmatprep.mubr.f32.mxu0 0.0
  %2802 = vmatmul.mubr.f32.gmra.mrb[0].mxu0 %v2707
  %v2803 = vpop.f32.mrb[0].mxu0
  %v2804 = vadd.f32 %v2730, %v2803
  %v2805 = vpop.f32.mrb[0].mxu0
  %2806 = vmatprep.mubr.f32.mxu0 0.0
  %2807 = vmatmul.mubr.f32.gmra.mrb[0].mxu0 %v2708
  %v2808 = vpop.f32.mrb[0].mxu0
  %v2809 = vadd.f32 %v2730, %v2808
  %v2810 = vpop.f32.mrb[0].mxu0
  %2811 = vdwg.mxu0
  %v2812 = vadd.f32 %v2603, %v2799
  %v2813 = vadd.f32 %v2604, %v2804
  %v2814 = vadd.f32 %v2605, %v2809
  %v2815 = vsel %vm337, %v2812, 0.0
  %2816 = vadd.xlane.f32.xlu0 %v2815
  %v2817 = vpop.xlane.xlu0 %2816
  %v2818 = vsel %vm337, %v2813, 0.0
  %2819 = vadd.xlane.f32.xlu0 %v2818
  %v2820 = vpop.xlane.xlu0 %2819
  %v2821 = vsel %vm337, %v2814, 0.0
  %2822 = vadd.xlane.f32.xlu0 %v2821
  %v2823 = vpop.xlane.xlu0 %2822
  %v2824 = vmul.f32 %v2817, 0.03125
  %v2825 = vmul.f32 %v2820, 0.03125
  %v2826 = vmul.f32 %v2823, 0.03125
  %v2827 = vmul.f32 %v2812, %v2812
  %v2828 = vmul.f32 %v2813, %v2813
  %v2829 = vmul.f32 %v2814, %v2814
  %v2830 = vsel %vm337, %v2827, 0.0
  %2831 = vadd.xlane.f32.xlu0 %v2830
  %v2832 = vpop.xlane.xlu0 %2831
  %v2833 = vsel %vm337, %v2828, 0.0
  %2834 = vadd.xlane.f32.xlu0 %v2833
  %v2835 = vpop.xlane.xlu0 %2834
  %v2836 = vsel %vm337, %v2829, 0.0
  %2837 = vadd.xlane.f32.xlu0 %v2836
  %v2838 = vpop.xlane.xlu0 %2837
  %v2839 = vmul.f32 %v2832, 0.03125
  %v2840 = vmul.f32 %v2835, 0.03125
  %v2841 = vmul.f32 %v2838, 0.03125
  %v2842 = vmul.f32 %v2824, %v2824
  %v2843 = vmul.f32 %v2825, %v2825
  %v2844 = vmul.f32 %v2826, %v2826
  %v2845 = vsub.f32 %v2839, %v2842
  %v2846 = vsub.f32 %v2840, %v2843
  %v2847 = vsub.f32 %v2841, %v2844
  %v2848 = vmax.f32 %v2845, 0.0
  %v2849 = vmax.f32 %v2846, 0.0
  %v2850 = vmax.f32 %v2847, 0.0
  %v2851 = vsub.f32 %v2812, %v2824
  %v2852 = vsub.f32 %v2813, %v2825
  %v2853 = vsub.f32 %v2814, %v2826
  %v2854 = vadd.f32 %v2848, 1e-05
  %v2855 = vadd.f32 %v2849, 1e-05
  %v2856 = vadd.f32 %v2850, 1e-05
  %v2857 = vrsqrt.pop %v2854
  %v2858 = vrsqrt.pop %v2855
  %v2859 = vrsqrt.pop %v2856
  %v2860 = vmul.f32 %v2851, %v2857
  %v2861 = vmul.f32 %v2852, %v2858
  %v2862 = vmul.f32 %v2853, %v2859
  %v2863 = vld [vmem:[%s12 + $0x6] sm:$0x1]
  %v2864 = vlaneseq
  %v2865 = vshrl.u32 %v2864, 7
  %v2866 = vsub.s32 0, %v2865
  %v2867 = vrot.slane %v2863, %v2866
  %v2868 = vmul.f32 %v2860, %v2867
  %v2869 = vmul.f32 %v2861, %v2867
  %v2870 = vmul.f32 %v2862, %v2867
  %v2871 = vld [vmem:[%s13 + $0x6] sm:$0x1]
  %v2872 = vlaneseq
  %v2873 = vshrl.u32 %v2872, 7
  %v2874 = vsub.s32 0, %v2873
  %v2875 = vrot.slane %v2871, %v2874
  %v2876 = vadd.f32 %v2868, %v2875
  %v2877 = vadd.f32 %v2869, %v2875
  %v2878 = vadd.f32 %v2870, %v2875
  %2879 = vst.msk [vmem:[%s16] sm:$0xff] %vm337, %v2876
  %2880 = vst.msk [vmem:[%s16 + $0x8] sm:$0xff] %vm337, %v2877
  %2881 = vst.msk [vmem:[%s16 + $0x10] sm:$0xff] %vm337, %v2878
  %v2882 = vld [vmem:[%s9 + $0x28] sm:$0xff]
  %v2883 = vld [vmem:[%s9 + $0x60] sm:$0xff]
  %v2884 = vld [vmem:[%s9 + $0x98] sm:$0xff]
  %v2885 = vld [vmem:[%s9 + $0xd0] sm:$0xff]
  %v2886 = vld [vmem:[%s11 + $0x7] sm:$0x1]
  %v2888 = vlaneseq
  %v2889 = vshrl.u32 %v2888, 7
  %v2890 = vsub.s32 0, %v2889
  %v2891 = vrot.slane %v2886, %v2890
  %v2894 = vsel %vm337, %v2876, 0
  %v2897 = vsel %vm337, %v2877, 0
  %v2900 = vsel %vm337, %v2878, 0
  %2902 = vmatprep.subr.mxu0 0.0
  %2903 = vmatpush1.msra.mxu0 %v2882
  %2904 = vmatprep.subr.mxu0 0.0
  %2905 = vmatpush1.msra.mxu0 %v2883
  %2906 = vmatprep.subr.mxu0 0.0
  %2907 = vmatpush1.msra.mxu0 %v2884
  %2908 = vmatprep.subr.mxu0 0.0
  %2909 = vmatpush1.msra.mxu0 %v2885
  %2910 = vmatprep.subr.mxu0 0.0
  %2911 = vmatpush1.msra.mxu0 0.0
  %2912 = vmatprep.subr.mxu0 0.0
  %2913 = vmatpush1.msra.mxu0 0.0
  %2914 = vmatprep.subr.mxu0 0.0
  %2915 = vmatpush1.msra.mxu0 0.0
  %2916 = vmatprep.subr.mxu0 0.0
  %2917 = vmatpush1.msra.mxu0 0.0
  %2918 = vmatprep.subr.mxu0 0.0
  %2919 = vmatpush1.msra.mxu0 0.0
  %2920 = vmatprep.subr.mxu0 0.0
  %2921 = vmatpush1.msra.mxu0 0.0
  %2922 = vmatprep.subr.mxu0 0.0
  %2923 = vmatpush1.msra.mxu0 0.0
  %2924 = vmatprep.subr.mxu0 0.0
  %2925 = vmatpush1.msra.mxu0 0.0
  %2926 = vmatprep.subr.mxu0 0.0
  %2927 = vmatpush1.msra.mxu0 0.0
  %2928 = vmatprep.subr.mxu0 0.0
  %2929 = vmatpush1.msra.mxu0 0.0
  %2930 = vmatprep.subr.mxu0 0.0
  %2931 = vmatpush1.msra.mxu0 0.0
  %2932 = vmatprep.subr.mxu0 0.0
  %2933 = vmatpush1.msra.mxu0 0.0
  %2934 = vmatprep.subr.mxu0 0.0
  %2935 = vmatpush1.msra.mxu0 0.0
  %2936 = vmatprep.subr.mxu0 0.0
  %2937 = vmatpush1.msra.mxu0 0.0
  %2938 = vmatprep.subr.mxu0 0.0
  %2939 = vmatpush1.msra.mxu0 0.0
  %2940 = vmatprep.subr.mxu0 0.0
  %2941 = vmatpush1.msra.mxu0 0.0
  %2942 = vmatprep.subr.mxu0 0.0
  %2943 = vmatpush1.msra.mxu0 0.0
  %2944 = vmatprep.subr.mxu0 0.0
  %2945 = vmatpush1.msra.mxu0 0.0
  %2946 = vmatprep.subr.mxu0 0.0
  %2947 = vmatpush1.msra.mxu0 0.0
  %2948 = vmatprep.subr.mxu0 0.0
  %2949 = vmatpush1.msra.mxu0 0.0
  %2950 = vmatprep.subr.mxu0 0.0
  %2951 = vmatpush1.msra.mxu0 0.0
  %2952 = vmatprep.subr.mxu0 0.0
  %2953 = vmatpush1.msra.mxu0 0.0
  %2954 = vmatprep.subr.mxu0 0.0
  %2955 = vmatpush1.msra.mxu0 0.0
  %2956 = vmatprep.subr.mxu0 0.0
  %2957 = vmatpush1.msra.mxu0 0.0
  %2958 = vmatprep.subr.mxu0 0.0
  %2959 = vmatpush1.msra.mxu0 0.0
  %2960 = vmatprep.subr.mxu0 0.0
  %2961 = vmatpush1.msra.mxu0 0.0
  %2962 = vmatprep.subr.mxu0 0.0
  %2963 = vmatpush1.msra.mxu0 0.0
  %2964 = vmatprep.subr.mxu0 0.0
  %2965 = vmatpush1.msra.mxu0 0.0
  %2966 = vmatprep.mubr.f32.mxu0 0.0
  %2967 = vmatmul.mubr.f32.gmra.mrb[0].mxu0 %v2894
  %v2968 = vpop.f32.mrb[0].mxu0
  %v2969 = vadd.f32 %v2891, %v2968
  %v2970 = vpop.f32.mrb[0].mxu0
  %2971 = vmatprep.mubr.f32.mxu0 0.0
  %2972 = vmatmul.mubr.f32.gmra.mrb[0].mxu0 %v2897
  %v2973 = vpop.f32.mrb[0].mxu0
  %v2974 = vadd.f32 %v2891, %v2973
  %v2975 = vpop.f32.mrb[0].mxu0
  %2976 = vmatprep.mubr.f32.mxu0 0.0
  %2977 = vmatmul.mubr.f32.gmra.mrb[0].mxu0 %v2900
  %v2978 = vpop.f32.mrb[0].mxu0
  %v2979 = vadd.f32 %v2891, %v2978
  %v2980 = vpop.f32.mrb[0].mxu0
  %2981 = vdwg.mxu0
  %v2982 = vmax.f32 %v2969, 0.0
  %v2983 = vmax.f32 %v2974, 0.0
  %v2984 = vmax.f32 %v2979, 0.0
  %2988 = vrot.lane.b32.xlu0 %v2969, 96
  %v2989 = vpop.permute.xlu0 %2988
  %2990 = vrot.lane.b32.xlu0 %v2974, 96
  %v2991 = vpop.permute.xlu0 %2990
  %2992 = vrot.lane.b32.xlu0 %v2979, 96
  %v2993 = vpop.permute.xlu0 %2992
  %v2997 = vsel %vm337, %v2989, 0.0
  %2998 = vadd.xlane.f32.xlu0 %v2997
  %v2999 = vpop.xlane.xlu0 %2998
  %v3000 = vsel %vm337, %v2991, 0.0
  %3001 = vadd.xlane.f32.xlu0 %v3000
  %v3002 = vpop.xlane.xlu0 %3001
  %v3003 = vsel %vm337, %v2993, 0.0
  %3004 = vadd.xlane.f32.xlu0 %v3003
  %v3005 = vpop.xlane.xlu0 %3004
  %v3006 = vmul.f32 %v2999, 0.03125
  %v3007 = vmul.f32 %v3002, 0.03125
  %v3008 = vmul.f32 %v3005, 0.03125
  %v3009 = vmul.f32 %v2969, %v2969
  %v3010 = vmul.f32 %v2974, %v2974
  %v3011 = vmul.f32 %v2979, %v2979
  %3015 = vrot.lane.b32.xlu0 %v3009, 96
  %v3016 = vpop.permute.xlu0 %3015
  %3017 = vrot.lane.b32.xlu0 %v3010, 96
  %v3018 = vpop.permute.xlu0 %3017
  %3019 = vrot.lane.b32.xlu0 %v3011, 96
  %v3020 = vpop.permute.xlu0 %3019
  %v3024 = vsel %vm337, %v3016, 0.0
  %3025 = vadd.xlane.f32.xlu0 %v3024
  %v3026 = vpop.xlane.xlu0 %3025
  %v3027 = vsel %vm337, %v3018, 0.0
  %3028 = vadd.xlane.f32.xlu0 %v3027
  %v3029 = vpop.xlane.xlu0 %3028
  %v3030 = vsel %vm337, %v3020, 0.0
  %3031 = vadd.xlane.f32.xlu0 %v3030
  %v3032 = vpop.xlane.xlu0 %3031
  %v3033 = vmul.f32 %v3026, 0.03125
  %v3034 = vmul.f32 %v3029, 0.03125
  %v3035 = vmul.f32 %v3032, 0.03125
  %v3036 = vmul.f32 %v3006, %v3006
  %v3037 = vmul.f32 %v3007, %v3007
  %v3038 = vmul.f32 %v3008, %v3008
  %v3039 = vsub.f32 %v3033, %v3036
  %v3040 = vsub.f32 %v3034, %v3037
  %v3041 = vsub.f32 %v3035, %v3038
  %v3042 = vmax.f32 %v3039, 0.0
  %v3043 = vmax.f32 %v3040, 0.0
  %v3044 = vmax.f32 %v3041, 0.0
  %v3045 = vsub.f32 %v2969, %v3006
  %v3046 = vsub.f32 %v2974, %v3007
  %v3047 = vsub.f32 %v2979, %v3008
  %v3048 = vadd.f32 %v3042, 1e-05
  %v3049 = vadd.f32 %v3043, 1e-05
  %v3050 = vadd.f32 %v3044, 1e-05
  %v3051 = vrsqrt.pop %v3048
  %v3052 = vrsqrt.pop %v3049
  %v3053 = vrsqrt.pop %v3050
  %v3054 = vmul.f32 %v3045, %v3051
  %v3055 = vmul.f32 %v3046, %v3052
  %v3056 = vmul.f32 %v3047, %v3053
  %v3057 = vld [vmem:[%s12 + $0x7] sm:$0x1]
  %v3058 = vlaneseq
  %v3059 = vshrl.u32 %v3058, 7
  %v3060 = vsub.s32 0, %v3059
  %v3061 = vrot.slane %v3057, %v3060
  %3063 = vrot.lane.b32.xlu0 %v3061, 32
  %v3064 = vpop.permute.xlu0 %3063
  %v3066 = vmul.f32 %v3054, %v3064
  %v3067 = vmul.f32 %v3055, %v3064
  %v3068 = vmul.f32 %v3056, %v3064
  %v3069 = vld [vmem:[%s13 + $0x7] sm:$0x1]
  %v3070 = vlaneseq
  %v3071 = vshrl.u32 %v3070, 7
  %v3072 = vsub.s32 0, %v3071
  %v3073 = vrot.slane %v3069, %v3072
  %3075 = vrot.lane.b32.xlu0 %v3073, 32
  %v3076 = vpop.permute.xlu0 %3075
  %v3078 = vadd.f32 %v3066, %v3076
  %v3079 = vadd.f32 %v3067, %v3076
  %v3080 = vadd.f32 %v3068, %v3076
  %v3081 = vmax.f32 %v3078, 0.0
  %v3082 = vmax.f32 %v3079, 0.0
  %v3083 = vmax.f32 %v3080, 0.0
  %v3084 = vld [vmem:[%s9 + $0x30] sm:$0xff]
  %v3085 = vld [vmem:[%s9 + $0x68] sm:$0xff]
  %v3086 = vld [vmem:[%s9 + $0xa0] sm:$0xff]
  %v3087 = vld [vmem:[%s9 + $0xd8] sm:$0xff]
  %v3088 = vld [vmem:[%s11 + $0x8] sm:$0x1]
  %v3090 = vlaneseq
  %v3091 = vshrl.u32 %v3090, 7
  %v3092 = vsub.s32 0, %v3091
  %v3093 = vrot.slane %v3088, %v3092
  %v3096 = vsel %vm337, %v2982, 0
  %v3099 = vsel %vm337, %v2983, 0
  %v3102 = vsel %vm337, %v2984, 0
  %3104 = vmatprep.subr.mxu0 0.0
  %3105 = vmatpush1.msra.mxu0 %v3084
  %3106 = vmatprep.subr.mxu0 0.0
  %3107 = vmatpush1.msra.mxu0 %v3085
  %3108 = vmatprep.subr.mxu0 0.0
  %3109 = vmatpush1.msra.mxu0 %v3086
  %3110 = vmatprep.subr.mxu0 0.0
  %3111 = vmatpush1.msra.mxu0 %v3087
  %3112 = vmatprep.subr.mxu0 0.0
  %3113 = vmatpush1.msra.mxu0 0.0
  %3114 = vmatprep.subr.mxu0 0.0
  %3115 = vmatpush1.msra.mxu0 0.0
  %3116 = vmatprep.subr.mxu0 0.0
  %3117 = vmatpush1.msra.mxu0 0.0
  %3118 = vmatprep.subr.mxu0 0.0
  %3119 = vmatpush1.msra.mxu0 0.0
  %3120 = vmatprep.subr.mxu0 0.0
  %3121 = vmatpush1.msra.mxu0 0.0
  %3122 = vmatprep.subr.mxu0 0.0
  %3123 = vmatpush1.msra.mxu0 0.0
  %3124 = vmatprep.subr.mxu0 0.0
  %3125 = vmatpush1.msra.mxu0 0.0
  %3126 = vmatprep.subr.mxu0 0.0
  %3127 = vmatpush1.msra.mxu0 0.0
  %3128 = vmatprep.subr.mxu0 0.0
  %3129 = vmatpush1.msra.mxu0 0.0
  %3130 = vmatprep.subr.mxu0 0.0
  %3131 = vmatpush1.msra.mxu0 0.0
  %3132 = vmatprep.subr.mxu0 0.0
  %3133 = vmatpush1.msra.mxu0 0.0
  %3134 = vmatprep.subr.mxu0 0.0
  %3135 = vmatpush1.msra.mxu0 0.0
  %3136 = vmatprep.subr.mxu0 0.0
  %3137 = vmatpush1.msra.mxu0 0.0
  %3138 = vmatprep.subr.mxu0 0.0
  %3139 = vmatpush1.msra.mxu0 0.0
  %3140 = vmatprep.subr.mxu0 0.0
  %3141 = vmatpush1.msra.mxu0 0.0
  %3142 = vmatprep.subr.mxu0 0.0
  %3143 = vmatpush1.msra.mxu0 0.0
  %3144 = vmatprep.subr.mxu0 0.0
  %3145 = vmatpush1.msra.mxu0 0.0
  %3146 = vmatprep.subr.mxu0 0.0
  %3147 = vmatpush1.msra.mxu0 0.0
  %3148 = vmatprep.subr.mxu0 0.0
  %3149 = vmatpush1.msra.mxu0 0.0
  %3150 = vmatprep.subr.mxu0 0.0
  %3151 = vmatpush1.msra.mxu0 0.0
  %3152 = vmatprep.subr.mxu0 0.0
  %3153 = vmatpush1.msra.mxu0 0.0
  %3154 = vmatprep.subr.mxu0 0.0
  %3155 = vmatpush1.msra.mxu0 0.0
  %3156 = vmatprep.subr.mxu0 0.0
  %3157 = vmatpush1.msra.mxu0 0.0
  %3158 = vmatprep.subr.mxu0 0.0
  %3159 = vmatpush1.msra.mxu0 0.0
  %3160 = vmatprep.subr.mxu0 0.0
  %3161 = vmatpush1.msra.mxu0 0.0
  %3162 = vmatprep.subr.mxu0 0.0
  %3163 = vmatpush1.msra.mxu0 0.0
  %3164 = vmatprep.subr.mxu0 0.0
  %3165 = vmatpush1.msra.mxu0 0.0
  %3166 = vmatprep.subr.mxu0 0.0
  %3167 = vmatpush1.msra.mxu0 0.0
  %3168 = vmatprep.mubr.f32.mxu0 0.0
  %3169 = vmatmul.mubr.f32.gmra.mrb[0].mxu0 %v3096
  %v3170 = vpop.f32.mrb[0].mxu0
  %v3171 = vadd.f32 %v3093, %v3170
  %v3172 = vpop.f32.mrb[0].mxu0
  %3173 = vmatprep.mubr.f32.mxu0 0.0
  %3174 = vmatmul.mubr.f32.gmra.mrb[0].mxu0 %v3099
  %v3175 = vpop.f32.mrb[0].mxu0
  %v3176 = vadd.f32 %v3093, %v3175
  %v3177 = vpop.f32.mrb[0].mxu0
  %3178 = vmatprep.mubr.f32.mxu0 0.0
  %3179 = vmatmul.mubr.f32.gmra.mrb[0].mxu0 %v3102
  %v3180 = vpop.f32.mrb[0].mxu0
  %v3181 = vadd.f32 %v3093, %v3180
  %v3182 = vpop.f32.mrb[0].mxu0
  %3183 = vdwg.mxu0
  %v3184 = vmax.f32 %v3171, 0.0
  %v3185 = vmax.f32 %v3176, 0.0
  %v3186 = vmax.f32 %v3181, 0.0
  %3190 = vrot.lane.b32.xlu0 %v3081, 96
  %v3191 = vpop.permute.xlu0 %3190
  %3192 = vrot.lane.b32.xlu0 %v3082, 96
  %v3193 = vpop.permute.xlu0 %3192
  %3194 = vrot.lane.b32.xlu0 %v3083, 96
  %v3195 = vpop.permute.xlu0 %3194
  %3202 = vrot.lane.b32.xlu0 %v3184, 32
  %v3203 = vpop.permute.xlu0 %3202
  %3204 = vrot.lane.b32.xlu0 %v3185, 32
  %v3205 = vpop.permute.xlu0 %3204
  %3206 = vrot.lane.b32.xlu0 %v3186, 32
  %v3207 = vpop.permute.xlu0 %3206
  %v3211 = vsel %vm337, %v3191, %v3203
  %v3212 = vsel %vm337, %v3193, %v3205
  %v3213 = vsel %vm337, %v3195, %v3207
  %v3214 = vld [vmem:[%s8 + $0x8] sm:$0xff]
  %v3215 = vld [vmem:[%s8 + $0x18] sm:$0xff]
  %v3216 = vld [vmem:[%s8 + $0x28] sm:$0xff]
  %v3217 = vld [vmem:[%s8 + $0x38] sm:$0xff]
  %v3218 = vld [vmem:[%s8 + $0x48] sm:$0xff]
  %v3219 = vld [vmem:[%s8 + $0x58] sm:$0xff]
  %v3220 = vld [vmem:[%s8 + $0x68] sm:$0xff]
  %v3221 = vld [vmem:[%s8 + $0x78] sm:$0xff]
  %v3222 = vld [vmem:[%s11 + $0x9] sm:$0x1]
  %v3224 = vlaneseq
  %v3225 = vshrl.u32 %v3224, 7
  %v3226 = vsub.s32 0, %v3225
  %v3227 = vrot.slane %v3222, %v3226
  %v3230 = vsel %vm356, %v3211, 0
  %v3233 = vsel %vm356, %v3212, 0
  %v3236 = vsel %vm356, %v3213, 0
  %3238 = vmatprep.subr.mxu0 0.0
  %3239 = vmatpush1.msra.mxu0 %v3214
  %3240 = vmatprep.subr.mxu0 0.0
  %3241 = vmatpush1.msra.mxu0 %v3215
  %3242 = vmatprep.subr.mxu0 0.0
  %3243 = vmatpush1.msra.mxu0 %v3216
  %3244 = vmatprep.subr.mxu0 0.0
  %3245 = vmatpush1.msra.mxu0 %v3217
  %3246 = vmatprep.subr.mxu0 0.0
  %3247 = vmatpush1.msra.mxu0 %v3218
  %3248 = vmatprep.subr.mxu0 0.0
  %3249 = vmatpush1.msra.mxu0 %v3219
  %3250 = vmatprep.subr.mxu0 0.0
  %3251 = vmatpush1.msra.mxu0 %v3220
  %3252 = vmatprep.subr.mxu0 0.0
  %3253 = vmatpush1.msra.mxu0 %v3221
  %3254 = vmatprep.subr.mxu0 0.0
  %3255 = vmatpush1.msra.mxu0 0.0
  %3256 = vmatprep.subr.mxu0 0.0
  %3257 = vmatpush1.msra.mxu0 0.0
  %3258 = vmatprep.subr.mxu0 0.0
  %3259 = vmatpush1.msra.mxu0 0.0
  %3260 = vmatprep.subr.mxu0 0.0
  %3261 = vmatpush1.msra.mxu0 0.0
  %3262 = vmatprep.subr.mxu0 0.0
  %3263 = vmatpush1.msra.mxu0 0.0
  %3264 = vmatprep.subr.mxu0 0.0
  %3265 = vmatpush1.msra.mxu0 0.0
  %3266 = vmatprep.subr.mxu0 0.0
  %3267 = vmatpush1.msra.mxu0 0.0
  %3268 = vmatprep.subr.mxu0 0.0
  %3269 = vmatpush1.msra.mxu0 0.0
  %3270 = vmatprep.subr.mxu0 0.0
  %3271 = vmatpush1.msra.mxu0 0.0
  %3272 = vmatprep.subr.mxu0 0.0
  %3273 = vmatpush1.msra.mxu0 0.0
  %3274 = vmatprep.subr.mxu0 0.0
  %3275 = vmatpush1.msra.mxu0 0.0
  %3276 = vmatprep.subr.mxu0 0.0
  %3277 = vmatpush1.msra.mxu0 0.0
  %3278 = vmatprep.subr.mxu0 0.0
  %3279 = vmatpush1.msra.mxu0 0.0
  %3280 = vmatprep.subr.mxu0 0.0
  %3281 = vmatpush1.msra.mxu0 0.0
  %3282 = vmatprep.subr.mxu0 0.0
  %3283 = vmatpush1.msra.mxu0 0.0
  %3284 = vmatprep.subr.mxu0 0.0
  %3285 = vmatpush1.msra.mxu0 0.0
  %3286 = vmatprep.subr.mxu0 0.0
  %3287 = vmatpush1.msra.mxu0 0.0
  %3288 = vmatprep.subr.mxu0 0.0
  %3289 = vmatpush1.msra.mxu0 0.0
  %3290 = vmatprep.subr.mxu0 0.0
  %3291 = vmatpush1.msra.mxu0 0.0
  %3292 = vmatprep.subr.mxu0 0.0
  %3293 = vmatpush1.msra.mxu0 0.0
  %3294 = vmatprep.subr.mxu0 0.0
  %3295 = vmatpush1.msra.mxu0 0.0
  %3296 = vmatprep.subr.mxu0 0.0
  %3297 = vmatpush1.msra.mxu0 0.0
  %3298 = vmatprep.subr.mxu0 0.0
  %3299 = vmatpush1.msra.mxu0 0.0
  %3300 = vmatprep.subr.mxu0 0.0
  %3301 = vmatpush1.msra.mxu0 0.0
  %3302 = vmatprep.mubr.f32.mxu0 0.0
  %3303 = vmatmul.mubr.f32.gmra.mrb[0].mxu0 %v3230
  %v3304 = vpop.f32.mrb[0].mxu0
  %v3305 = vadd.f32 %v3227, %v3304
  %v3306 = vpop.f32.mrb[0].mxu0
  %3307 = vmatprep.mubr.f32.mxu0 0.0
  %3308 = vmatmul.mubr.f32.gmra.mrb[0].mxu0 %v3233
  %v3309 = vpop.f32.mrb[0].mxu0
  %v3310 = vadd.f32 %v3227, %v3309
  %v3311 = vpop.f32.mrb[0].mxu0
  %3312 = vmatprep.mubr.f32.mxu0 0.0
  %3313 = vmatmul.mubr.f32.gmra.mrb[0].mxu0 %v3236
  %v3314 = vpop.f32.mrb[0].mxu0
  %v3315 = vadd.f32 %v3227, %v3314
  %v3316 = vpop.f32.mrb[0].mxu0
  %3317 = vdwg.mxu0
  %3321 = vrot.lane.b32.xlu0 %v3305, 96
  %v3322 = vpop.permute.xlu0 %3321
  %3323 = vrot.lane.b32.xlu0 %v3310, 96
  %v3324 = vpop.permute.xlu0 %3323
  %3325 = vrot.lane.b32.xlu0 %v3315, 96
  %v3326 = vpop.permute.xlu0 %3325
  %vm3330 = vcmask 7168
  %3331 = vst.msk [vmem:[%s14] sm:$0xff] %vm3330, %v3322
  %3332 = vst.msk [vmem:[%s14 + $0x8] sm:$0xff] %vm3330, %v3324
  %3333 = vst.msk [vmem:[%s14 + $0x10] sm:$0xff] %vm3330, %v3326
  %3334 = vrot.lane.b32.xlu0 %v3305, 32
  %v3335 = vpop.permute.xlu0 %3334
  %3336 = vrot.lane.b32.xlu0 %v3310, 32
  %v3337 = vpop.permute.xlu0 %3336
  %3338 = vrot.lane.b32.xlu0 %v3315, 32
  %v3339 = vpop.permute.xlu0 %3338
  %v3343 = vsel %vm337, %v3305, %v3335
  %v3344 = vsel %vm337, %v3310, %v3337
  %v3345 = vsel %vm337, %v3315, %v3339
  %v3346 = vld [vmem:[%s7] sm:$0xff]
  %v3347 = vld [vmem:[%s7 + $0x8] sm:$0xff]
  %v3348 = vld [vmem:[%s7 + $0x10] sm:$0xff]
  %v3349 = vmul.f32 %v3343, %v3346
  %v3350 = vmul.f32 %v3344, %v3347
  %v3351 = vmul.f32 %v3345, %v3348
  %v3352 = vld [vmem:[%s2] sm:$0xff]
  %v3353 = vld [vmem:[%s2 + $0x8] sm:$0xff]
  %v3354 = vld [vmem:[%s2 + $0x10] sm:$0xff]
  %v3355 = vld [vmem:[%s2 + $0x18] sm:$0xff]
  %v3356 = vld [vmem:[%s2 + $0x20] sm:$0xff]
  %v3357 = vld [vmem:[%s2 + $0x28] sm:$0xff]
  %v3358 = vld [vmem:[%s2 + $0x30] sm:$0xff]
  %v3359 = vld [vmem:[%s2 + $0x38] sm:$0xff]
  %v3360 = vld [vmem:[%s2 + $0x40] sm:$0xff]
  %v3361 = vld [vmem:[%s2 + $0x48] sm:$0xff]
  %v3362 = vld [vmem:[%s2 + $0x50] sm:$0xff]
  %v3363 = vld [vmem:[%s2 + $0x58] sm:$0xff]
  %v3364 = vld [vmem:[%s2 + $0x60] sm:$0xff]
  %v3365 = vld [vmem:[%s2 + $0x68] sm:$0xff]
  %v3366 = vld [vmem:[%s2 + $0x70] sm:$0xff]
  %v3367 = vld [vmem:[%s2 + $0x78] sm:$0xff]
  %v3369 = vsel %vm356, %v3349, 0
  %v3372 = vsel %vm356, %v3350, 0
  %v3375 = vsel %vm356, %v3351, 0
  %3377 = vmatprep.subr.mxu0 %v3353
  %3378 = vmatpush1.msra.mxu0 %v3352
  %3379 = vmatprep.subr.mxu0 %v3355
  %3380 = vmatpush1.msra.mxu0 %v3354
  %3381 = vmatprep.subr.mxu0 %v3357
  %3382 = vmatpush1.msra.mxu0 %v3356
  %3383 = vmatprep.subr.mxu0 %v3359
  %3384 = vmatpush1.msra.mxu0 %v3358
  %3385 = vmatprep.subr.mxu0 %v3361
  %3386 = vmatpush1.msra.mxu0 %v3360
  %3387 = vmatprep.subr.mxu0 %v3363
  %3388 = vmatpush1.msra.mxu0 %v3362
  %3389 = vmatprep.subr.mxu0 %v3365
  %3390 = vmatpush1.msra.mxu0 %v3364
  %3391 = vmatprep.subr.mxu0 %v3367
  %3392 = vmatpush1.msra.mxu0 %v3366
  %3393 = vmatprep.subr.mxu0 0.0
  %3394 = vmatpush1.msra.mxu0 0.0
  %3395 = vmatprep.subr.mxu0 0.0
  %3396 = vmatpush1.msra.mxu0 0.0
  %3397 = vmatprep.subr.mxu0 0.0
  %3398 = vmatpush1.msra.mxu0 0.0
  %3399 = vmatprep.subr.mxu0 0.0
  %3400 = vmatpush1.msra.mxu0 0.0
  %3401 = vmatprep.subr.mxu0 0.0
  %3402 = vmatpush1.msra.mxu0 0.0
  %3403 = vmatprep.subr.mxu0 0.0
  %3404 = vmatpush1.msra.mxu0 0.0
  %3405 = vmatprep.subr.mxu0 0.0
  %3406 = vmatpush1.msra.mxu0 0.0
  %3407 = vmatprep.subr.mxu0 0.0
  %3408 = vmatpush1.msra.mxu0 0.0
  %3409 = vmatprep.subr.mxu0 0.0
  %3410 = vmatpush1.msra.mxu0 0.0
  %3411 = vmatprep.subr.mxu0 0.0
  %3412 = vmatpush1.msra.mxu0 0.0
  %3413 = vmatprep.subr.mxu0 0.0
  %3414 = vmatpush1.msra.mxu0 0.0
  %3415 = vmatprep.subr.mxu0 0.0
  %3416 = vmatpush1.msra.mxu0 0.0
  %3417 = vmatprep.subr.mxu0 0.0
  %3418 = vmatpush1.msra.mxu0 0.0
  %3419 = vmatprep.subr.mxu0 0.0
  %3420 = vmatpush1.msra.mxu0 0.0
  %3421 = vmatprep.subr.mxu0 0.0
  %3422 = vmatpush1.msra.mxu0 0.0
  %3423 = vmatprep.subr.mxu0 0.0
  %3424 = vmatpush1.msra.mxu0 0.0
  %3425 = vmatprep.subr.mxu0 0.0
  %3426 = vmatpush1.msra.mxu0 0.0
  %3427 = vmatprep.subr.mxu0 0.0
  %3428 = vmatpush1.msra.mxu0 0.0
  %3429 = vmatprep.subr.mxu0 0.0
  %3430 = vmatpush1.msra.mxu0 0.0
  %3431 = vmatprep.subr.mxu0 0.0
  %3432 = vmatpush1.msra.mxu0 0.0
  %3433 = vmatprep.subr.mxu0 0.0
  %3434 = vmatpush1.msra.mxu0 0.0
  %3435 = vmatprep.subr.mxu0 0.0
  %3436 = vmatpush1.msra.mxu0 0.0
  %3437 = vmatprep.subr.mxu0 0.0
  %3438 = vmatpush1.msra.mxu0 0.0
  %3439 = vmatprep.subr.mxu0 0.0
  %3440 = vmatpush1.msra.mxu0 0.0
  %3441 = vmatprep.mubr.f32.mxu0 0.0
  %3442 = vmatmul.mubr.f32.gmra.mrb[0].mxu0 %v3369
  %v3443 = vpop.f32.mrb[0].mxu0
  %v3444 = vadd.f32 0.0, %v3443
  %v3445 = vpop.f32.mrb[0].mxu0
  %v3446 = vadd.f32 0.0, %v3445
  %3447 = vmatprep.mubr.f32.mxu0 0.0
  %3448 = vmatmul.mubr.f32.gmra.mrb[0].mxu0 %v3372
  %v3449 = vpop.f32.mrb[0].mxu0
  %v3450 = vadd.f32 0.0, %v3449
  %v3451 = vpop.f32.mrb[0].mxu0
  %v3452 = vadd.f32 0.0, %v3451
  %3453 = vmatprep.mubr.f32.mxu0 0.0
  %3454 = vmatmul.mubr.f32.gmra.mrb[0].mxu0 %v3375
  %v3455 = vpop.f32.mrb[0].mxu0
  %v3456 = vadd.f32 0.0, %v3455
  %v3457 = vpop.f32.mrb[0].mxu0
  %v3458 = vadd.f32 0.0, %v3457
  %3459 = vdwg.mxu0
  %3460 = vst [vmem:[%s15] sm:$0xff] %v3444
  %3461 = vst [vmem:[%s15 + $0x8] sm:$0xff] %v3446
  %3462 = vst [vmem:[%s15 + $0x10] sm:$0xff] %v3450
  %3463 = vst [vmem:[%s15 + $0x18] sm:$0xff] %v3452
  %3464 = vst [vmem:[%s15 + $0x20] sm:$0xff] %v3456
  %3465 = vst [vmem:[%s15 + $0x28] sm:$0xff] %v3458
  // Predicated region
  $region58: #{cross_atten_head_forward.1} parent=0 // pred_check
    _
  $region59: #{cross_atten_head_forward.1} parent=0 // pred_check_branch
    %3467 = sbr.rel (0) target = $region61
  $region60: #{cross_atten_head_forward.1} parent=0 // pred_region
    _
  $region61: #{cross_atten_head_forward.1} parent=0 // pred_fallthru
    _
  // Predicated region
  $region62: #{cross_atten_head_forward.1} parent=0 // pred_check
    _
  $region63: #{cross_atten_head_forward.1} parent=0 // pred_check_branch
    %3469 = sbr.rel (0) target = $region65
  $region64: #{cross_atten_head_forward.1} parent=0 // pred_region
    _
  $region65: #{cross_atten_head_forward.1} parent=0 // pred_fallthru
    _
  // Predicated region
  $region66: #{cross_atten_head_forward.1} parent=0 // pred_check
    _
  $region67: #{cross_atten_head_forward.1} parent=0 // pred_check_branch
    %3471 = sbr.rel (0) target = $region69
  $region68: #{cross_atten_head_forward.1} parent=0 // pred_region
    _
  $region69: #{cross_atten_head_forward.1} parent=0 // pred_fallthru
    _
  // Predicated region
  $region70: #{cross_atten_head_forward.1} parent=0 // pred_check
    _
  $region71: #{cross_atten_head_forward.1} parent=0 // pred_check_branch
    %3473 = sbr.rel (0) target = $region73
  $region72: #{cross_atten_head_forward.1} parent=0 // pred_region
    _
  $region73: #{cross_atten_head_forward.1} parent=0 // pred_fallthru
    _
  // Predicated region
  $region74: #{cross_atten_head_forward.1} parent=0 // pred_check
    _
  $region75: #{cross_atten_head_forward.1} parent=0 // pred_check_branch
    %3475 = sbr.rel (0) target = $region77
  $region76: #{cross_atten_head_forward.1} parent=0 // pred_region
    _
  $region77: #{cross_atten_head_forward.1} parent=0 // pred_fallthru
    _
  // Predicated region
  $region78: #{cross_atten_head_forward.1} parent=0 // pred_check
    _
  $region79: #{cross_atten_head_forward.1} parent=0 // pred_check_branch
    %3477 = sbr.rel (0) target = $region81
  $region80: #{cross_atten_head_forward.1} parent=0 // pred_region
    _
  $region81: #{cross_atten_head_forward.1} parent=0 // pred_fallthru
    _

</llo_original>
